<compile_context>
chip_gen: v6e
topology: v6e:2x2x1
jax: 0.10.0
libtpu: 0.0.40
codegen_flags: <defaults>
</compile_context>

<pallas_src>
import functools

import jax
import jax.numpy as jnp
from jax.experimental import pallas as pl
from jax.experimental.pallas import tpu as pltpu


# ----------------------------------------------------------------------------
# Fused kernel: the whole MSRAB forward for one batch image.
# ----------------------------------------------------------------------------
def _msrab_kernel(alpha_ref, x_ref, *refs, C, H, W):
    HW = H * W
    o_ref = refs[-1]
    (w31, b31, w51a, b51a, w51b, b51b,
     w32, b32, w52a, b52a, w52b, b52b,
     w11, b11,
     mw1, mb1, mw2a, mb2a, mw2b, mb2b,
     mw3, mb3, mw4, mb4) = refs[:-1]

    # PReLU slopes (scalar, shared per nn.PReLU instance) from SMEM.
    a51 = alpha_ref[0]
    a52 = alpha_ref[1]
    ma2 = alpha_ref[2]

    x = x_ref[0]                                   # (C, H*W), spatial on lanes

    # ---- spatial coordinate vectors (for conv boundary masks), built once ----
    col = jax.lax.broadcasted_iota(jnp.int32, (1, HW), 1)
    if (W & (W - 1)) == 0:                         # power-of-two width (16 here)
        h_idx = col >> (int(W).bit_length() - 1)
        w_idx = col & (W - 1)
    else:                                          # TODO(synk): vector int div path
        h_idx = col // W
        w_idx = col % W

    mask_cache = {}

    def tap_mask(oy, ox):
        """Validity mask for a tap shifted by (oy, ox); None == all valid."""
        key = (oy, ox)
        if key in mask_cache:
            return mask_cache[key]
        conds = []
        if oy > 0:
            conds.append(h_idx < (H - oy))
        if oy < 0:
            conds.append(h_idx >= (-oy))
        if ox > 0:
            conds.append(w_idx < (W - ox))
        if ox < 0:
            conds.append(w_idx >= (-ox))
        m = None
        for c in conds:
            m = c if m is None else jnp.logical_and(m, c)
        mask_cache[key] = m
        return m

    def make_patches(xf, K, pad):
        """im2col in flattened-spatial layout: (Cin, HW) -> (K*K*Cin, HW)."""
        taps = []
        for dy in range(K):
            for dx in range(K):
                oy, ox = dy - pad, dx - pad
                s = oy * W + ox                    # flat-index shift of this tap
                t = xf if s == 0 else pltpu.roll(xf, shift=(-s) % HW, axis=1)
                m = tap_mask(oy, ox)
                if m is not None:
                    t = jnp.where(m, t, 0.0)       # zero-padding via mask
                taps.append(t)
        return taps[0] if len(taps) == 1 else jnp.concatenate(taps, axis=0)

    def cmm(w_r, b_r, patches):
        """One conv == one MXU matmul: (Cout,K) @ (K,HW) + bias."""
        return jnp.dot(w_r[...], patches,
                       preferred_element_type=jnp.float32) + b_r[...]

    def prelu(v, a):
        return jnp.where(v >= 0.0, v, a * v)

    # ------------------------- MSRAB trunk ----------------------------------
    p_x = make_patches(x, 3, 1)                    # shared by conv3x3_1 / conv5x5_1
    out1 = cmm(w31, b31, p_x)                      # conv3x3_1 (+BN folded)
    t = prelu(cmm(w51a, b51a, p_x), a51)           # conv5x5_1: 3x3 -> PReLU -> 3x3
    out2 = cmm(w51b, b51b, make_patches(t, 3, 1))  # (+BN folded)
    cat12 = jnp.concatenate([out1, out2], axis=0)  # (2C, HW)  torch.cat dim=1

    p_c = make_patches(cat12, 3, 1)                # shared by conv3x3_2 / conv5x5_2
    out3 = cmm(w32, b32, p_c)                      # conv3x3_2 (+BN folded)
    t = prelu(cmm(w52a, b52a, p_c), a52)           # conv5x5_2 (no BN)
    out4 = cmm(w52b, b52b, make_patches(t, 3, 1))
    cat34 = jnp.concatenate([out3, out4], axis=0)  # (4C, HW)

    fused = cmm(w11, b11, cat34)                   # conv1x1: 4C -> C  (patches==input)

    # --------------------- MSRAB_module (spatial attention) -----------------
    avg = jnp.mean(fused, axis=0, keepdims=True)   # channel avg-pool  (1, HW)
    mx = jnp.max(fused, axis=0, keepdims=True)     # channel max-pool  (1, HW)
    pooled = jnp.concatenate([avg, mx], axis=0)    # (2, HW)

    p_p = make_patches(pooled, 3, 1)               # shared by conv1 / conv2
    m1 = cmm(mw1, mb1, p_p)                        # 3x3 (+BN)
    t = prelu(cmm(mw2a, mb2a, p_p), ma2)           # conv5x5 path
    m2 = cmm(mw2b, mb2b, make_patches(t, 3, 1))    # (+BN)
    m3 = cmm(mw3, mb3, make_patches(pooled, 7, 3)) # 7x7 (+BN)
    att = cmm(mw4, mb4, jnp.concatenate([m1, m2, m3], axis=0))   # 1x1 -> (1, HW)

    # sigmoid gate * residual, then MSRAB's outer `out += x`
    gate = pl.reciprocal(1.0 + jnp.exp(-att), approx=True)       # EUP exp + rcp
    o_ref[0] = (fused * gate + x).astype(o_ref.dtype)


# ----------------------------------------------------------------------------
# Wrapper: one pallas_call for the whole module.
# ----------------------------------------------------------------------------
_CONV_ORDER = ["w31", "w51a", "w51b", "w32", "w52a", "w52b",
               "w11", "mw1", "mw2a", "mw2b", "mw3", "mw4"]


def msrab_forward(x_nchw, params):
    N, C, H, W = x_nchw.shape
    HW = H * W
    x_flat = x_nchw.reshape(N, C, HW)              # free metadata reshape (NCHW)

    conv_args = []
    for name in _CONV_ORDER:
        wmat, bias = params[name]
        conv_args += [wmat, bias]
    alphas = params["alphas"]

    kernel = functools.partial(_msrab_kernel, C=C, H=H, W=W)

    in_specs = [pl.BlockSpec(memory_space=pltpu.MemorySpace.SMEM),   # PReLU slopes
                pl.BlockSpec((1, C, HW), lambda n: (n, 0, 0))]       # input image
    for a in conv_args:                                              # weights/biases
        in_specs.append(pl.BlockSpec(a.shape, lambda n: (0, 0)))

    out = pl.pallas_call(
        kernel,
        out_shape=jax.ShapeDtypeStruct((N, C, HW), jnp.float32),
        grid=(N,),
        in_specs=in_specs,
        out_specs=pl.BlockSpec((1, C, HW), lambda n: (n, 0, 0)),
        compiler_params=pltpu.CompilerParams(dimension_semantics=("parallel",)),
    )(alphas, x_flat, *conv_args)
    return out.reshape(N, C, H, W)


# ----------------------------------------------------------------------------
# Parameter init (deterministic, synthetic), BN folding, matmul-form packing.
# ----------------------------------------------------------------------------
def fold_bn(w, b, gamma, beta, mean, var, eps=1e-5):
    """Eval-mode BatchNorm folded into conv: exact per-channel affine."""
    s = gamma / jnp.sqrt(var + eps)                # (Cout,)
    return w * s, (b - mean) * s + beta


def to_matmul_form(w, b):
    """(KH,KW,Cin,Cout)/(Cout,) -> (Cout, KH*KW*Cin) / (Cout, 1) for im2col dot."""
    KH, KW, Cin, Cout = w.shape
    wmat = jnp.transpose(w, (3, 0, 1, 2)).reshape(Cout, KH * KW * Cin)
    return wmat, b.reshape(Cout, 1)


def init_params(key, C):
    keys = iter(jax.random.split(key, 64))

    def conv_w(kh, kw, cin, cout):
        return jax.random.normal(next(keys), (kh, kw, cin, cout), jnp.float32) * 0.1

    def vec(c):
        return jax.random.normal(next(keys), (c,), jnp.float32) * 0.1

    def bn(c):
        g = jax.random.uniform(next(keys), (c,), jnp.float32, 0.5, 1.5)
        be = jax.random.normal(next(keys), (c,), jnp.float32) * 0.05
        mu = jax.random.normal(next(keys), (c,), jnp.float32) * 0.05
        va = jax.random.uniform(next(keys), (c,), jnp.float32, 0.5, 1.5)
        return g, be, mu, va

    raw = {}
    raw["w31"] = fold_bn(conv_w(3, 3, C, C), vec(C), *bn(C))            # conv3x3_1+BN
    raw["w51a"] = (conv_w(3, 3, C, C), vec(C))                          # conv5x5_1 a
    raw["w51b"] = fold_bn(conv_w(3, 3, C, C), vec(C), *bn(C))           # conv5x5_1 b+BN
    raw["w32"] = fold_bn(conv_w(3, 3, 2 * C, 2 * C), vec(2 * C), *bn(2 * C))  # conv3x3_2+BN
    raw["w52a"] = (conv_w(3, 3, 2 * C, 2 * C), vec(2 * C))              # conv5x5_2 a
    raw["w52b"] = (conv_w(3, 3, 2 * C, 2 * C), vec(2 * C))              # conv5x5_2 b
    raw["w11"] = (conv_w(1, 1, 4 * C, C), vec(C))                       # conv1x1
    raw["mw1"] = fold_bn(conv_w(3, 3, 2, 1), vec(1), *bn(1))            # attn conv1+BN
    raw["mw2a"] = (conv_w(3, 3, 2, 2), vec(2))                          # attn conv2 a
    raw["mw2b"] = fold_bn(conv_w(3, 3, 2, 1), vec(1), *bn(1))           # attn conv2 b+BN
    raw["mw3"] = fold_bn(conv_w(7, 7, 2, 1), vec(1), *bn(1))            # attn conv3 (7x7)+BN
    raw["mw4"] = (conv_w(1, 1, 3, 1), vec(1))                           # attn conv4 (1x1)

    params = {k: to_matmul_form(w, b) for k, (w, b) in raw.items()}
    # Scalar PReLU slopes (default 0.25) for [conv5x5_1, conv5x5_2, attn conv2].
    # (MSRAB.self.prelu is defined in __init__ but unused in forward -> omitted.)
    params["alphas"] = jnp.full((3,), 0.25, jnp.float32)
    return params


# ----------------------------------------------------------------------------
if __name__ == "__main__":
    N, C, H, W = 2, 4, 16, 16          # in_channels == out_channels (residual add)
    key = jax.random.PRNGKey(0)
    kx, kp = jax.random.split(key)

    x_nchw = jax.random.normal(kx, (N, C, H, W), jnp.float32)   # PyTorch layout
    params = init_params(kp, C)

    out_nchw = jax.jit(msrab_forward)(x_nchw, params)
    out_nchw = jax.block_until_ready(out_nchw)

    assert out_nchw.shape == (N, C, H, W)
    assert bool(jnp.all(jnp.isfinite(out_nchw)))
    print("KERNEL_OK")
</pallas_src>

<mosaic_0001>
module attributes {stable_mosaic.version = 11 : i64} {
  func.func @_msrab_kernel(%arg0: i32, %arg1: memref<3xf32, #tpu.memory_space<smem>>, %arg2: memref<1x4x256xf32, #tpu.memory_space<vmem>>, %arg3: memref<4x36xf32, #tpu.memory_space<vmem>>, %arg4: memref<4x1xf32, #tpu.memory_space<vmem>>, %arg5: memref<4x36xf32, #tpu.memory_space<vmem>>, %arg6: memref<4x1xf32, #tpu.memory_space<vmem>>, %arg7: memref<4x36xf32, #tpu.memory_space<vmem>>, %arg8: memref<4x1xf32, #tpu.memory_space<vmem>>, %arg9: memref<8x72xf32, #tpu.memory_space<vmem>>, %arg10: memref<8x1xf32, #tpu.memory_space<vmem>>, %arg11: memref<8x72xf32, #tpu.memory_space<vmem>>, %arg12: memref<8x1xf32, #tpu.memory_space<vmem>>, %arg13: memref<8x72xf32, #tpu.memory_space<vmem>>, %arg14: memref<8x1xf32, #tpu.memory_space<vmem>>, %arg15: memref<4x16xf32, #tpu.memory_space<vmem>>, %arg16: memref<4x1xf32, #tpu.memory_space<vmem>>, %arg17: memref<1x18xf32, #tpu.memory_space<vmem>>, %arg18: memref<1x1xf32, #tpu.memory_space<vmem>>, %arg19: memref<2x18xf32, #tpu.memory_space<vmem>>, %arg20: memref<2x1xf32, #tpu.memory_space<vmem>>, %arg21: memref<1x18xf32, #tpu.memory_space<vmem>>, %arg22: memref<1x1xf32, #tpu.memory_space<vmem>>, %arg23: memref<1x98xf32, #tpu.memory_space<vmem>>, %arg24: memref<1x1xf32, #tpu.memory_space<vmem>>, %arg25: memref<1x3xf32, #tpu.memory_space<vmem>>, %arg26: memref<1x1xf32, #tpu.memory_space<vmem>>, %arg27: memref<1x4x256xf32, #tpu.memory_space<vmem>>) attributes {dimension_semantics = [#tpu.dimension_semantics<parallel>], iteration_bounds = array<i64: 2>, scalar_prefetch = 0 : i64, scratch_operands = 0 : i64, tpu.core_type = #tpu.core_type<tc>, window_params = [{transform_indices = @transform_0, window_bounds = array<i64: 3>}, {transform_indices = @transform_1, window_bounds = array<i64: 1, 4, 256>}, {pipeline_mode = #tpu.pipeline_mode<synchronous>, transform_indices = @transform_2, window_bounds = array<i64: 4, 36>}, {pipeline_mode = #tpu.pipeline_mode<synchronous>, transform_indices = @transform_3, window_bounds = array<i64: 4, 1>}, {pipeline_mode = #tpu.pipeline_mode<synchronous>, transform_indices = @transform_4, window_bounds = array<i64: 4, 36>}, {pipeline_mode = #tpu.pipeline_mode<synchronous>, transform_indices = @transform_5, window_bounds = array<i64: 4, 1>}, {pipeline_mode = #tpu.pipeline_mode<synchronous>, transform_indices = @transform_6, window_bounds = array<i64: 4, 36>}, {pipeline_mode = #tpu.pipeline_mode<synchronous>, transform_indices = @transform_7, window_bounds = array<i64: 4, 1>}, {pipeline_mode = #tpu.pipeline_mode<synchronous>, transform_indices = @transform_8, window_bounds = array<i64: 8, 72>}, {pipeline_mode = #tpu.pipeline_mode<synchronous>, transform_indices = @transform_9, window_bounds = array<i64: 8, 1>}, {pipeline_mode = #tpu.pipeline_mode<synchronous>, transform_indices = @transform_10, window_bounds = array<i64: 8, 72>}, {pipeline_mode = #tpu.pipeline_mode<synchronous>, transform_indices = @transform_11, window_bounds = array<i64: 8, 1>}, {pipeline_mode = #tpu.pipeline_mode<synchronous>, transform_indices = @transform_12, window_bounds = array<i64: 8, 72>}, {pipeline_mode = #tpu.pipeline_mode<synchronous>, transform_indices = @transform_13, window_bounds = array<i64: 8, 1>}, {pipeline_mode = #tpu.pipeline_mode<synchronous>, transform_indices = @transform_14, window_bounds = array<i64: 4, 16>}, {pipeline_mode = #tpu.pipeline_mode<synchronous>, transform_indices = @transform_15, window_bounds = array<i64: 4, 1>}, {pipeline_mode = #tpu.pipeline_mode<synchronous>, transform_indices = @transform_16, window_bounds = array<i64: 1, 18>}, {pipeline_mode = #tpu.pipeline_mode<synchronous>, transform_indices = @transform_17, window_bounds = array<i64: 1, 1>}, {pipeline_mode = #tpu.pipeline_mode<synchronous>, transform_indices = @transform_18, window_bounds = array<i64: 2, 18>}, {pipeline_mode = #tpu.pipeline_mode<synchronous>, transform_indices = @transform_19, window_bounds = array<i64: 2, 1>}, {pipeline_mode = #tpu.pipeline_mode<synchronous>, transform_indices = @transform_20, window_bounds = array<i64: 1, 18>}, {pipeline_mode = #tpu.pipeline_mode<synchronous>, transform_indices = @transform_21, window_bounds = array<i64: 1, 1>}, {pipeline_mode = #tpu.pipeline_mode<synchronous>, transform_indices = @transform_22, window_bounds = array<i64: 1, 98>}, {pipeline_mode = #tpu.pipeline_mode<synchronous>, transform_indices = @transform_23, window_bounds = array<i64: 1, 1>}, {pipeline_mode = #tpu.pipeline_mode<synchronous>, transform_indices = @transform_24, window_bounds = array<i64: 1, 3>}, {pipeline_mode = #tpu.pipeline_mode<synchronous>, transform_indices = @transform_25, window_bounds = array<i64: 1, 1>}, {transform_indices = @transform_26, window_bounds = array<i64: 1, 4, 256>}]} {
    %c0 = arith.constant 0 : index
    %0 = memref.load %arg1[%c0] : memref<3xf32, #tpu.memory_space<smem>>
    %c1 = arith.constant 1 : index
    %1 = memref.load %arg1[%c1] : memref<3xf32, #tpu.memory_space<smem>>
    %c2 = arith.constant 2 : index
    %2 = memref.load %arg1[%c2] : memref<3xf32, #tpu.memory_space<smem>>
    %c0_0 = arith.constant 0 : index
    %c0_1 = arith.constant 0 : index
    %c0_2 = arith.constant 0 : index
    %3 = vector.load %arg2[%c0_0, %c0_1, %c0_2] : memref<1x4x256xf32, #tpu.memory_space<vmem>>, vector<1x4x256xf32>
    %4 = vector.shape_cast %3 : vector<1x4x256xf32> to vector<4x256xf32>
    %5 = tpu.iota {dimensions = array<i32: 1>} : vector<1x256xi32>
    %c4_i32 = arith.constant 4 : i32
    %6 = vector.broadcast %c4_i32 : i32 to vector<1x256xi32>
    %7 = arith.shrsi %5, %6 : vector<1x256xi32>
    %c15_i32 = arith.constant 15 : i32
    %8 = vector.broadcast %c15_i32 : i32 to vector<1x256xi32>
    %9 = arith.andi %5, %8 : vector<1x256xi32>
    %c17_i32 = arith.constant 17 : i32
    %10 = tpu.dynamic_rotate %4 by %c17_i32 dim 1 : vector<4x256xf32>, i32 -> vector<4x256xf32>
    %c1_i32 = arith.constant 1 : i32
    %11 = vector.broadcast %c1_i32 : i32 to vector<1x256xi32>
    %12 = arith.cmpi sge, %7, %11 : vector<1x256xi32>
    %c1_i32_3 = arith.constant 1 : i32
    %13 = vector.broadcast %c1_i32_3 : i32 to vector<1x256xi32>
    %14 = arith.cmpi sge, %9, %13 : vector<1x256xi32>
    %15 = arith.andi %12, %14 : vector<1x256xi1>
    %cst = arith.constant 0.000000e+00 : f32
    %16 = vector.shape_cast %15 : vector<1x256xi1> to vector<1x256xi1>
    %17 = vector.broadcast %16 : vector<1x256xi1> to vector<4x256xi1>
    %18 = vector.broadcast %cst : f32 to vector<4x256xf32>
    %19 = arith.select %17, %10, %18 : vector<4x256xi1>, vector<4x256xf32>
    %c16_i32 = arith.constant 16 : i32
    %20 = tpu.dynamic_rotate %4 by %c16_i32 dim 1 : vector<4x256xf32>, i32 -> vector<4x256xf32>
    %c1_i32_4 = arith.constant 1 : i32
    %21 = vector.broadcast %c1_i32_4 : i32 to vector<1x256xi32>
    %22 = arith.cmpi sge, %7, %21 : vector<1x256xi32>
    %cst_5 = arith.constant 0.000000e+00 : f32
    %23 = vector.shape_cast %22 : vector<1x256xi1> to vector<1x256xi1>
    %24 = vector.broadcast %23 : vector<1x256xi1> to vector<4x256xi1>
    %25 = vector.broadcast %cst_5 : f32 to vector<4x256xf32>
    %26 = arith.select %24, %20, %25 : vector<4x256xi1>, vector<4x256xf32>
    %c15_i32_6 = arith.constant 15 : i32
    %27 = tpu.dynamic_rotate %4 by %c15_i32_6 dim 1 : vector<4x256xf32>, i32 -> vector<4x256xf32>
    %c1_i32_7 = arith.constant 1 : i32
    %28 = vector.broadcast %c1_i32_7 : i32 to vector<1x256xi32>
    %29 = arith.cmpi sge, %7, %28 : vector<1x256xi32>
    %c15_i32_8 = arith.constant 15 : i32
    %30 = vector.broadcast %c15_i32_8 : i32 to vector<1x256xi32>
    %31 = arith.cmpi slt, %9, %30 : vector<1x256xi32>
    %32 = arith.andi %29, %31 : vector<1x256xi1>
    %cst_9 = arith.constant 0.000000e+00 : f32
    %33 = vector.shape_cast %32 : vector<1x256xi1> to vector<1x256xi1>
    %34 = vector.broadcast %33 : vector<1x256xi1> to vector<4x256xi1>
    %35 = vector.broadcast %cst_9 : f32 to vector<4x256xf32>
    %36 = arith.select %34, %27, %35 : vector<4x256xi1>, vector<4x256xf32>
    %c1_i32_10 = arith.constant 1 : i32
    %37 = tpu.dynamic_rotate %4 by %c1_i32_10 dim 1 : vector<4x256xf32>, i32 -> vector<4x256xf32>
    %c1_i32_11 = arith.constant 1 : i32
    %38 = vector.broadcast %c1_i32_11 : i32 to vector<1x256xi32>
    %39 = arith.cmpi sge, %9, %38 : vector<1x256xi32>
    %cst_12 = arith.constant 0.000000e+00 : f32
    %40 = vector.shape_cast %39 : vector<1x256xi1> to vector<1x256xi1>
    %41 = vector.broadcast %40 : vector<1x256xi1> to vector<4x256xi1>
    %42 = vector.broadcast %cst_12 : f32 to vector<4x256xf32>
    %43 = arith.select %41, %37, %42 : vector<4x256xi1>, vector<4x256xf32>
    %c255_i32 = arith.constant 255 : i32
    %44 = tpu.dynamic_rotate %4 by %c255_i32 dim 1 : vector<4x256xf32>, i32 -> vector<4x256xf32>
    %c15_i32_13 = arith.constant 15 : i32
    %45 = vector.broadcast %c15_i32_13 : i32 to vector<1x256xi32>
    %46 = arith.cmpi slt, %9, %45 : vector<1x256xi32>
    %cst_14 = arith.constant 0.000000e+00 : f32
    %47 = vector.shape_cast %46 : vector<1x256xi1> to vector<1x256xi1>
    %48 = vector.broadcast %47 : vector<1x256xi1> to vector<4x256xi1>
    %49 = vector.broadcast %cst_14 : f32 to vector<4x256xf32>
    %50 = arith.select %48, %44, %49 : vector<4x256xi1>, vector<4x256xf32>
    %c241_i32 = arith.constant 241 : i32
    %51 = tpu.dynamic_rotate %4 by %c241_i32 dim 1 : vector<4x256xf32>, i32 -> vector<4x256xf32>
    %c15_i32_15 = arith.constant 15 : i32
    %52 = vector.broadcast %c15_i32_15 : i32 to vector<1x256xi32>
    %53 = arith.cmpi slt, %7, %52 : vector<1x256xi32>
    %c1_i32_16 = arith.constant 1 : i32
    %54 = vector.broadcast %c1_i32_16 : i32 to vector<1x256xi32>
    %55 = arith.cmpi sge, %9, %54 : vector<1x256xi32>
    %56 = arith.andi %53, %55 : vector<1x256xi1>
    %cst_17 = arith.constant 0.000000e+00 : f32
    %57 = vector.shape_cast %56 : vector<1x256xi1> to vector<1x256xi1>
    %58 = vector.broadcast %57 : vector<1x256xi1> to vector<4x256xi1>
    %59 = vector.broadcast %cst_17 : f32 to vector<4x256xf32>
    %60 = arith.select %58, %51, %59 : vector<4x256xi1>, vector<4x256xf32>
    %c240_i32 = arith.constant 240 : i32
    %61 = tpu.dynamic_rotate %4 by %c240_i32 dim 1 : vector<4x256xf32>, i32 -> vector<4x256xf32>
    %c15_i32_18 = arith.constant 15 : i32
    %62 = vector.broadcast %c15_i32_18 : i32 to vector<1x256xi32>
    %63 = arith.cmpi slt, %7, %62 : vector<1x256xi32>
    %cst_19 = arith.constant 0.000000e+00 : f32
    %64 = vector.shape_cast %63 : vector<1x256xi1> to vector<1x256xi1>
    %65 = vector.broadcast %64 : vector<1x256xi1> to vector<4x256xi1>
    %66 = vector.broadcast %cst_19 : f32 to vector<4x256xf32>
    %67 = arith.select %65, %61, %66 : vector<4x256xi1>, vector<4x256xf32>
    %c239_i32 = arith.constant 239 : i32
    %68 = tpu.dynamic_rotate %4 by %c239_i32 dim 1 : vector<4x256xf32>, i32 -> vector<4x256xf32>
    %c15_i32_20 = arith.constant 15 : i32
    %69 = vector.broadcast %c15_i32_20 : i32 to vector<1x256xi32>
    %70 = arith.cmpi slt, %7, %69 : vector<1x256xi32>
    %c15_i32_21 = arith.constant 15 : i32
    %71 = vector.broadcast %c15_i32_21 : i32 to vector<1x256xi32>
    %72 = arith.cmpi slt, %9, %71 : vector<1x256xi32>
    %73 = arith.andi %70, %72 : vector<1x256xi1>
    %cst_22 = arith.constant 0.000000e+00 : f32
    %74 = vector.shape_cast %73 : vector<1x256xi1> to vector<1x256xi1>
    %75 = vector.broadcast %74 : vector<1x256xi1> to vector<4x256xi1>
    %76 = vector.broadcast %cst_22 : f32 to vector<4x256xf32>
    %77 = arith.select %75, %68, %76 : vector<4x256xi1>, vector<4x256xf32>
    %78 = tpu.concatenate %19, %26, %36, %43, %4, %50, %60, %67, %77 in 0 : vector<4x256xf32>, vector<4x256xf32>, vector<4x256xf32>, vector<4x256xf32>, vector<4x256xf32>, vector<4x256xf32>, vector<4x256xf32>, vector<4x256xf32>, vector<4x256xf32> -> vector<36x256xf32>
    %c0_23 = arith.constant 0 : index
    %c0_24 = arith.constant 0 : index
    %79 = vector.load %arg3[%c0_23, %c0_24] : memref<4x36xf32, #tpu.memory_space<vmem>>, vector<4x36xf32>
    %cst_25 = arith.constant dense<0.000000e+00> : vector<4x256xf32>
    %80 = tpu.matmul %79, %78, %cst_25 {dimension_numbers = #tpu.dot_dimension_numbers<[1], [0], [0], [1], [0, 0, 1, 1], [], []>} : vector<4x36xf32>, vector<36x256xf32>, vector<4x256xf32> -> vector<4x256xf32>
    %c0_26 = arith.constant 0 : index
    %c0_27 = arith.constant 0 : index
    %81 = vector.load %arg4[%c0_26, %c0_27] : memref<4x1xf32, #tpu.memory_space<vmem>>, vector<4x1xf32>
    %82 = vector.broadcast %81 : vector<4x1xf32> to vector<4x256xf32>
    %83 = arith.addf %80, %82 : vector<4x256xf32>
    %c0_28 = arith.constant 0 : index
    %c0_29 = arith.constant 0 : index
    %84 = vector.load %arg5[%c0_28, %c0_29] : memref<4x36xf32, #tpu.memory_space<vmem>>, vector<4x36xf32>
    %cst_30 = arith.constant dense<0.000000e+00> : vector<4x256xf32>
    %85 = tpu.matmul %84, %78, %cst_30 {dimension_numbers = #tpu.dot_dimension_numbers<[1], [0], [0], [1], [0, 0, 1, 1], [], []>} : vector<4x36xf32>, vector<36x256xf32>, vector<4x256xf32> -> vector<4x256xf32>
    %c0_31 = arith.constant 0 : index
    %c0_32 = arith.constant 0 : index
    %86 = vector.load %arg6[%c0_31, %c0_32] : memref<4x1xf32, #tpu.memory_space<vmem>>, vector<4x1xf32>
    %87 = vector.broadcast %86 : vector<4x1xf32> to vector<4x256xf32>
    %88 = arith.addf %85, %87 : vector<4x256xf32>
    %cst_33 = arith.constant 0.000000e+00 : f32
    %89 = vector.broadcast %cst_33 : f32 to vector<4x256xf32>
    %90 = arith.cmpf oge, %88, %89 : vector<4x256xf32>
    %91 = vector.broadcast %0 : f32 to vector<4x256xf32>
    %92 = arith.mulf %91, %88 : vector<4x256xf32>
    %93 = arith.select %90, %88, %92 : vector<4x256xi1>, vector<4x256xf32>
    %c17_i32_34 = arith.constant 17 : i32
    %94 = tpu.dynamic_rotate %93 by %c17_i32_34 dim 1 : vector<4x256xf32>, i32 -> vector<4x256xf32>
    %cst_35 = arith.constant 0.000000e+00 : f32
    %95 = vector.shape_cast %15 : vector<1x256xi1> to vector<1x256xi1>
    %96 = vector.broadcast %95 : vector<1x256xi1> to vector<4x256xi1>
    %97 = vector.broadcast %cst_35 : f32 to vector<4x256xf32>
    %98 = arith.select %96, %94, %97 : vector<4x256xi1>, vector<4x256xf32>
    %c16_i32_36 = arith.constant 16 : i32
    %99 = tpu.dynamic_rotate %93 by %c16_i32_36 dim 1 : vector<4x256xf32>, i32 -> vector<4x256xf32>
    %cst_37 = arith.constant 0.000000e+00 : f32
    %100 = vector.shape_cast %22 : vector<1x256xi1> to vector<1x256xi1>
    %101 = vector.broadcast %100 : vector<1x256xi1> to vector<4x256xi1>
    %102 = vector.broadcast %cst_37 : f32 to vector<4x256xf32>
    %103 = arith.select %101, %99, %102 : vector<4x256xi1>, vector<4x256xf32>
    %c15_i32_38 = arith.constant 15 : i32
    %104 = tpu.dynamic_rotate %93 by %c15_i32_38 dim 1 : vector<4x256xf32>, i32 -> vector<4x256xf32>
    %cst_39 = arith.constant 0.000000e+00 : f32
    %105 = vector.shape_cast %32 : vector<1x256xi1> to vector<1x256xi1>
    %106 = vector.broadcast %105 : vector<1x256xi1> to vector<4x256xi1>
    %107 = vector.broadcast %cst_39 : f32 to vector<4x256xf32>
    %108 = arith.select %106, %104, %107 : vector<4x256xi1>, vector<4x256xf32>
    %c1_i32_40 = arith.constant 1 : i32
    %109 = tpu.dynamic_rotate %93 by %c1_i32_40 dim 1 : vector<4x256xf32>, i32 -> vector<4x256xf32>
    %cst_41 = arith.constant 0.000000e+00 : f32
    %110 = vector.shape_cast %39 : vector<1x256xi1> to vector<1x256xi1>
    %111 = vector.broadcast %110 : vector<1x256xi1> to vector<4x256xi1>
    %112 = vector.broadcast %cst_41 : f32 to vector<4x256xf32>
    %113 = arith.select %111, %109, %112 : vector<4x256xi1>, vector<4x256xf32>
    %c255_i32_42 = arith.constant 255 : i32
    %114 = tpu.dynamic_rotate %93 by %c255_i32_42 dim 1 : vector<4x256xf32>, i32 -> vector<4x256xf32>
    %cst_43 = arith.constant 0.000000e+00 : f32
    %115 = vector.shape_cast %46 : vector<1x256xi1> to vector<1x256xi1>
    %116 = vector.broadcast %115 : vector<1x256xi1> to vector<4x256xi1>
    %117 = vector.broadcast %cst_43 : f32 to vector<4x256xf32>
    %118 = arith.select %116, %114, %117 : vector<4x256xi1>, vector<4x256xf32>
    %c241_i32_44 = arith.constant 241 : i32
    %119 = tpu.dynamic_rotate %93 by %c241_i32_44 dim 1 : vector<4x256xf32>, i32 -> vector<4x256xf32>
    %cst_45 = arith.constant 0.000000e+00 : f32
    %120 = vector.shape_cast %56 : vector<1x256xi1> to vector<1x256xi1>
    %121 = vector.broadcast %120 : vector<1x256xi1> to vector<4x256xi1>
    %122 = vector.broadcast %cst_45 : f32 to vector<4x256xf32>
    %123 = arith.select %121, %119, %122 : vector<4x256xi1>, vector<4x256xf32>
    %c240_i32_46 = arith.constant 240 : i32
    %124 = tpu.dynamic_rotate %93 by %c240_i32_46 dim 1 : vector<4x256xf32>, i32 -> vector<4x256xf32>
    %cst_47 = arith.constant 0.000000e+00 : f32
    %125 = vector.shape_cast %63 : vector<1x256xi1> to vector<1x256xi1>
    %126 = vector.broadcast %125 : vector<1x256xi1> to vector<4x256xi1>
    %127 = vector.broadcast %cst_47 : f32 to vector<4x256xf32>
    %128 = arith.select %126, %124, %127 : vector<4x256xi1>, vector<4x256xf32>
    %c239_i32_48 = arith.constant 239 : i32
    %129 = tpu.dynamic_rotate %93 by %c239_i32_48 dim 1 : vector<4x256xf32>, i32 -> vector<4x256xf32>
    %cst_49 = arith.constant 0.000000e+00 : f32
    %130 = vector.shape_cast %73 : vector<1x256xi1> to vector<1x256xi1>
    %131 = vector.broadcast %130 : vector<1x256xi1> to vector<4x256xi1>
    %132 = vector.broadcast %cst_49 : f32 to vector<4x256xf32>
    %133 = arith.select %131, %129, %132 : vector<4x256xi1>, vector<4x256xf32>
    %134 = tpu.concatenate %98, %103, %108, %113, %93, %118, %123, %128, %133 in 0 : vector<4x256xf32>, vector<4x256xf32>, vector<4x256xf32>, vector<4x256xf32>, vector<4x256xf32>, vector<4x256xf32>, vector<4x256xf32>, vector<4x256xf32>, vector<4x256xf32> -> vector<36x256xf32>
    %c0_50 = arith.constant 0 : index
    %c0_51 = arith.constant 0 : index
    %135 = vector.load %arg7[%c0_50, %c0_51] : memref<4x36xf32, #tpu.memory_space<vmem>>, vector<4x36xf32>
    %cst_52 = arith.constant dense<0.000000e+00> : vector<4x256xf32>
    %136 = tpu.matmul %135, %134, %cst_52 {dimension_numbers = #tpu.dot_dimension_numbers<[1], [0], [0], [1], [0, 0, 1, 1], [], []>} : vector<4x36xf32>, vector<36x256xf32>, vector<4x256xf32> -> vector<4x256xf32>
    %c0_53 = arith.constant 0 : index
    %c0_54 = arith.constant 0 : index
    %137 = vector.load %arg8[%c0_53, %c0_54] : memref<4x1xf32, #tpu.memory_space<vmem>>, vector<4x1xf32>
    %138 = vector.broadcast %137 : vector<4x1xf32> to vector<4x256xf32>
    %139 = arith.addf %136, %138 : vector<4x256xf32>
    %140 = tpu.concatenate %83, %139 in 0 : vector<4x256xf32>, vector<4x256xf32> -> vector<8x256xf32>
    %c17_i32_55 = arith.constant 17 : i32
    %141 = tpu.dynamic_rotate %140 by %c17_i32_55 dim 1 : vector<8x256xf32>, i32 -> vector<8x256xf32>
    %cst_56 = arith.constant 0.000000e+00 : f32
    %142 = vector.shape_cast %15 : vector<1x256xi1> to vector<1x256xi1>
    %143 = vector.broadcast %142 : vector<1x256xi1> to vector<8x256xi1>
    %144 = vector.broadcast %cst_56 : f32 to vector<8x256xf32>
    %145 = arith.select %143, %141, %144 : vector<8x256xi1>, vector<8x256xf32>
    %c16_i32_57 = arith.constant 16 : i32
    %146 = tpu.dynamic_rotate %140 by %c16_i32_57 dim 1 : vector<8x256xf32>, i32 -> vector<8x256xf32>
    %cst_58 = arith.constant 0.000000e+00 : f32
    %147 = vector.shape_cast %22 : vector<1x256xi1> to vector<1x256xi1>
    %148 = vector.broadcast %147 : vector<1x256xi1> to vector<8x256xi1>
    %149 = vector.broadcast %cst_58 : f32 to vector<8x256xf32>
    %150 = arith.select %148, %146, %149 : vector<8x256xi1>, vector<8x256xf32>
    %c15_i32_59 = arith.constant 15 : i32
    %151 = tpu.dynamic_rotate %140 by %c15_i32_59 dim 1 : vector<8x256xf32>, i32 -> vector<8x256xf32>
    %cst_60 = arith.constant 0.000000e+00 : f32
    %152 = vector.shape_cast %32 : vector<1x256xi1> to vector<1x256xi1>
    %153 = vector.broadcast %152 : vector<1x256xi1> to vector<8x256xi1>
    %154 = vector.broadcast %cst_60 : f32 to vector<8x256xf32>
    %155 = arith.select %153, %151, %154 : vector<8x256xi1>, vector<8x256xf32>
    %c1_i32_61 = arith.constant 1 : i32
    %156 = tpu.dynamic_rotate %140 by %c1_i32_61 dim 1 : vector<8x256xf32>, i32 -> vector<8x256xf32>
    %cst_62 = arith.constant 0.000000e+00 : f32
    %157 = vector.shape_cast %39 : vector<1x256xi1> to vector<1x256xi1>
    %158 = vector.broadcast %157 : vector<1x256xi1> to vector<8x256xi1>
    %159 = vector.broadcast %cst_62 : f32 to vector<8x256xf32>
    %160 = arith.select %158, %156, %159 : vector<8x256xi1>, vector<8x256xf32>
    %c255_i32_63 = arith.constant 255 : i32
    %161 = tpu.dynamic_rotate %140 by %c255_i32_63 dim 1 : vector<8x256xf32>, i32 -> vector<8x256xf32>
    %cst_64 = arith.constant 0.000000e+00 : f32
    %162 = vector.shape_cast %46 : vector<1x256xi1> to vector<1x256xi1>
    %163 = vector.broadcast %162 : vector<1x256xi1> to vector<8x256xi1>
    %164 = vector.broadcast %cst_64 : f32 to vector<8x256xf32>
    %165 = arith.select %163, %161, %164 : vector<8x256xi1>, vector<8x256xf32>
    %c241_i32_65 = arith.constant 241 : i32
    %166 = tpu.dynamic_rotate %140 by %c241_i32_65 dim 1 : vector<8x256xf32>, i32 -> vector<8x256xf32>
    %cst_66 = arith.constant 0.000000e+00 : f32
    %167 = vector.shape_cast %56 : vector<1x256xi1> to vector<1x256xi1>
    %168 = vector.broadcast %167 : vector<1x256xi1> to vector<8x256xi1>
    %169 = vector.broadcast %cst_66 : f32 to vector<8x256xf32>
    %170 = arith.select %168, %166, %169 : vector<8x256xi1>, vector<8x256xf32>
    %c240_i32_67 = arith.constant 240 : i32
    %171 = tpu.dynamic_rotate %140 by %c240_i32_67 dim 1 : vector<8x256xf32>, i32 -> vector<8x256xf32>
    %cst_68 = arith.constant 0.000000e+00 : f32
    %172 = vector.shape_cast %63 : vector<1x256xi1> to vector<1x256xi1>
    %173 = vector.broadcast %172 : vector<1x256xi1> to vector<8x256xi1>
    %174 = vector.broadcast %cst_68 : f32 to vector<8x256xf32>
    %175 = arith.select %173, %171, %174 : vector<8x256xi1>, vector<8x256xf32>
    %c239_i32_69 = arith.constant 239 : i32
    %176 = tpu.dynamic_rotate %140 by %c239_i32_69 dim 1 : vector<8x256xf32>, i32 -> vector<8x256xf32>
    %cst_70 = arith.constant 0.000000e+00 : f32
    %177 = vector.shape_cast %73 : vector<1x256xi1> to vector<1x256xi1>
    %178 = vector.broadcast %177 : vector<1x256xi1> to vector<8x256xi1>
    %179 = vector.broadcast %cst_70 : f32 to vector<8x256xf32>
    %180 = arith.select %178, %176, %179 : vector<8x256xi1>, vector<8x256xf32>
    %181 = tpu.concatenate %145, %150, %155, %160, %140, %165, %170, %175, %180 in 0 : vector<8x256xf32>, vector<8x256xf32>, vector<8x256xf32>, vector<8x256xf32>, vector<8x256xf32>, vector<8x256xf32>, vector<8x256xf32>, vector<8x256xf32>, vector<8x256xf32> -> vector<72x256xf32>
    %c0_71 = arith.constant 0 : index
    %c0_72 = arith.constant 0 : index
    %182 = vector.load %arg9[%c0_71, %c0_72] : memref<8x72xf32, #tpu.memory_space<vmem>>, vector<8x72xf32>
    %cst_73 = arith.constant dense<0.000000e+00> : vector<8x256xf32>
    %183 = tpu.matmul %182, %181, %cst_73 {dimension_numbers = #tpu.dot_dimension_numbers<[1], [0], [0], [1], [0, 0, 1, 1], [], []>} : vector<8x72xf32>, vector<72x256xf32>, vector<8x256xf32> -> vector<8x256xf32>
    %c0_74 = arith.constant 0 : index
    %c0_75 = arith.constant 0 : index
    %184 = vector.load %arg10[%c0_74, %c0_75] : memref<8x1xf32, #tpu.memory_space<vmem>>, vector<8x1xf32>
    %185 = vector.broadcast %184 : vector<8x1xf32> to vector<8x256xf32>
    %186 = arith.addf %183, %185 : vector<8x256xf32>
    %c0_76 = arith.constant 0 : index
    %c0_77 = arith.constant 0 : index
    %187 = vector.load %arg11[%c0_76, %c0_77] : memref<8x72xf32, #tpu.memory_space<vmem>>, vector<8x72xf32>
    %cst_78 = arith.constant dense<0.000000e+00> : vector<8x256xf32>
    %188 = tpu.matmul %187, %181, %cst_78 {dimension_numbers = #tpu.dot_dimension_numbers<[1], [0], [0], [1], [0, 0, 1, 1], [], []>} : vector<8x72xf32>, vector<72x256xf32>, vector<8x256xf32> -> vector<8x256xf32>
    %c0_79 = arith.constant 0 : index
    %c0_80 = arith.constant 0 : index
    %189 = vector.load %arg12[%c0_79, %c0_80] : memref<8x1xf32, #tpu.memory_space<vmem>>, vector<8x1xf32>
    %190 = vector.broadcast %189 : vector<8x1xf32> to vector<8x256xf32>
    %191 = arith.addf %188, %190 : vector<8x256xf32>
    %cst_81 = arith.constant 0.000000e+00 : f32
    %192 = vector.broadcast %cst_81 : f32 to vector<8x256xf32>
    %193 = arith.cmpf oge, %191, %192 : vector<8x256xf32>
    %194 = vector.broadcast %1 : f32 to vector<8x256xf32>
    %195 = arith.mulf %194, %191 : vector<8x256xf32>
    %196 = arith.select %193, %191, %195 : vector<8x256xi1>, vector<8x256xf32>
    %c17_i32_82 = arith.constant 17 : i32
    %197 = tpu.dynamic_rotate %196 by %c17_i32_82 dim 1 : vector<8x256xf32>, i32 -> vector<8x256xf32>
    %cst_83 = arith.constant 0.000000e+00 : f32
    %198 = vector.shape_cast %15 : vector<1x256xi1> to vector<1x256xi1>
    %199 = vector.broadcast %198 : vector<1x256xi1> to vector<8x256xi1>
    %200 = vector.broadcast %cst_83 : f32 to vector<8x256xf32>
    %201 = arith.select %199, %197, %200 : vector<8x256xi1>, vector<8x256xf32>
    %c16_i32_84 = arith.constant 16 : i32
    %202 = tpu.dynamic_rotate %196 by %c16_i32_84 dim 1 : vector<8x256xf32>, i32 -> vector<8x256xf32>
    %cst_85 = arith.constant 0.000000e+00 : f32
    %203 = vector.shape_cast %22 : vector<1x256xi1> to vector<1x256xi1>
    %204 = vector.broadcast %203 : vector<1x256xi1> to vector<8x256xi1>
    %205 = vector.broadcast %cst_85 : f32 to vector<8x256xf32>
    %206 = arith.select %204, %202, %205 : vector<8x256xi1>, vector<8x256xf32>
    %c15_i32_86 = arith.constant 15 : i32
    %207 = tpu.dynamic_rotate %196 by %c15_i32_86 dim 1 : vector<8x256xf32>, i32 -> vector<8x256xf32>
    %cst_87 = arith.constant 0.000000e+00 : f32
    %208 = vector.shape_cast %32 : vector<1x256xi1> to vector<1x256xi1>
    %209 = vector.broadcast %208 : vector<1x256xi1> to vector<8x256xi1>
    %210 = vector.broadcast %cst_87 : f32 to vector<8x256xf32>
    %211 = arith.select %209, %207, %210 : vector<8x256xi1>, vector<8x256xf32>
    %c1_i32_88 = arith.constant 1 : i32
    %212 = tpu.dynamic_rotate %196 by %c1_i32_88 dim 1 : vector<8x256xf32>, i32 -> vector<8x256xf32>
    %cst_89 = arith.constant 0.000000e+00 : f32
    %213 = vector.shape_cast %39 : vector<1x256xi1> to vector<1x256xi1>
    %214 = vector.broadcast %213 : vector<1x256xi1> to vector<8x256xi1>
    %215 = vector.broadcast %cst_89 : f32 to vector<8x256xf32>
    %216 = arith.select %214, %212, %215 : vector<8x256xi1>, vector<8x256xf32>
    %c255_i32_90 = arith.constant 255 : i32
    %217 = tpu.dynamic_rotate %196 by %c255_i32_90 dim 1 : vector<8x256xf32>, i32 -> vector<8x256xf32>
    %cst_91 = arith.constant 0.000000e+00 : f32
    %218 = vector.shape_cast %46 : vector<1x256xi1> to vector<1x256xi1>
    %219 = vector.broadcast %218 : vector<1x256xi1> to vector<8x256xi1>
    %220 = vector.broadcast %cst_91 : f32 to vector<8x256xf32>
    %221 = arith.select %219, %217, %220 : vector<8x256xi1>, vector<8x256xf32>
    %c241_i32_92 = arith.constant 241 : i32
    %222 = tpu.dynamic_rotate %196 by %c241_i32_92 dim 1 : vector<8x256xf32>, i32 -> vector<8x256xf32>
    %cst_93 = arith.constant 0.000000e+00 : f32
    %223 = vector.shape_cast %56 : vector<1x256xi1> to vector<1x256xi1>
    %224 = vector.broadcast %223 : vector<1x256xi1> to vector<8x256xi1>
    %225 = vector.broadcast %cst_93 : f32 to vector<8x256xf32>
    %226 = arith.select %224, %222, %225 : vector<8x256xi1>, vector<8x256xf32>
    %c240_i32_94 = arith.constant 240 : i32
    %227 = tpu.dynamic_rotate %196 by %c240_i32_94 dim 1 : vector<8x256xf32>, i32 -> vector<8x256xf32>
    %cst_95 = arith.constant 0.000000e+00 : f32
    %228 = vector.shape_cast %63 : vector<1x256xi1> to vector<1x256xi1>
    %229 = vector.broadcast %228 : vector<1x256xi1> to vector<8x256xi1>
    %230 = vector.broadcast %cst_95 : f32 to vector<8x256xf32>
    %231 = arith.select %229, %227, %230 : vector<8x256xi1>, vector<8x256xf32>
    %c239_i32_96 = arith.constant 239 : i32
    %232 = tpu.dynamic_rotate %196 by %c239_i32_96 dim 1 : vector<8x256xf32>, i32 -> vector<8x256xf32>
    %cst_97 = arith.constant 0.000000e+00 : f32
    %233 = vector.shape_cast %73 : vector<1x256xi1> to vector<1x256xi1>
    %234 = vector.broadcast %233 : vector<1x256xi1> to vector<8x256xi1>
    %235 = vector.broadcast %cst_97 : f32 to vector<8x256xf32>
    %236 = arith.select %234, %232, %235 : vector<8x256xi1>, vector<8x256xf32>
    %237 = tpu.concatenate %201, %206, %211, %216, %196, %221, %226, %231, %236 in 0 : vector<8x256xf32>, vector<8x256xf32>, vector<8x256xf32>, vector<8x256xf32>, vector<8x256xf32>, vector<8x256xf32>, vector<8x256xf32>, vector<8x256xf32>, vector<8x256xf32> -> vector<72x256xf32>
    %c0_98 = arith.constant 0 : index
    %c0_99 = arith.constant 0 : index
    %238 = vector.load %arg13[%c0_98, %c0_99] : memref<8x72xf32, #tpu.memory_space<vmem>>, vector<8x72xf32>
    %cst_100 = arith.constant dense<0.000000e+00> : vector<8x256xf32>
    %239 = tpu.matmul %238, %237, %cst_100 {dimension_numbers = #tpu.dot_dimension_numbers<[1], [0], [0], [1], [0, 0, 1, 1], [], []>} : vector<8x72xf32>, vector<72x256xf32>, vector<8x256xf32> -> vector<8x256xf32>
    %c0_101 = arith.constant 0 : index
    %c0_102 = arith.constant 0 : index
    %240 = vector.load %arg14[%c0_101, %c0_102] : memref<8x1xf32, #tpu.memory_space<vmem>>, vector<8x1xf32>
    %241 = vector.broadcast %240 : vector<8x1xf32> to vector<8x256xf32>
    %242 = arith.addf %239, %241 : vector<8x256xf32>
    %243 = tpu.concatenate %186, %242 in 0 : vector<8x256xf32>, vector<8x256xf32> -> vector<16x256xf32>
    %c0_103 = arith.constant 0 : index
    %c0_104 = arith.constant 0 : index
    %244 = vector.load %arg15[%c0_103, %c0_104] : memref<4x16xf32, #tpu.memory_space<vmem>>, vector<4x16xf32>
    %cst_105 = arith.constant dense<0.000000e+00> : vector<4x256xf32>
    %245 = tpu.matmul %244, %243, %cst_105 {dimension_numbers = #tpu.dot_dimension_numbers<[1], [0], [0], [1], [0, 0, 1, 1], [], []>} : vector<4x16xf32>, vector<16x256xf32>, vector<4x256xf32> -> vector<4x256xf32>
    %c0_106 = arith.constant 0 : index
    %c0_107 = arith.constant 0 : index
    %246 = vector.load %arg16[%c0_106, %c0_107] : memref<4x1xf32, #tpu.memory_space<vmem>>, vector<4x1xf32>
    %247 = vector.broadcast %246 : vector<4x1xf32> to vector<4x256xf32>
    %248 = arith.addf %245, %247 : vector<4x256xf32>
    %cst_108 = arith.constant dense<0.000000e+00> : vector<256xf32>
    %249 = vector.multi_reduction <add>, %248, %cst_108 [0] : vector<4x256xf32> to vector<256xf32>
    %250 = vector.shape_cast %249 : vector<256xf32> to vector<1x256xf32>
    %cst_109 = arith.constant 4.000000e+00 : f32
    %251 = vector.broadcast %cst_109 : f32 to vector<1x256xf32>
    %252 = arith.divf %250, %251 : vector<1x256xf32>
    %cst_110 = arith.constant dense<0xFF800000> : vector<256xf32>
    %253 = vector.multi_reduction <maximumf>, %248, %cst_110 [0] : vector<4x256xf32> to vector<256xf32>
    %254 = vector.shape_cast %253 : vector<256xf32> to vector<1x256xf32>
    %255 = tpu.concatenate %252, %254 in 0 : vector<1x256xf32>, vector<1x256xf32> -> vector<2x256xf32>
    %c17_i32_111 = arith.constant 17 : i32
    %256 = tpu.dynamic_rotate %255 by %c17_i32_111 dim 1 : vector<2x256xf32>, i32 -> vector<2x256xf32>
    %cst_112 = arith.constant 0.000000e+00 : f32
    %257 = vector.shape_cast %15 : vector<1x256xi1> to vector<1x256xi1>
    %258 = vector.broadcast %257 : vector<1x256xi1> to vector<2x256xi1>
    %259 = vector.broadcast %cst_112 : f32 to vector<2x256xf32>
    %260 = arith.select %258, %256, %259 : vector<2x256xi1>, vector<2x256xf32>
    %c16_i32_113 = arith.constant 16 : i32
    %261 = tpu.dynamic_rotate %255 by %c16_i32_113 dim 1 : vector<2x256xf32>, i32 -> vector<2x256xf32>
    %cst_114 = arith.constant 0.000000e+00 : f32
    %262 = vector.shape_cast %22 : vector<1x256xi1> to vector<1x256xi1>
    %263 = vector.broadcast %262 : vector<1x256xi1> to vector<2x256xi1>
    %264 = vector.broadcast %cst_114 : f32 to vector<2x256xf32>
    %265 = arith.select %263, %261, %264 : vector<2x256xi1>, vector<2x256xf32>
    %c15_i32_115 = arith.constant 15 : i32
    %266 = tpu.dynamic_rotate %255 by %c15_i32_115 dim 1 : vector<2x256xf32>, i32 -> vector<2x256xf32>
    %cst_116 = arith.constant 0.000000e+00 : f32
    %267 = vector.shape_cast %32 : vector<1x256xi1> to vector<1x256xi1>
    %268 = vector.broadcast %267 : vector<1x256xi1> to vector<2x256xi1>
    %269 = vector.broadcast %cst_116 : f32 to vector<2x256xf32>
    %270 = arith.select %268, %266, %269 : vector<2x256xi1>, vector<2x256xf32>
    %c1_i32_117 = arith.constant 1 : i32
    %271 = tpu.dynamic_rotate %255 by %c1_i32_117 dim 1 : vector<2x256xf32>, i32 -> vector<2x256xf32>
    %cst_118 = arith.constant 0.000000e+00 : f32
    %272 = vector.shape_cast %39 : vector<1x256xi1> to vector<1x256xi1>
    %273 = vector.broadcast %272 : vector<1x256xi1> to vector<2x256xi1>
    %274 = vector.broadcast %cst_118 : f32 to vector<2x256xf32>
    %275 = arith.select %273, %271, %274 : vector<2x256xi1>, vector<2x256xf32>
    %c255_i32_119 = arith.constant 255 : i32
    %276 = tpu.dynamic_rotate %255 by %c255_i32_119 dim 1 : vector<2x256xf32>, i32 -> vector<2x256xf32>
    %cst_120 = arith.constant 0.000000e+00 : f32
    %277 = vector.shape_cast %46 : vector<1x256xi1> to vector<1x256xi1>
    %278 = vector.broadcast %277 : vector<1x256xi1> to vector<2x256xi1>
    %279 = vector.broadcast %cst_120 : f32 to vector<2x256xf32>
    %280 = arith.select %278, %276, %279 : vector<2x256xi1>, vector<2x256xf32>
    %c241_i32_121 = arith.constant 241 : i32
    %281 = tpu.dynamic_rotate %255 by %c241_i32_121 dim 1 : vector<2x256xf32>, i32 -> vector<2x256xf32>
    %cst_122 = arith.constant 0.000000e+00 : f32
    %282 = vector.shape_cast %56 : vector<1x256xi1> to vector<1x256xi1>
    %283 = vector.broadcast %282 : vector<1x256xi1> to vector<2x256xi1>
    %284 = vector.broadcast %cst_122 : f32 to vector<2x256xf32>
    %285 = arith.select %283, %281, %284 : vector<2x256xi1>, vector<2x256xf32>
    %c240_i32_123 = arith.constant 240 : i32
    %286 = tpu.dynamic_rotate %255 by %c240_i32_123 dim 1 : vector<2x256xf32>, i32 -> vector<2x256xf32>
    %cst_124 = arith.constant 0.000000e+00 : f32
    %287 = vector.shape_cast %63 : vector<1x256xi1> to vector<1x256xi1>
    %288 = vector.broadcast %287 : vector<1x256xi1> to vector<2x256xi1>
    %289 = vector.broadcast %cst_124 : f32 to vector<2x256xf32>
    %290 = arith.select %288, %286, %289 : vector<2x256xi1>, vector<2x256xf32>
    %c239_i32_125 = arith.constant 239 : i32
    %291 = tpu.dynamic_rotate %255 by %c239_i32_125 dim 1 : vector<2x256xf32>, i32 -> vector<2x256xf32>
    %cst_126 = arith.constant 0.000000e+00 : f32
    %292 = vector.shape_cast %73 : vector<1x256xi1> to vector<1x256xi1>
    %293 = vector.broadcast %292 : vector<1x256xi1> to vector<2x256xi1>
    %294 = vector.broadcast %cst_126 : f32 to vector<2x256xf32>
    %295 = arith.select %293, %291, %294 : vector<2x256xi1>, vector<2x256xf32>
    %296 = tpu.concatenate %260, %265, %270, %275, %255, %280, %285, %290, %295 in 0 : vector<2x256xf32>, vector<2x256xf32>, vector<2x256xf32>, vector<2x256xf32>, vector<2x256xf32>, vector<2x256xf32>, vector<2x256xf32>, vector<2x256xf32>, vector<2x256xf32> -> vector<18x256xf32>
    %c0_127 = arith.constant 0 : index
    %c0_128 = arith.constant 0 : index
    %297 = vector.load %arg17[%c0_127, %c0_128] : memref<1x18xf32, #tpu.memory_space<vmem>>, vector<1x18xf32>
    %cst_129 = arith.constant dense<0.000000e+00> : vector<1x256xf32>
    %298 = tpu.matmul %297, %296, %cst_129 {dimension_numbers = #tpu.dot_dimension_numbers<[1], [0], [0], [1], [0, 0, 1, 1], [], []>} : vector<1x18xf32>, vector<18x256xf32>, vector<1x256xf32> -> vector<1x256xf32>
    %c0_130 = arith.constant 0 : index
    %c0_131 = arith.constant 0 : index
    %299 = vector.load %arg18[%c0_130, %c0_131] : memref<1x1xf32, #tpu.memory_space<vmem>>, vector<1x1xf32>
    %300 = vector.broadcast %299 : vector<1x1xf32> to vector<1x256xf32>
    %301 = arith.addf %298, %300 : vector<1x256xf32>
    %c0_132 = arith.constant 0 : index
    %c0_133 = arith.constant 0 : index
    %302 = vector.load %arg19[%c0_132, %c0_133] : memref<2x18xf32, #tpu.memory_space<vmem>>, vector<2x18xf32>
    %cst_134 = arith.constant dense<0.000000e+00> : vector<2x256xf32>
    %303 = tpu.matmul %302, %296, %cst_134 {dimension_numbers = #tpu.dot_dimension_numbers<[1], [0], [0], [1], [0, 0, 1, 1], [], []>} : vector<2x18xf32>, vector<18x256xf32>, vector<2x256xf32> -> vector<2x256xf32>
    %c0_135 = arith.constant 0 : index
    %c0_136 = arith.constant 0 : index
    %304 = vector.load %arg20[%c0_135, %c0_136] : memref<2x1xf32, #tpu.memory_space<vmem>>, vector<2x1xf32>
    %305 = vector.broadcast %304 : vector<2x1xf32> to vector<2x256xf32>
    %306 = arith.addf %303, %305 : vector<2x256xf32>
    %cst_137 = arith.constant 0.000000e+00 : f32
    %307 = vector.broadcast %cst_137 : f32 to vector<2x256xf32>
    %308 = arith.cmpf oge, %306, %307 : vector<2x256xf32>
    %309 = vector.broadcast %2 : f32 to vector<2x256xf32>
    %310 = arith.mulf %309, %306 : vector<2x256xf32>
    %311 = arith.select %308, %306, %310 : vector<2x256xi1>, vector<2x256xf32>
    %c17_i32_138 = arith.constant 17 : i32
    %312 = tpu.dynamic_rotate %311 by %c17_i32_138 dim 1 : vector<2x256xf32>, i32 -> vector<2x256xf32>
    %cst_139 = arith.constant 0.000000e+00 : f32
    %313 = vector.shape_cast %15 : vector<1x256xi1> to vector<1x256xi1>
    %314 = vector.broadcast %313 : vector<1x256xi1> to vector<2x256xi1>
    %315 = vector.broadcast %cst_139 : f32 to vector<2x256xf32>
    %316 = arith.select %314, %312, %315 : vector<2x256xi1>, vector<2x256xf32>
    %c16_i32_140 = arith.constant 16 : i32
    %317 = tpu.dynamic_rotate %311 by %c16_i32_140 dim 1 : vector<2x256xf32>, i32 -> vector<2x256xf32>
    %cst_141 = arith.constant 0.000000e+00 : f32
    %318 = vector.shape_cast %22 : vector<1x256xi1> to vector<1x256xi1>
    %319 = vector.broadcast %318 : vector<1x256xi1> to vector<2x256xi1>
    %320 = vector.broadcast %cst_141 : f32 to vector<2x256xf32>
    %321 = arith.select %319, %317, %320 : vector<2x256xi1>, vector<2x256xf32>
    %c15_i32_142 = arith.constant 15 : i32
    %322 = tpu.dynamic_rotate %311 by %c15_i32_142 dim 1 : vector<2x256xf32>, i32 -> vector<2x256xf32>
    %cst_143 = arith.constant 0.000000e+00 : f32
    %323 = vector.shape_cast %32 : vector<1x256xi1> to vector<1x256xi1>
    %324 = vector.broadcast %323 : vector<1x256xi1> to vector<2x256xi1>
    %325 = vector.broadcast %cst_143 : f32 to vector<2x256xf32>
    %326 = arith.select %324, %322, %325 : vector<2x256xi1>, vector<2x256xf32>
    %c1_i32_144 = arith.constant 1 : i32
    %327 = tpu.dynamic_rotate %311 by %c1_i32_144 dim 1 : vector<2x256xf32>, i32 -> vector<2x256xf32>
    %cst_145 = arith.constant 0.000000e+00 : f32
    %328 = vector.shape_cast %39 : vector<1x256xi1> to vector<1x256xi1>
    %329 = vector.broadcast %328 : vector<1x256xi1> to vector<2x256xi1>
    %330 = vector.broadcast %cst_145 : f32 to vector<2x256xf32>
    %331 = arith.select %329, %327, %330 : vector<2x256xi1>, vector<2x256xf32>
    %c255_i32_146 = arith.constant 255 : i32
    %332 = tpu.dynamic_rotate %311 by %c255_i32_146 dim 1 : vector<2x256xf32>, i32 -> vector<2x256xf32>
    %cst_147 = arith.constant 0.000000e+00 : f32
    %333 = vector.shape_cast %46 : vector<1x256xi1> to vector<1x256xi1>
    %334 = vector.broadcast %333 : vector<1x256xi1> to vector<2x256xi1>
    %335 = vector.broadcast %cst_147 : f32 to vector<2x256xf32>
    %336 = arith.select %334, %332, %335 : vector<2x256xi1>, vector<2x256xf32>
    %c241_i32_148 = arith.constant 241 : i32
    %337 = tpu.dynamic_rotate %311 by %c241_i32_148 dim 1 : vector<2x256xf32>, i32 -> vector<2x256xf32>
    %cst_149 = arith.constant 0.000000e+00 : f32
    %338 = vector.shape_cast %56 : vector<1x256xi1> to vector<1x256xi1>
    %339 = vector.broadcast %338 : vector<1x256xi1> to vector<2x256xi1>
    %340 = vector.broadcast %cst_149 : f32 to vector<2x256xf32>
    %341 = arith.select %339, %337, %340 : vector<2x256xi1>, vector<2x256xf32>
    %c240_i32_150 = arith.constant 240 : i32
    %342 = tpu.dynamic_rotate %311 by %c240_i32_150 dim 1 : vector<2x256xf32>, i32 -> vector<2x256xf32>
    %cst_151 = arith.constant 0.000000e+00 : f32
    %343 = vector.shape_cast %63 : vector<1x256xi1> to vector<1x256xi1>
    %344 = vector.broadcast %343 : vector<1x256xi1> to vector<2x256xi1>
    %345 = vector.broadcast %cst_151 : f32 to vector<2x256xf32>
    %346 = arith.select %344, %342, %345 : vector<2x256xi1>, vector<2x256xf32>
    %c239_i32_152 = arith.constant 239 : i32
    %347 = tpu.dynamic_rotate %311 by %c239_i32_152 dim 1 : vector<2x256xf32>, i32 -> vector<2x256xf32>
    %cst_153 = arith.constant 0.000000e+00 : f32
    %348 = vector.shape_cast %73 : vector<1x256xi1> to vector<1x256xi1>
    %349 = vector.broadcast %348 : vector<1x256xi1> to vector<2x256xi1>
    %350 = vector.broadcast %cst_153 : f32 to vector<2x256xf32>
    %351 = arith.select %349, %347, %350 : vector<2x256xi1>, vector<2x256xf32>
    %352 = tpu.concatenate %316, %321, %326, %331, %311, %336, %341, %346, %351 in 0 : vector<2x256xf32>, vector<2x256xf32>, vector<2x256xf32>, vector<2x256xf32>, vector<2x256xf32>, vector<2x256xf32>, vector<2x256xf32>, vector<2x256xf32>, vector<2x256xf32> -> vector<18x256xf32>
    %c0_154 = arith.constant 0 : index
    %c0_155 = arith.constant 0 : index
    %353 = vector.load %arg21[%c0_154, %c0_155] : memref<1x18xf32, #tpu.memory_space<vmem>>, vector<1x18xf32>
    %cst_156 = arith.constant dense<0.000000e+00> : vector<1x256xf32>
    %354 = tpu.matmul %353, %352, %cst_156 {dimension_numbers = #tpu.dot_dimension_numbers<[1], [0], [0], [1], [0, 0, 1, 1], [], []>} : vector<1x18xf32>, vector<18x256xf32>, vector<1x256xf32> -> vector<1x256xf32>
    %c0_157 = arith.constant 0 : index
    %c0_158 = arith.constant 0 : index
    %355 = vector.load %arg22[%c0_157, %c0_158] : memref<1x1xf32, #tpu.memory_space<vmem>>, vector<1x1xf32>
    %356 = vector.broadcast %355 : vector<1x1xf32> to vector<1x256xf32>
    %357 = arith.addf %354, %356 : vector<1x256xf32>
    %c51_i32 = arith.constant 51 : i32
    %358 = tpu.dynamic_rotate %255 by %c51_i32 dim 1 : vector<2x256xf32>, i32 -> vector<2x256xf32>
    %c3_i32 = arith.constant 3 : i32
    %359 = vector.broadcast %c3_i32 : i32 to vector<1x256xi32>
    %360 = arith.cmpi sge, %7, %359 : vector<1x256xi32>
    %c3_i32_159 = arith.constant 3 : i32
    %361 = vector.broadcast %c3_i32_159 : i32 to vector<1x256xi32>
    %362 = arith.cmpi sge, %9, %361 : vector<1x256xi32>
    %363 = arith.andi %360, %362 : vector<1x256xi1>
    %cst_160 = arith.constant 0.000000e+00 : f32
    %364 = vector.shape_cast %363 : vector<1x256xi1> to vector<1x256xi1>
    %365 = vector.broadcast %364 : vector<1x256xi1> to vector<2x256xi1>
    %366 = vector.broadcast %cst_160 : f32 to vector<2x256xf32>
    %367 = arith.select %365, %358, %366 : vector<2x256xi1>, vector<2x256xf32>
    %c50_i32 = arith.constant 50 : i32
    %368 = tpu.dynamic_rotate %255 by %c50_i32 dim 1 : vector<2x256xf32>, i32 -> vector<2x256xf32>
    %c3_i32_161 = arith.constant 3 : i32
    %369 = vector.broadcast %c3_i32_161 : i32 to vector<1x256xi32>
    %370 = arith.cmpi sge, %7, %369 : vector<1x256xi32>
    %c2_i32 = arith.constant 2 : i32
    %371 = vector.broadcast %c2_i32 : i32 to vector<1x256xi32>
    %372 = arith.cmpi sge, %9, %371 : vector<1x256xi32>
    %373 = arith.andi %370, %372 : vector<1x256xi1>
    %cst_162 = arith.constant 0.000000e+00 : f32
    %374 = vector.shape_cast %373 : vector<1x256xi1> to vector<1x256xi1>
    %375 = vector.broadcast %374 : vector<1x256xi1> to vector<2x256xi1>
    %376 = vector.broadcast %cst_162 : f32 to vector<2x256xf32>
    %377 = arith.select %375, %368, %376 : vector<2x256xi1>, vector<2x256xf32>
    %c49_i32 = arith.constant 49 : i32
    %378 = tpu.dynamic_rotate %255 by %c49_i32 dim 1 : vector<2x256xf32>, i32 -> vector<2x256xf32>
    %c3_i32_163 = arith.constant 3 : i32
    %379 = vector.broadcast %c3_i32_163 : i32 to vector<1x256xi32>
    %380 = arith.cmpi sge, %7, %379 : vector<1x256xi32>
    %c1_i32_164 = arith.constant 1 : i32
    %381 = vector.broadcast %c1_i32_164 : i32 to vector<1x256xi32>
    %382 = arith.cmpi sge, %9, %381 : vector<1x256xi32>
    %383 = arith.andi %380, %382 : vector<1x256xi1>
    %cst_165 = arith.constant 0.000000e+00 : f32
    %384 = vector.shape_cast %383 : vector<1x256xi1> to vector<1x256xi1>
    %385 = vector.broadcast %384 : vector<1x256xi1> to vector<2x256xi1>
    %386 = vector.broadcast %cst_165 : f32 to vector<2x256xf32>
    %387 = arith.select %385, %378, %386 : vector<2x256xi1>, vector<2x256xf32>
    %c48_i32 = arith.constant 48 : i32
    %388 = tpu.dynamic_rotate %255 by %c48_i32 dim 1 : vector<2x256xf32>, i32 -> vector<2x256xf32>
    %c3_i32_166 = arith.constant 3 : i32
    %389 = vector.broadcast %c3_i32_166 : i32 to vector<1x256xi32>
    %390 = arith.cmpi sge, %7, %389 : vector<1x256xi32>
    %cst_167 = arith.constant 0.000000e+00 : f32
    %391 = vector.shape_cast %390 : vector<1x256xi1> to vector<1x256xi1>
    %392 = vector.broadcast %391 : vector<1x256xi1> to vector<2x256xi1>
    %393 = vector.broadcast %cst_167 : f32 to vector<2x256xf32>
    %394 = arith.select %392, %388, %393 : vector<2x256xi1>, vector<2x256xf32>
    %c47_i32 = arith.constant 47 : i32
    %395 = tpu.dynamic_rotate %255 by %c47_i32 dim 1 : vector<2x256xf32>, i32 -> vector<2x256xf32>
    %c3_i32_168 = arith.constant 3 : i32
    %396 = vector.broadcast %c3_i32_168 : i32 to vector<1x256xi32>
    %397 = arith.cmpi sge, %7, %396 : vector<1x256xi32>
    %c15_i32_169 = arith.constant 15 : i32
    %398 = vector.broadcast %c15_i32_169 : i32 to vector<1x256xi32>
    %399 = arith.cmpi slt, %9, %398 : vector<1x256xi32>
    %400 = arith.andi %397, %399 : vector<1x256xi1>
    %cst_170 = arith.constant 0.000000e+00 : f32
    %401 = vector.shape_cast %400 : vector<1x256xi1> to vector<1x256xi1>
    %402 = vector.broadcast %401 : vector<1x256xi1> to vector<2x256xi1>
    %403 = vector.broadcast %cst_170 : f32 to vector<2x256xf32>
    %404 = arith.select %402, %395, %403 : vector<2x256xi1>, vector<2x256xf32>
    %c46_i32 = arith.constant 46 : i32
    %405 = tpu.dynamic_rotate %255 by %c46_i32 dim 1 : vector<2x256xf32>, i32 -> vector<2x256xf32>
    %c3_i32_171 = arith.constant 3 : i32
    %406 = vector.broadcast %c3_i32_171 : i32 to vector<1x256xi32>
    %407 = arith.cmpi sge, %7, %406 : vector<1x256xi32>
    %c14_i32 = arith.constant 14 : i32
    %408 = vector.broadcast %c14_i32 : i32 to vector<1x256xi32>
    %409 = arith.cmpi slt, %9, %408 : vector<1x256xi32>
    %410 = arith.andi %407, %409 : vector<1x256xi1>
    %cst_172 = arith.constant 0.000000e+00 : f32
    %411 = vector.shape_cast %410 : vector<1x256xi1> to vector<1x256xi1>
    %412 = vector.broadcast %411 : vector<1x256xi1> to vector<2x256xi1>
    %413 = vector.broadcast %cst_172 : f32 to vector<2x256xf32>
    %414 = arith.select %412, %405, %413 : vector<2x256xi1>, vector<2x256xf32>
    %c45_i32 = arith.constant 45 : i32
    %415 = tpu.dynamic_rotate %255 by %c45_i32 dim 1 : vector<2x256xf32>, i32 -> vector<2x256xf32>
    %c3_i32_173 = arith.constant 3 : i32
    %416 = vector.broadcast %c3_i32_173 : i32 to vector<1x256xi32>
    %417 = arith.cmpi sge, %7, %416 : vector<1x256xi32>
    %c13_i32 = arith.constant 13 : i32
    %418 = vector.broadcast %c13_i32 : i32 to vector<1x256xi32>
    %419 = arith.cmpi slt, %9, %418 : vector<1x256xi32>
    %420 = arith.andi %417, %419 : vector<1x256xi1>
    %cst_174 = arith.constant 0.000000e+00 : f32
    %421 = vector.shape_cast %420 : vector<1x256xi1> to vector<1x256xi1>
    %422 = vector.broadcast %421 : vector<1x256xi1> to vector<2x256xi1>
    %423 = vector.broadcast %cst_174 : f32 to vector<2x256xf32>
    %424 = arith.select %422, %415, %423 : vector<2x256xi1>, vector<2x256xf32>
    %c35_i32 = arith.constant 35 : i32
    %425 = tpu.dynamic_rotate %255 by %c35_i32 dim 1 : vector<2x256xf32>, i32 -> vector<2x256xf32>
    %c2_i32_175 = arith.constant 2 : i32
    %426 = vector.broadcast %c2_i32_175 : i32 to vector<1x256xi32>
    %427 = arith.cmpi sge, %7, %426 : vector<1x256xi32>
    %c3_i32_176 = arith.constant 3 : i32
    %428 = vector.broadcast %c3_i32_176 : i32 to vector<1x256xi32>
    %429 = arith.cmpi sge, %9, %428 : vector<1x256xi32>
    %430 = arith.andi %427, %429 : vector<1x256xi1>
    %cst_177 = arith.constant 0.000000e+00 : f32
    %431 = vector.shape_cast %430 : vector<1x256xi1> to vector<1x256xi1>
    %432 = vector.broadcast %431 : vector<1x256xi1> to vector<2x256xi1>
    %433 = vector.broadcast %cst_177 : f32 to vector<2x256xf32>
    %434 = arith.select %432, %425, %433 : vector<2x256xi1>, vector<2x256xf32>
    %c34_i32 = arith.constant 34 : i32
    %435 = tpu.dynamic_rotate %255 by %c34_i32 dim 1 : vector<2x256xf32>, i32 -> vector<2x256xf32>
    %c2_i32_178 = arith.constant 2 : i32
    %436 = vector.broadcast %c2_i32_178 : i32 to vector<1x256xi32>
    %437 = arith.cmpi sge, %7, %436 : vector<1x256xi32>
    %c2_i32_179 = arith.constant 2 : i32
    %438 = vector.broadcast %c2_i32_179 : i32 to vector<1x256xi32>
    %439 = arith.cmpi sge, %9, %438 : vector<1x256xi32>
    %440 = arith.andi %437, %439 : vector<1x256xi1>
    %cst_180 = arith.constant 0.000000e+00 : f32
    %441 = vector.shape_cast %440 : vector<1x256xi1> to vector<1x256xi1>
    %442 = vector.broadcast %441 : vector<1x256xi1> to vector<2x256xi1>
    %443 = vector.broadcast %cst_180 : f32 to vector<2x256xf32>
    %444 = arith.select %442, %435, %443 : vector<2x256xi1>, vector<2x256xf32>
    %c33_i32 = arith.constant 33 : i32
    %445 = tpu.dynamic_rotate %255 by %c33_i32 dim 1 : vector<2x256xf32>, i32 -> vector<2x256xf32>
    %c2_i32_181 = arith.constant 2 : i32
    %446 = vector.broadcast %c2_i32_181 : i32 to vector<1x256xi32>
    %447 = arith.cmpi sge, %7, %446 : vector<1x256xi32>
    %c1_i32_182 = arith.constant 1 : i32
    %448 = vector.broadcast %c1_i32_182 : i32 to vector<1x256xi32>
    %449 = arith.cmpi sge, %9, %448 : vector<1x256xi32>
    %450 = arith.andi %447, %449 : vector<1x256xi1>
    %cst_183 = arith.constant 0.000000e+00 : f32
    %451 = vector.shape_cast %450 : vector<1x256xi1> to vector<1x256xi1>
    %452 = vector.broadcast %451 : vector<1x256xi1> to vector<2x256xi1>
    %453 = vector.broadcast %cst_183 : f32 to vector<2x256xf32>
    %454 = arith.select %452, %445, %453 : vector<2x256xi1>, vector<2x256xf32>
    %c32_i32 = arith.constant 32 : i32
    %455 = tpu.dynamic_rotate %255 by %c32_i32 dim 1 : vector<2x256xf32>, i32 -> vector<2x256xf32>
    %c2_i32_184 = arith.constant 2 : i32
    %456 = vector.broadcast %c2_i32_184 : i32 to vector<1x256xi32>
    %457 = arith.cmpi sge, %7, %456 : vector<1x256xi32>
    %cst_185 = arith.constant 0.000000e+00 : f32
    %458 = vector.shape_cast %457 : vector<1x256xi1> to vector<1x256xi1>
    %459 = vector.broadcast %458 : vector<1x256xi1> to vector<2x256xi1>
    %460 = vector.broadcast %cst_185 : f32 to vector<2x256xf32>
    %461 = arith.select %459, %455, %460 : vector<2x256xi1>, vector<2x256xf32>
    %c31_i32 = arith.constant 31 : i32
    %462 = tpu.dynamic_rotate %255 by %c31_i32 dim 1 : vector<2x256xf32>, i32 -> vector<2x256xf32>
    %c2_i32_186 = arith.constant 2 : i32
    %463 = vector.broadcast %c2_i32_186 : i32 to vector<1x256xi32>
    %464 = arith.cmpi sge, %7, %463 : vector<1x256xi32>
    %c15_i32_187 = arith.constant 15 : i32
    %465 = vector.broadcast %c15_i32_187 : i32 to vector<1x256xi32>
    %466 = arith.cmpi slt, %9, %465 : vector<1x256xi32>
    %467 = arith.andi %464, %466 : vector<1x256xi1>
    %cst_188 = arith.constant 0.000000e+00 : f32
    %468 = vector.shape_cast %467 : vector<1x256xi1> to vector<1x256xi1>
    %469 = vector.broadcast %468 : vector<1x256xi1> to vector<2x256xi1>
    %470 = vector.broadcast %cst_188 : f32 to vector<2x256xf32>
    %471 = arith.select %469, %462, %470 : vector<2x256xi1>, vector<2x256xf32>
    %c30_i32 = arith.constant 30 : i32
    %472 = tpu.dynamic_rotate %255 by %c30_i32 dim 1 : vector<2x256xf32>, i32 -> vector<2x256xf32>
    %c2_i32_189 = arith.constant 2 : i32
    %473 = vector.broadcast %c2_i32_189 : i32 to vector<1x256xi32>
    %474 = arith.cmpi sge, %7, %473 : vector<1x256xi32>
    %c14_i32_190 = arith.constant 14 : i32
    %475 = vector.broadcast %c14_i32_190 : i32 to vector<1x256xi32>
    %476 = arith.cmpi slt, %9, %475 : vector<1x256xi32>
    %477 = arith.andi %474, %476 : vector<1x256xi1>
    %cst_191 = arith.constant 0.000000e+00 : f32
    %478 = vector.shape_cast %477 : vector<1x256xi1> to vector<1x256xi1>
    %479 = vector.broadcast %478 : vector<1x256xi1> to vector<2x256xi1>
    %480 = vector.broadcast %cst_191 : f32 to vector<2x256xf32>
    %481 = arith.select %479, %472, %480 : vector<2x256xi1>, vector<2x256xf32>
    %c29_i32 = arith.constant 29 : i32
    %482 = tpu.dynamic_rotate %255 by %c29_i32 dim 1 : vector<2x256xf32>, i32 -> vector<2x256xf32>
    %c2_i32_192 = arith.constant 2 : i32
    %483 = vector.broadcast %c2_i32_192 : i32 to vector<1x256xi32>
    %484 = arith.cmpi sge, %7, %483 : vector<1x256xi32>
    %c13_i32_193 = arith.constant 13 : i32
    %485 = vector.broadcast %c13_i32_193 : i32 to vector<1x256xi32>
    %486 = arith.cmpi slt, %9, %485 : vector<1x256xi32>
    %487 = arith.andi %484, %486 : vector<1x256xi1>
    %cst_194 = arith.constant 0.000000e+00 : f32
    %488 = vector.shape_cast %487 : vector<1x256xi1> to vector<1x256xi1>
    %489 = vector.broadcast %488 : vector<1x256xi1> to vector<2x256xi1>
    %490 = vector.broadcast %cst_194 : f32 to vector<2x256xf32>
    %491 = arith.select %489, %482, %490 : vector<2x256xi1>, vector<2x256xf32>
    %c19_i32 = arith.constant 19 : i32
    %492 = tpu.dynamic_rotate %255 by %c19_i32 dim 1 : vector<2x256xf32>, i32 -> vector<2x256xf32>
    %c1_i32_195 = arith.constant 1 : i32
    %493 = vector.broadcast %c1_i32_195 : i32 to vector<1x256xi32>
    %494 = arith.cmpi sge, %7, %493 : vector<1x256xi32>
    %c3_i32_196 = arith.constant 3 : i32
    %495 = vector.broadcast %c3_i32_196 : i32 to vector<1x256xi32>
    %496 = arith.cmpi sge, %9, %495 : vector<1x256xi32>
    %497 = arith.andi %494, %496 : vector<1x256xi1>
    %cst_197 = arith.constant 0.000000e+00 : f32
    %498 = vector.shape_cast %497 : vector<1x256xi1> to vector<1x256xi1>
    %499 = vector.broadcast %498 : vector<1x256xi1> to vector<2x256xi1>
    %500 = vector.broadcast %cst_197 : f32 to vector<2x256xf32>
    %501 = arith.select %499, %492, %500 : vector<2x256xi1>, vector<2x256xf32>
    %c18_i32 = arith.constant 18 : i32
    %502 = tpu.dynamic_rotate %255 by %c18_i32 dim 1 : vector<2x256xf32>, i32 -> vector<2x256xf32>
    %c1_i32_198 = arith.constant 1 : i32
    %503 = vector.broadcast %c1_i32_198 : i32 to vector<1x256xi32>
    %504 = arith.cmpi sge, %7, %503 : vector<1x256xi32>
    %c2_i32_199 = arith.constant 2 : i32
    %505 = vector.broadcast %c2_i32_199 : i32 to vector<1x256xi32>
    %506 = arith.cmpi sge, %9, %505 : vector<1x256xi32>
    %507 = arith.andi %504, %506 : vector<1x256xi1>
    %cst_200 = arith.constant 0.000000e+00 : f32
    %508 = vector.shape_cast %507 : vector<1x256xi1> to vector<1x256xi1>
    %509 = vector.broadcast %508 : vector<1x256xi1> to vector<2x256xi1>
    %510 = vector.broadcast %cst_200 : f32 to vector<2x256xf32>
    %511 = arith.select %509, %502, %510 : vector<2x256xi1>, vector<2x256xf32>
    %c17_i32_201 = arith.constant 17 : i32
    %512 = tpu.dynamic_rotate %255 by %c17_i32_201 dim 1 : vector<2x256xf32>, i32 -> vector<2x256xf32>
    %cst_202 = arith.constant 0.000000e+00 : f32
    %513 = vector.shape_cast %15 : vector<1x256xi1> to vector<1x256xi1>
    %514 = vector.broadcast %513 : vector<1x256xi1> to vector<2x256xi1>
    %515 = vector.broadcast %cst_202 : f32 to vector<2x256xf32>
    %516 = arith.select %514, %512, %515 : vector<2x256xi1>, vector<2x256xf32>
    %c16_i32_203 = arith.constant 16 : i32
    %517 = tpu.dynamic_rotate %255 by %c16_i32_203 dim 1 : vector<2x256xf32>, i32 -> vector<2x256xf32>
    %cst_204 = arith.constant 0.000000e+00 : f32
    %518 = vector.shape_cast %22 : vector<1x256xi1> to vector<1x256xi1>
    %519 = vector.broadcast %518 : vector<1x256xi1> to vector<2x256xi1>
    %520 = vector.broadcast %cst_204 : f32 to vector<2x256xf32>
    %521 = arith.select %519, %517, %520 : vector<2x256xi1>, vector<2x256xf32>
    %c15_i32_205 = arith.constant 15 : i32
    %522 = tpu.dynamic_rotate %255 by %c15_i32_205 dim 1 : vector<2x256xf32>, i32 -> vector<2x256xf32>
    %cst_206 = arith.constant 0.000000e+00 : f32
    %523 = vector.shape_cast %32 : vector<1x256xi1> to vector<1x256xi1>
    %524 = vector.broadcast %523 : vector<1x256xi1> to vector<2x256xi1>
    %525 = vector.broadcast %cst_206 : f32 to vector<2x256xf32>
    %526 = arith.select %524, %522, %525 : vector<2x256xi1>, vector<2x256xf32>
    %c14_i32_207 = arith.constant 14 : i32
    %527 = tpu.dynamic_rotate %255 by %c14_i32_207 dim 1 : vector<2x256xf32>, i32 -> vector<2x256xf32>
    %c1_i32_208 = arith.constant 1 : i32
    %528 = vector.broadcast %c1_i32_208 : i32 to vector<1x256xi32>
    %529 = arith.cmpi sge, %7, %528 : vector<1x256xi32>
    %c14_i32_209 = arith.constant 14 : i32
    %530 = vector.broadcast %c14_i32_209 : i32 to vector<1x256xi32>
    %531 = arith.cmpi slt, %9, %530 : vector<1x256xi32>
    %532 = arith.andi %529, %531 : vector<1x256xi1>
    %cst_210 = arith.constant 0.000000e+00 : f32
    %533 = vector.shape_cast %532 : vector<1x256xi1> to vector<1x256xi1>
    %534 = vector.broadcast %533 : vector<1x256xi1> to vector<2x256xi1>
    %535 = vector.broadcast %cst_210 : f32 to vector<2x256xf32>
    %536 = arith.select %534, %527, %535 : vector<2x256xi1>, vector<2x256xf32>
    %c13_i32_211 = arith.constant 13 : i32
    %537 = tpu.dynamic_rotate %255 by %c13_i32_211 dim 1 : vector<2x256xf32>, i32 -> vector<2x256xf32>
    %c1_i32_212 = arith.constant 1 : i32
    %538 = vector.broadcast %c1_i32_212 : i32 to vector<1x256xi32>
    %539 = arith.cmpi sge, %7, %538 : vector<1x256xi32>
    %c13_i32_213 = arith.constant 13 : i32
    %540 = vector.broadcast %c13_i32_213 : i32 to vector<1x256xi32>
    %541 = arith.cmpi slt, %9, %540 : vector<1x256xi32>
    %542 = arith.andi %539, %541 : vector<1x256xi1>
    %cst_214 = arith.constant 0.000000e+00 : f32
    %543 = vector.shape_cast %542 : vector<1x256xi1> to vector<1x256xi1>
    %544 = vector.broadcast %543 : vector<1x256xi1> to vector<2x256xi1>
    %545 = vector.broadcast %cst_214 : f32 to vector<2x256xf32>
    %546 = arith.select %544, %537, %545 : vector<2x256xi1>, vector<2x256xf32>
    %c3_i32_215 = arith.constant 3 : i32
    %547 = tpu.dynamic_rotate %255 by %c3_i32_215 dim 1 : vector<2x256xf32>, i32 -> vector<2x256xf32>
    %c3_i32_216 = arith.constant 3 : i32
    %548 = vector.broadcast %c3_i32_216 : i32 to vector<1x256xi32>
    %549 = arith.cmpi sge, %9, %548 : vector<1x256xi32>
    %cst_217 = arith.constant 0.000000e+00 : f32
    %550 = vector.shape_cast %549 : vector<1x256xi1> to vector<1x256xi1>
    %551 = vector.broadcast %550 : vector<1x256xi1> to vector<2x256xi1>
    %552 = vector.broadcast %cst_217 : f32 to vector<2x256xf32>
    %553 = arith.select %551, %547, %552 : vector<2x256xi1>, vector<2x256xf32>
    %c2_i32_218 = arith.constant 2 : i32
    %554 = tpu.dynamic_rotate %255 by %c2_i32_218 dim 1 : vector<2x256xf32>, i32 -> vector<2x256xf32>
    %c2_i32_219 = arith.constant 2 : i32
    %555 = vector.broadcast %c2_i32_219 : i32 to vector<1x256xi32>
    %556 = arith.cmpi sge, %9, %555 : vector<1x256xi32>
    %cst_220 = arith.constant 0.000000e+00 : f32
    %557 = vector.shape_cast %556 : vector<1x256xi1> to vector<1x256xi1>
    %558 = vector.broadcast %557 : vector<1x256xi1> to vector<2x256xi1>
    %559 = vector.broadcast %cst_220 : f32 to vector<2x256xf32>
    %560 = arith.select %558, %554, %559 : vector<2x256xi1>, vector<2x256xf32>
    %c1_i32_221 = arith.constant 1 : i32
    %561 = tpu.dynamic_rotate %255 by %c1_i32_221 dim 1 : vector<2x256xf32>, i32 -> vector<2x256xf32>
    %cst_222 = arith.constant 0.000000e+00 : f32
    %562 = vector.shape_cast %39 : vector<1x256xi1> to vector<1x256xi1>
    %563 = vector.broadcast %562 : vector<1x256xi1> to vector<2x256xi1>
    %564 = vector.broadcast %cst_222 : f32 to vector<2x256xf32>
    %565 = arith.select %563, %561, %564 : vector<2x256xi1>, vector<2x256xf32>
    %c255_i32_223 = arith.constant 255 : i32
    %566 = tpu.dynamic_rotate %255 by %c255_i32_223 dim 1 : vector<2x256xf32>, i32 -> vector<2x256xf32>
    %cst_224 = arith.constant 0.000000e+00 : f32
    %567 = vector.shape_cast %46 : vector<1x256xi1> to vector<1x256xi1>
    %568 = vector.broadcast %567 : vector<1x256xi1> to vector<2x256xi1>
    %569 = vector.broadcast %cst_224 : f32 to vector<2x256xf32>
    %570 = arith.select %568, %566, %569 : vector<2x256xi1>, vector<2x256xf32>
    %c254_i32 = arith.constant 254 : i32
    %571 = tpu.dynamic_rotate %255 by %c254_i32 dim 1 : vector<2x256xf32>, i32 -> vector<2x256xf32>
    %c14_i32_225 = arith.constant 14 : i32
    %572 = vector.broadcast %c14_i32_225 : i32 to vector<1x256xi32>
    %573 = arith.cmpi slt, %9, %572 : vector<1x256xi32>
    %cst_226 = arith.constant 0.000000e+00 : f32
    %574 = vector.shape_cast %573 : vector<1x256xi1> to vector<1x256xi1>
    %575 = vector.broadcast %574 : vector<1x256xi1> to vector<2x256xi1>
    %576 = vector.broadcast %cst_226 : f32 to vector<2x256xf32>
    %577 = arith.select %575, %571, %576 : vector<2x256xi1>, vector<2x256xf32>
    %c253_i32 = arith.constant 253 : i32
    %578 = tpu.dynamic_rotate %255 by %c253_i32 dim 1 : vector<2x256xf32>, i32 -> vector<2x256xf32>
    %c13_i32_227 = arith.constant 13 : i32
    %579 = vector.broadcast %c13_i32_227 : i32 to vector<1x256xi32>
    %580 = arith.cmpi slt, %9, %579 : vector<1x256xi32>
    %cst_228 = arith.constant 0.000000e+00 : f32
    %581 = vector.shape_cast %580 : vector<1x256xi1> to vector<1x256xi1>
    %582 = vector.broadcast %581 : vector<1x256xi1> to vector<2x256xi1>
    %583 = vector.broadcast %cst_228 : f32 to vector<2x256xf32>
    %584 = arith.select %582, %578, %583 : vector<2x256xi1>, vector<2x256xf32>
    %c243_i32 = arith.constant 243 : i32
    %585 = tpu.dynamic_rotate %255 by %c243_i32 dim 1 : vector<2x256xf32>, i32 -> vector<2x256xf32>
    %c15_i32_229 = arith.constant 15 : i32
    %586 = vector.broadcast %c15_i32_229 : i32 to vector<1x256xi32>
    %587 = arith.cmpi slt, %7, %586 : vector<1x256xi32>
    %c3_i32_230 = arith.constant 3 : i32
    %588 = vector.broadcast %c3_i32_230 : i32 to vector<1x256xi32>
    %589 = arith.cmpi sge, %9, %588 : vector<1x256xi32>
    %590 = arith.andi %587, %589 : vector<1x256xi1>
    %cst_231 = arith.constant 0.000000e+00 : f32
    %591 = vector.shape_cast %590 : vector<1x256xi1> to vector<1x256xi1>
    %592 = vector.broadcast %591 : vector<1x256xi1> to vector<2x256xi1>
    %593 = vector.broadcast %cst_231 : f32 to vector<2x256xf32>
    %594 = arith.select %592, %585, %593 : vector<2x256xi1>, vector<2x256xf32>
    %c242_i32 = arith.constant 242 : i32
    %595 = tpu.dynamic_rotate %255 by %c242_i32 dim 1 : vector<2x256xf32>, i32 -> vector<2x256xf32>
    %c15_i32_232 = arith.constant 15 : i32
    %596 = vector.broadcast %c15_i32_232 : i32 to vector<1x256xi32>
    %597 = arith.cmpi slt, %7, %596 : vector<1x256xi32>
    %c2_i32_233 = arith.constant 2 : i32
    %598 = vector.broadcast %c2_i32_233 : i32 to vector<1x256xi32>
    %599 = arith.cmpi sge, %9, %598 : vector<1x256xi32>
    %600 = arith.andi %597, %599 : vector<1x256xi1>
    %cst_234 = arith.constant 0.000000e+00 : f32
    %601 = vector.shape_cast %600 : vector<1x256xi1> to vector<1x256xi1>
    %602 = vector.broadcast %601 : vector<1x256xi1> to vector<2x256xi1>
    %603 = vector.broadcast %cst_234 : f32 to vector<2x256xf32>
    %604 = arith.select %602, %595, %603 : vector<2x256xi1>, vector<2x256xf32>
    %c241_i32_235 = arith.constant 241 : i32
    %605 = tpu.dynamic_rotate %255 by %c241_i32_235 dim 1 : vector<2x256xf32>, i32 -> vector<2x256xf32>
    %cst_236 = arith.constant 0.000000e+00 : f32
    %606 = vector.shape_cast %56 : vector<1x256xi1> to vector<1x256xi1>
    %607 = vector.broadcast %606 : vector<1x256xi1> to vector<2x256xi1>
    %608 = vector.broadcast %cst_236 : f32 to vector<2x256xf32>
    %609 = arith.select %607, %605, %608 : vector<2x256xi1>, vector<2x256xf32>
    %c240_i32_237 = arith.constant 240 : i32
    %610 = tpu.dynamic_rotate %255 by %c240_i32_237 dim 1 : vector<2x256xf32>, i32 -> vector<2x256xf32>
    %cst_238 = arith.constant 0.000000e+00 : f32
    %611 = vector.shape_cast %63 : vector<1x256xi1> to vector<1x256xi1>
    %612 = vector.broadcast %611 : vector<1x256xi1> to vector<2x256xi1>
    %613 = vector.broadcast %cst_238 : f32 to vector<2x256xf32>
    %614 = arith.select %612, %610, %613 : vector<2x256xi1>, vector<2x256xf32>
    %c239_i32_239 = arith.constant 239 : i32
    %615 = tpu.dynamic_rotate %255 by %c239_i32_239 dim 1 : vector<2x256xf32>, i32 -> vector<2x256xf32>
    %cst_240 = arith.constant 0.000000e+00 : f32
    %616 = vector.shape_cast %73 : vector<1x256xi1> to vector<1x256xi1>
    %617 = vector.broadcast %616 : vector<1x256xi1> to vector<2x256xi1>
    %618 = vector.broadcast %cst_240 : f32 to vector<2x256xf32>
    %619 = arith.select %617, %615, %618 : vector<2x256xi1>, vector<2x256xf32>
    %c238_i32 = arith.constant 238 : i32
    %620 = tpu.dynamic_rotate %255 by %c238_i32 dim 1 : vector<2x256xf32>, i32 -> vector<2x256xf32>
    %c15_i32_241 = arith.constant 15 : i32
    %621 = vector.broadcast %c15_i32_241 : i32 to vector<1x256xi32>
    %622 = arith.cmpi slt, %7, %621 : vector<1x256xi32>
    %c14_i32_242 = arith.constant 14 : i32
    %623 = vector.broadcast %c14_i32_242 : i32 to vector<1x256xi32>
    %624 = arith.cmpi slt, %9, %623 : vector<1x256xi32>
    %625 = arith.andi %622, %624 : vector<1x256xi1>
    %cst_243 = arith.constant 0.000000e+00 : f32
    %626 = vector.shape_cast %625 : vector<1x256xi1> to vector<1x256xi1>
    %627 = vector.broadcast %626 : vector<1x256xi1> to vector<2x256xi1>
    %628 = vector.broadcast %cst_243 : f32 to vector<2x256xf32>
    %629 = arith.select %627, %620, %628 : vector<2x256xi1>, vector<2x256xf32>
    %c237_i32 = arith.constant 237 : i32
    %630 = tpu.dynamic_rotate %255 by %c237_i32 dim 1 : vector<2x256xf32>, i32 -> vector<2x256xf32>
    %c15_i32_244 = arith.constant 15 : i32
    %631 = vector.broadcast %c15_i32_244 : i32 to vector<1x256xi32>
    %632 = arith.cmpi slt, %7, %631 : vector<1x256xi32>
    %c13_i32_245 = arith.constant 13 : i32
    %633 = vector.broadcast %c13_i32_245 : i32 to vector<1x256xi32>
    %634 = arith.cmpi slt, %9, %633 : vector<1x256xi32>
    %635 = arith.andi %632, %634 : vector<1x256xi1>
    %cst_246 = arith.constant 0.000000e+00 : f32
    %636 = vector.shape_cast %635 : vector<1x256xi1> to vector<1x256xi1>
    %637 = vector.broadcast %636 : vector<1x256xi1> to vector<2x256xi1>
    %638 = vector.broadcast %cst_246 : f32 to vector<2x256xf32>
    %639 = arith.select %637, %630, %638 : vector<2x256xi1>, vector<2x256xf32>
    %c227_i32 = arith.constant 227 : i32
    %640 = tpu.dynamic_rotate %255 by %c227_i32 dim 1 : vector<2x256xf32>, i32 -> vector<2x256xf32>
    %c14_i32_247 = arith.constant 14 : i32
    %641 = vector.broadcast %c14_i32_247 : i32 to vector<1x256xi32>
    %642 = arith.cmpi slt, %7, %641 : vector<1x256xi32>
    %c3_i32_248 = arith.constant 3 : i32
    %643 = vector.broadcast %c3_i32_248 : i32 to vector<1x256xi32>
    %644 = arith.cmpi sge, %9, %643 : vector<1x256xi32>
    %645 = arith.andi %642, %644 : vector<1x256xi1>
    %cst_249 = arith.constant 0.000000e+00 : f32
    %646 = vector.shape_cast %645 : vector<1x256xi1> to vector<1x256xi1>
    %647 = vector.broadcast %646 : vector<1x256xi1> to vector<2x256xi1>
    %648 = vector.broadcast %cst_249 : f32 to vector<2x256xf32>
    %649 = arith.select %647, %640, %648 : vector<2x256xi1>, vector<2x256xf32>
    %c226_i32 = arith.constant 226 : i32
    %650 = tpu.dynamic_rotate %255 by %c226_i32 dim 1 : vector<2x256xf32>, i32 -> vector<2x256xf32>
    %c14_i32_250 = arith.constant 14 : i32
    %651 = vector.broadcast %c14_i32_250 : i32 to vector<1x256xi32>
    %652 = arith.cmpi slt, %7, %651 : vector<1x256xi32>
    %c2_i32_251 = arith.constant 2 : i32
    %653 = vector.broadcast %c2_i32_251 : i32 to vector<1x256xi32>
    %654 = arith.cmpi sge, %9, %653 : vector<1x256xi32>
    %655 = arith.andi %652, %654 : vector<1x256xi1>
    %cst_252 = arith.constant 0.000000e+00 : f32
    %656 = vector.shape_cast %655 : vector<1x256xi1> to vector<1x256xi1>
    %657 = vector.broadcast %656 : vector<1x256xi1> to vector<2x256xi1>
    %658 = vector.broadcast %cst_252 : f32 to vector<2x256xf32>
    %659 = arith.select %657, %650, %658 : vector<2x256xi1>, vector<2x256xf32>
    %c225_i32 = arith.constant 225 : i32
    %660 = tpu.dynamic_rotate %255 by %c225_i32 dim 1 : vector<2x256xf32>, i32 -> vector<2x256xf32>
    %c14_i32_253 = arith.constant 14 : i32
    %661 = vector.broadcast %c14_i32_253 : i32 to vector<1x256xi32>
    %662 = arith.cmpi slt, %7, %661 : vector<1x256xi32>
    %c1_i32_254 = arith.constant 1 : i32
    %663 = vector.broadcast %c1_i32_254 : i32 to vector<1x256xi32>
    %664 = arith.cmpi sge, %9, %663 : vector<1x256xi32>
    %665 = arith.andi %662, %664 : vector<1x256xi1>
    %cst_255 = arith.constant 0.000000e+00 : f32
    %666 = vector.shape_cast %665 : vector<1x256xi1> to vector<1x256xi1>
    %667 = vector.broadcast %666 : vector<1x256xi1> to vector<2x256xi1>
    %668 = vector.broadcast %cst_255 : f32 to vector<2x256xf32>
    %669 = arith.select %667, %660, %668 : vector<2x256xi1>, vector<2x256xf32>
    %c224_i32 = arith.constant 224 : i32
    %670 = tpu.dynamic_rotate %255 by %c224_i32 dim 1 : vector<2x256xf32>, i32 -> vector<2x256xf32>
    %c14_i32_256 = arith.constant 14 : i32
    %671 = vector.broadcast %c14_i32_256 : i32 to vector<1x256xi32>
    %672 = arith.cmpi slt, %7, %671 : vector<1x256xi32>
    %cst_257 = arith.constant 0.000000e+00 : f32
    %673 = vector.shape_cast %672 : vector<1x256xi1> to vector<1x256xi1>
    %674 = vector.broadcast %673 : vector<1x256xi1> to vector<2x256xi1>
    %675 = vector.broadcast %cst_257 : f32 to vector<2x256xf32>
    %676 = arith.select %674, %670, %675 : vector<2x256xi1>, vector<2x256xf32>
    %c223_i32 = arith.constant 223 : i32
    %677 = tpu.dynamic_rotate %255 by %c223_i32 dim 1 : vector<2x256xf32>, i32 -> vector<2x256xf32>
    %c14_i32_258 = arith.constant 14 : i32
    %678 = vector.broadcast %c14_i32_258 : i32 to vector<1x256xi32>
    %679 = arith.cmpi slt, %7, %678 : vector<1x256xi32>
    %c15_i32_259 = arith.constant 15 : i32
    %680 = vector.broadcast %c15_i32_259 : i32 to vector<1x256xi32>
    %681 = arith.cmpi slt, %9, %680 : vector<1x256xi32>
    %682 = arith.andi %679, %681 : vector<1x256xi1>
    %cst_260 = arith.constant 0.000000e+00 : f32
    %683 = vector.shape_cast %682 : vector<1x256xi1> to vector<1x256xi1>
    %684 = vector.broadcast %683 : vector<1x256xi1> to vector<2x256xi1>
    %685 = vector.broadcast %cst_260 : f32 to vector<2x256xf32>
    %686 = arith.select %684, %677, %685 : vector<2x256xi1>, vector<2x256xf32>
    %c222_i32 = arith.constant 222 : i32
    %687 = tpu.dynamic_rotate %255 by %c222_i32 dim 1 : vector<2x256xf32>, i32 -> vector<2x256xf32>
    %c14_i32_261 = arith.constant 14 : i32
    %688 = vector.broadcast %c14_i32_261 : i32 to vector<1x256xi32>
    %689 = arith.cmpi slt, %7, %688 : vector<1x256xi32>
    %c14_i32_262 = arith.constant 14 : i32
    %690 = vector.broadcast %c14_i32_262 : i32 to vector<1x256xi32>
    %691 = arith.cmpi slt, %9, %690 : vector<1x256xi32>
    %692 = arith.andi %689, %691 : vector<1x256xi1>
    %cst_263 = arith.constant 0.000000e+00 : f32
    %693 = vector.shape_cast %692 : vector<1x256xi1> to vector<1x256xi1>
    %694 = vector.broadcast %693 : vector<1x256xi1> to vector<2x256xi1>
    %695 = vector.broadcast %cst_263 : f32 to vector<2x256xf32>
    %696 = arith.select %694, %687, %695 : vector<2x256xi1>, vector<2x256xf32>
    %c221_i32 = arith.constant 221 : i32
    %697 = tpu.dynamic_rotate %255 by %c221_i32 dim 1 : vector<2x256xf32>, i32 -> vector<2x256xf32>
    %c14_i32_264 = arith.constant 14 : i32
    %698 = vector.broadcast %c14_i32_264 : i32 to vector<1x256xi32>
    %699 = arith.cmpi slt, %7, %698 : vector<1x256xi32>
    %c13_i32_265 = arith.constant 13 : i32
    %700 = vector.broadcast %c13_i32_265 : i32 to vector<1x256xi32>
    %701 = arith.cmpi slt, %9, %700 : vector<1x256xi32>
    %702 = arith.andi %699, %701 : vector<1x256xi1>
    %cst_266 = arith.constant 0.000000e+00 : f32
    %703 = vector.shape_cast %702 : vector<1x256xi1> to vector<1x256xi1>
    %704 = vector.broadcast %703 : vector<1x256xi1> to vector<2x256xi1>
    %705 = vector.broadcast %cst_266 : f32 to vector<2x256xf32>
    %706 = arith.select %704, %697, %705 : vector<2x256xi1>, vector<2x256xf32>
    %c211_i32 = arith.constant 211 : i32
    %707 = tpu.dynamic_rotate %255 by %c211_i32 dim 1 : vector<2x256xf32>, i32 -> vector<2x256xf32>
    %c13_i32_267 = arith.constant 13 : i32
    %708 = vector.broadcast %c13_i32_267 : i32 to vector<1x256xi32>
    %709 = arith.cmpi slt, %7, %708 : vector<1x256xi32>
    %c3_i32_268 = arith.constant 3 : i32
    %710 = vector.broadcast %c3_i32_268 : i32 to vector<1x256xi32>
    %711 = arith.cmpi sge, %9, %710 : vector<1x256xi32>
    %712 = arith.andi %709, %711 : vector<1x256xi1>
    %cst_269 = arith.constant 0.000000e+00 : f32
    %713 = vector.shape_cast %712 : vector<1x256xi1> to vector<1x256xi1>
    %714 = vector.broadcast %713 : vector<1x256xi1> to vector<2x256xi1>
    %715 = vector.broadcast %cst_269 : f32 to vector<2x256xf32>
    %716 = arith.select %714, %707, %715 : vector<2x256xi1>, vector<2x256xf32>
    %c210_i32 = arith.constant 210 : i32
    %717 = tpu.dynamic_rotate %255 by %c210_i32 dim 1 : vector<2x256xf32>, i32 -> vector<2x256xf32>
    %c13_i32_270 = arith.constant 13 : i32
    %718 = vector.broadcast %c13_i32_270 : i32 to vector<1x256xi32>
    %719 = arith.cmpi slt, %7, %718 : vector<1x256xi32>
    %c2_i32_271 = arith.constant 2 : i32
    %720 = vector.broadcast %c2_i32_271 : i32 to vector<1x256xi32>
    %721 = arith.cmpi sge, %9, %720 : vector<1x256xi32>
    %722 = arith.andi %719, %721 : vector<1x256xi1>
    %cst_272 = arith.constant 0.000000e+00 : f32
    %723 = vector.shape_cast %722 : vector<1x256xi1> to vector<1x256xi1>
    %724 = vector.broadcast %723 : vector<1x256xi1> to vector<2x256xi1>
    %725 = vector.broadcast %cst_272 : f32 to vector<2x256xf32>
    %726 = arith.select %724, %717, %725 : vector<2x256xi1>, vector<2x256xf32>
    %c209_i32 = arith.constant 209 : i32
    %727 = tpu.dynamic_rotate %255 by %c209_i32 dim 1 : vector<2x256xf32>, i32 -> vector<2x256xf32>
    %c13_i32_273 = arith.constant 13 : i32
    %728 = vector.broadcast %c13_i32_273 : i32 to vector<1x256xi32>
    %729 = arith.cmpi slt, %7, %728 : vector<1x256xi32>
    %c1_i32_274 = arith.constant 1 : i32
    %730 = vector.broadcast %c1_i32_274 : i32 to vector<1x256xi32>
    %731 = arith.cmpi sge, %9, %730 : vector<1x256xi32>
    %732 = arith.andi %729, %731 : vector<1x256xi1>
    %cst_275 = arith.constant 0.000000e+00 : f32
    %733 = vector.shape_cast %732 : vector<1x256xi1> to vector<1x256xi1>
    %734 = vector.broadcast %733 : vector<1x256xi1> to vector<2x256xi1>
    %735 = vector.broadcast %cst_275 : f32 to vector<2x256xf32>
    %736 = arith.select %734, %727, %735 : vector<2x256xi1>, vector<2x256xf32>
    %c208_i32 = arith.constant 208 : i32
    %737 = tpu.dynamic_rotate %255 by %c208_i32 dim 1 : vector<2x256xf32>, i32 -> vector<2x256xf32>
    %c13_i32_276 = arith.constant 13 : i32
    %738 = vector.broadcast %c13_i32_276 : i32 to vector<1x256xi32>
    %739 = arith.cmpi slt, %7, %738 : vector<1x256xi32>
    %cst_277 = arith.constant 0.000000e+00 : f32
    %740 = vector.shape_cast %739 : vector<1x256xi1> to vector<1x256xi1>
    %741 = vector.broadcast %740 : vector<1x256xi1> to vector<2x256xi1>
    %742 = vector.broadcast %cst_277 : f32 to vector<2x256xf32>
    %743 = arith.select %741, %737, %742 : vector<2x256xi1>, vector<2x256xf32>
    %c207_i32 = arith.constant 207 : i32
    %744 = tpu.dynamic_rotate %255 by %c207_i32 dim 1 : vector<2x256xf32>, i32 -> vector<2x256xf32>
    %c13_i32_278 = arith.constant 13 : i32
    %745 = vector.broadcast %c13_i32_278 : i32 to vector<1x256xi32>
    %746 = arith.cmpi slt, %7, %745 : vector<1x256xi32>
    %c15_i32_279 = arith.constant 15 : i32
    %747 = vector.broadcast %c15_i32_279 : i32 to vector<1x256xi32>
    %748 = arith.cmpi slt, %9, %747 : vector<1x256xi32>
    %749 = arith.andi %746, %748 : vector<1x256xi1>
    %cst_280 = arith.constant 0.000000e+00 : f32
    %750 = vector.shape_cast %749 : vector<1x256xi1> to vector<1x256xi1>
    %751 = vector.broadcast %750 : vector<1x256xi1> to vector<2x256xi1>
    %752 = vector.broadcast %cst_280 : f32 to vector<2x256xf32>
    %753 = arith.select %751, %744, %752 : vector<2x256xi1>, vector<2x256xf32>
    %c206_i32 = arith.constant 206 : i32
    %754 = tpu.dynamic_rotate %255 by %c206_i32 dim 1 : vector<2x256xf32>, i32 -> vector<2x256xf32>
    %c13_i32_281 = arith.constant 13 : i32
    %755 = vector.broadcast %c13_i32_281 : i32 to vector<1x256xi32>
    %756 = arith.cmpi slt, %7, %755 : vector<1x256xi32>
    %c14_i32_282 = arith.constant 14 : i32
    %757 = vector.broadcast %c14_i32_282 : i32 to vector<1x256xi32>
    %758 = arith.cmpi slt, %9, %757 : vector<1x256xi32>
    %759 = arith.andi %756, %758 : vector<1x256xi1>
    %cst_283 = arith.constant 0.000000e+00 : f32
    %760 = vector.shape_cast %759 : vector<1x256xi1> to vector<1x256xi1>
    %761 = vector.broadcast %760 : vector<1x256xi1> to vector<2x256xi1>
    %762 = vector.broadcast %cst_283 : f32 to vector<2x256xf32>
    %763 = arith.select %761, %754, %762 : vector<2x256xi1>, vector<2x256xf32>
    %c205_i32 = arith.constant 205 : i32
    %764 = tpu.dynamic_rotate %255 by %c205_i32 dim 1 : vector<2x256xf32>, i32 -> vector<2x256xf32>
    %c13_i32_284 = arith.constant 13 : i32
    %765 = vector.broadcast %c13_i32_284 : i32 to vector<1x256xi32>
    %766 = arith.cmpi slt, %7, %765 : vector<1x256xi32>
    %c13_i32_285 = arith.constant 13 : i32
    %767 = vector.broadcast %c13_i32_285 : i32 to vector<1x256xi32>
    %768 = arith.cmpi slt, %9, %767 : vector<1x256xi32>
    %769 = arith.andi %766, %768 : vector<1x256xi1>
    %cst_286 = arith.constant 0.000000e+00 : f32
    %770 = vector.shape_cast %769 : vector<1x256xi1> to vector<1x256xi1>
    %771 = vector.broadcast %770 : vector<1x256xi1> to vector<2x256xi1>
    %772 = vector.broadcast %cst_286 : f32 to vector<2x256xf32>
    %773 = arith.select %771, %764, %772 : vector<2x256xi1>, vector<2x256xf32>
    %774 = tpu.concatenate %367, %377, %387, %394, %404, %414, %424, %434, %444, %454, %461, %471, %481, %491, %501, %511 in 0 : vector<2x256xf32>, vector<2x256xf32>, vector<2x256xf32>, vector<2x256xf32>, vector<2x256xf32>, vector<2x256xf32>, vector<2x256xf32>, vector<2x256xf32>, vector<2x256xf32>, vector<2x256xf32>, vector<2x256xf32>, vector<2x256xf32>, vector<2x256xf32>, vector<2x256xf32>, vector<2x256xf32>, vector<2x256xf32> -> vector<32x256xf32>
    %775 = tpu.concatenate %516, %521, %526, %536, %546, %553, %560, %565, %255, %570, %577, %584, %594, %604, %609, %614 in 0 : vector<2x256xf32>, vector<2x256xf32>, vector<2x256xf32>, vector<2x256xf32>, vector<2x256xf32>, vector<2x256xf32>, vector<2x256xf32>, vector<2x256xf32>, vector<2x256xf32>, vector<2x256xf32>, vector<2x256xf32>, vector<2x256xf32>, vector<2x256xf32>, vector<2x256xf32>, vector<2x256xf32>, vector<2x256xf32> -> vector<32x256xf32>
    %776 = tpu.concatenate %619, %629, %639, %649, %659, %669, %676, %686, %696, %706, %716, %726, %736, %743, %753, %763 in 0 : vector<2x256xf32>, vector<2x256xf32>, vector<2x256xf32>, vector<2x256xf32>, vector<2x256xf32>, vector<2x256xf32>, vector<2x256xf32>, vector<2x256xf32>, vector<2x256xf32>, vector<2x256xf32>, vector<2x256xf32>, vector<2x256xf32>, vector<2x256xf32>, vector<2x256xf32>, vector<2x256xf32>, vector<2x256xf32> -> vector<32x256xf32>
    %777 = tpu.concatenate %774, %775, %776, %773 in 0 : vector<32x256xf32>, vector<32x256xf32>, vector<32x256xf32>, vector<2x256xf32> -> vector<98x256xf32>
    %c0_287 = arith.constant 0 : index
    %c0_288 = arith.constant 0 : index
    %778 = vector.load %arg23[%c0_287, %c0_288] : memref<1x98xf32, #tpu.memory_space<vmem>>, vector<1x98xf32>
    %cst_289 = arith.constant dense<0.000000e+00> : vector<1x256xf32>
    %779 = tpu.matmul %778, %777, %cst_289 {dimension_numbers = #tpu.dot_dimension_numbers<[1], [0], [0], [1], [0, 0, 1, 1], [], []>} : vector<1x98xf32>, vector<98x256xf32>, vector<1x256xf32> -> vector<1x256xf32>
    %c0_290 = arith.constant 0 : index
    %c0_291 = arith.constant 0 : index
    %780 = vector.load %arg24[%c0_290, %c0_291] : memref<1x1xf32, #tpu.memory_space<vmem>>, vector<1x1xf32>
    %781 = vector.broadcast %780 : vector<1x1xf32> to vector<1x256xf32>
    %782 = arith.addf %779, %781 : vector<1x256xf32>
    %783 = tpu.concatenate %301, %357, %782 in 0 : vector<1x256xf32>, vector<1x256xf32>, vector<1x256xf32> -> vector<3x256xf32>
    %c0_292 = arith.constant 0 : index
    %c0_293 = arith.constant 0 : index
    %784 = vector.load %arg25[%c0_292, %c0_293] : memref<1x3xf32, #tpu.memory_space<vmem>>, vector<1x3xf32>
    %cst_294 = arith.constant dense<0.000000e+00> : vector<1x256xf32>
    %785 = tpu.matmul %784, %783, %cst_294 {dimension_numbers = #tpu.dot_dimension_numbers<[1], [0], [0], [1], [0, 0, 1, 1], [], []>} : vector<1x3xf32>, vector<3x256xf32>, vector<1x256xf32> -> vector<1x256xf32>
    %c0_295 = arith.constant 0 : index
    %c0_296 = arith.constant 0 : index
    %786 = vector.load %arg26[%c0_295, %c0_296] : memref<1x1xf32, #tpu.memory_space<vmem>>, vector<1x1xf32>
    %787 = vector.broadcast %786 : vector<1x1xf32> to vector<1x256xf32>
    %788 = arith.addf %785, %787 : vector<1x256xf32>
    %cst_297 = arith.constant 0.000000e+00 : f32
    %789 = vector.broadcast %cst_297 : f32 to vector<1x256xf32>
    %790 = arith.subf %789, %788 : vector<1x256xf32>
    %791 = math.exp %790 : vector<1x256xf32>
    %cst_298 = arith.constant 1.000000e+00 : f32
    %792 = vector.broadcast %cst_298 : f32 to vector<1x256xf32>
    %793 = arith.addf %792, %791 : vector<1x256xf32>
    %794 = tpu.reciprocal %793 {approx = true} : vector<1x256xf32> -> vector<1x256xf32>
    %795 = vector.broadcast %794 : vector<1x256xf32> to vector<4x256xf32>
    %796 = arith.mulf %248, %795 : vector<4x256xf32>
    %797 = arith.addf %796, %4 : vector<4x256xf32>
    %c0_299 = arith.constant 0 : index
    %c0_300 = arith.constant 0 : index
    %c0_301 = arith.constant 0 : index
    %798 = vector.load %arg27[%c0_299, %c0_300, %c0_301] : memref<1x4x256xf32, #tpu.memory_space<vmem>>, vector<1x4x256xf32>
    %799 = vector.shape_cast %798 : vector<1x4x256xf32> to vector<4x256xf32>
    %800 = vector.shape_cast %797 : vector<4x256xf32> to vector<1x4x256xf32>
    tpu.vector_store %arg27[%c0_299, %c0_300, %c0_301], %800 {strides = array<i32>} : memref<1x4x256xf32, #tpu.memory_space<vmem>>, vector<1x4x256xf32>,
    return
  }
  func.func @transform_0(%arg0: i32) -> i32 {
    %c0_i32 = arith.constant 0 : i32
    %c0_i32_0 = arith.constant 0 : i32
    return %c0_i32 : i32
  }
  func.func @transform_1(%arg0: i32) -> (i32, i32, i32) {
    %c0_i32 = arith.constant 0 : i32
    %c0_i32_0 = arith.constant 0 : i32
    %c0_i32_1 = arith.constant 0 : i32
    return %arg0, %c0_i32, %c0_i32_0 : i32, i32, i32
  }
  func.func @transform_2(%arg0: i32) -> (i32, i32) {
    %c0_i32 = arith.constant 0 : i32
    %c0_i32_0 = arith.constant 0 : i32
    %c0_i32_1 = arith.constant 0 : i32
    return %c0_i32, %c0_i32_0 : i32, i32
  }
  func.func @transform_3(%arg0: i32) -> (i32, i32) {
    %c0_i32 = arith.constant 0 : i32
    %c0_i32_0 = arith.constant 0 : i32
    %c0_i32_1 = arith.constant 0 : i32
    return %c0_i32, %c0_i32_0 : i32, i32
  }
  func.func @transform_4(%arg0: i32) -> (i32, i32) {
    %c0_i32 = arith.constant 0 : i32
    %c0_i32_0 = arith.constant 0 : i32
    %c0_i32_1 = arith.constant 0 : i32
    return %c0_i32, %c0_i32_0 : i32, i32
  }
  func.func @transform_5(%arg0: i32) -> (i32, i32) {
    %c0_i32 = arith.constant 0 : i32
    %c0_i32_0 = arith.constant 0 : i32
    %c0_i32_1 = arith.constant 0 : i32
    return %c0_i32, %c0_i32_0 : i32, i32
  }
  func.func @transform_6(%arg0: i32) -> (i32, i32) {
    %c0_i32 = arith.constant 0 : i32
    %c0_i32_0 = arith.constant 0 : i32
    %c0_i32_1 = arith.constant 0 : i32
    return %c0_i32, %c0_i32_0 : i32, i32
  }
  func.func @transform_7(%arg0: i32) -> (i32, i32) {
    %c0_i32 = arith.constant 0 : i32
    %c0_i32_0 = arith.constant 0 : i32
    %c0_i32_1 = arith.constant 0 : i32
    return %c0_i32, %c0_i32_0 : i32, i32
  }
  func.func @transform_8(%arg0: i32) -> (i32, i32) {
    %c0_i32 = arith.constant 0 : i32
    %c0_i32_0 = arith.constant 0 : i32
    %c0_i32_1 = arith.constant 0 : i32
    return %c0_i32, %c0_i32_0 : i32, i32
  }
  func.func @transform_9(%arg0: i32) -> (i32, i32) {
    %c0_i32 = arith.constant 0 : i32
    %c0_i32_0 = arith.constant 0 : i32
    %c0_i32_1 = arith.constant 0 : i32
    return %c0_i32, %c0_i32_0 : i32, i32
  }
  func.func @transform_10(%arg0: i32) -> (i32, i32) {
    %c0_i32 = arith.constant 0 : i32
    %c0_i32_0 = arith.constant 0 : i32
    %c0_i32_1 = arith.constant 0 : i32
    return %c0_i32, %c0_i32_0 : i32, i32
  }
  func.func @transform_11(%arg0: i32) -> (i32, i32) {
    %c0_i32 = arith.constant 0 : i32
    %c0_i32_0 = arith.constant 0 : i32
    %c0_i32_1 = arith.constant 0 : i32
    return %c0_i32, %c0_i32_0 : i32, i32
  }
  func.func @transform_12(%arg0: i32) -> (i32, i32) {
    %c0_i32 = arith.constant 0 : i32
    %c0_i32_0 = arith.constant 0 : i32
    %c0_i32_1 = arith.constant 0 : i32
    return %c0_i32, %c0_i32_0 : i32, i32
  }
  func.func @transform_13(%arg0: i32) -> (i32, i32) {
    %c0_i32 = arith.constant 0 : i32
    %c0_i32_0 = arith.constant 0 : i32
    %c0_i32_1 = arith.constant 0 : i32
    return %c0_i32, %c0_i32_0 : i32, i32
  }
  func.func @transform_14(%arg0: i32) -> (i32, i32) {
    %c0_i32 = arith.constant 0 : i32
    %c0_i32_0 = arith.constant 0 : i32
    %c0_i32_1 = arith.constant 0 : i32
    return %c0_i32, %c0_i32_0 : i32, i32
  }
  func.func @transform_15(%arg0: i32) -> (i32, i32) {
    %c0_i32 = arith.constant 0 : i32
    %c0_i32_0 = arith.constant 0 : i32
    %c0_i32_1 = arith.constant 0 : i32
    return %c0_i32, %c0_i32_0 : i32, i32
  }
  func.func @transform_16(%arg0: i32) -> (i32, i32) {
    %c0_i32 = arith.constant 0 : i32
    %c0_i32_0 = arith.constant 0 : i32
    %c0_i32_1 = arith.constant 0 : i32
    return %c0_i32, %c0_i32_0 : i32, i32
  }
  func.func @transform_17(%arg0: i32) -> (i32, i32) {
    %c0_i32 = arith.constant 0 : i32
    %c0_i32_0 = arith.constant 0 : i32
    %c0_i32_1 = arith.constant 0 : i32
    return %c0_i32, %c0_i32_0 : i32, i32
  }
  func.func @transform_18(%arg0: i32) -> (i32, i32) {
    %c0_i32 = arith.constant 0 : i32
    %c0_i32_0 = arith.constant 0 : i32
    %c0_i32_1 = arith.constant 0 : i32
    return %c0_i32, %c0_i32_0 : i32, i32
  }
  func.func @transform_19(%arg0: i32) -> (i32, i32) {
    %c0_i32 = arith.constant 0 : i32
    %c0_i32_0 = arith.constant 0 : i32
    %c0_i32_1 = arith.constant 0 : i32
    return %c0_i32, %c0_i32_0 : i32, i32
  }
  func.func @transform_20(%arg0: i32) -> (i32, i32) {
    %c0_i32 = arith.constant 0 : i32
    %c0_i32_0 = arith.constant 0 : i32
    %c0_i32_1 = arith.constant 0 : i32
    return %c0_i32, %c0_i32_0 : i32, i32
  }
  func.func @transform_21(%arg0: i32) -> (i32, i32) {
    %c0_i32 = arith.constant 0 : i32
    %c0_i32_0 = arith.constant 0 : i32
    %c0_i32_1 = arith.constant 0 : i32
    return %c0_i32, %c0_i32_0 : i32, i32
  }
  func.func @transform_22(%arg0: i32) -> (i32, i32) {
    %c0_i32 = arith.constant 0 : i32
    %c0_i32_0 = arith.constant 0 : i32
    %c0_i32_1 = arith.constant 0 : i32
    return %c0_i32, %c0_i32_0 : i32, i32
  }
  func.func @transform_23(%arg0: i32) -> (i32, i32) {
    %c0_i32 = arith.constant 0 : i32
    %c0_i32_0 = arith.constant 0 : i32
    %c0_i32_1 = arith.constant 0 : i32
    return %c0_i32, %c0_i32_0 : i32, i32
  }
  func.func @transform_24(%arg0: i32) -> (i32, i32) {
    %c0_i32 = arith.constant 0 : i32
    %c0_i32_0 = arith.constant 0 : i32
    %c0_i32_1 = arith.constant 0 : i32
    return %c0_i32, %c0_i32_0 : i32, i32
  }
  func.func @transform_25(%arg0: i32) -> (i32, i32) {
    %c0_i32 = arith.constant 0 : i32
    %c0_i32_0 = arith.constant 0 : i32
    %c0_i32_1 = arith.constant 0 : i32
    return %c0_i32, %c0_i32_0 : i32, i32
  }
  func.func @transform_26(%arg0: i32) -> (i32, i32, i32) {
    %c0_i32 = arith.constant 0 : i32
    %c0_i32_0 = arith.constant 0 : i32
    %c0_i32_1 = arith.constant 0 : i32
    return %arg0, %c0_i32, %c0_i32_0 : i32, i32, i32
  }
}

</mosaic_0001>

<llo_original>
// kernel: msrab_forward.1
$region0: #{msrab_forward.1}
  #allocation0 [shape = 'u32[]', space=smem, size = 0x4, offset = 0x4, fixed_abs, tag = 'smem constant byte address 0x4 - core index']
  #allocation1 [shape = 'u32[144,128]{1,0:T(1,128)}', space=vmem, size = 0x12000, scoped, tag = 'internal scratch']
  #allocation2 [shape = 'f32[1,1]{1,0:T(1,128)S(1)}', space=vmem, size = 0x200, scoped, tag = 'scoped memory for msrab_forward.1']
  #allocation3 [shape = 'f32[1,1]{1,0:T(1,128)S(1)}', space=vmem, size = 0x200, scoped, tag = 'scoped memory for msrab_forward.1']
  #allocation4 [shape = 'f32[1,1]{1,0:T(1,128)S(1)}', space=vmem, size = 0x200, scoped, tag = 'scoped memory for msrab_forward.1']
  #allocation5 [shape = 'f32[1,1]{1,0:T(1,128)S(1)}', space=vmem, size = 0x200, scoped, tag = 'scoped memory for msrab_forward.1']
  %s0 = inlined_call_operand.vmem [shape: f32[3], index: 0, kind: input, shape index: {}]
  %s1 = inlined_call_operand.vmem [shape: f32[2,4,256], index: 1, kind: input, shape index: {}]
  %s2 = inlined_call_operand.vmem [shape: f32[4,36], index: 2, kind: input, shape index: {}]
  %s3 = inlined_call_operand.vmem [shape: f32[4,1], index: 3, kind: input, shape index: {}]
  %s4 = inlined_call_operand.vmem [shape: f32[4,36], index: 4, kind: input, shape index: {}]
  %s5 = inlined_call_operand.vmem [shape: f32[4,1], index: 5, kind: input, shape index: {}]
  %s6 = inlined_call_operand.vmem [shape: f32[4,36], index: 6, kind: input, shape index: {}]
  %s7 = inlined_call_operand.vmem [shape: f32[4,1], index: 7, kind: input, shape index: {}]
  %s8 = inlined_call_operand.vmem [shape: f32[8,72], index: 8, kind: input, shape index: {}]
  %s9 = inlined_call_operand.vmem [shape: f32[8,1], index: 9, kind: input, shape index: {}]
  %s10 = inlined_call_operand.vmem [shape: f32[8,72], index: 10, kind: input, shape index: {}]
  %s11 = inlined_call_operand.vmem [shape: f32[8,1], index: 11, kind: input, shape index: {}]
  %s12 = inlined_call_operand.vmem [shape: f32[8,72], index: 12, kind: input, shape index: {}]
  %s13 = inlined_call_operand.vmem [shape: f32[8,1], index: 13, kind: input, shape index: {}]
  %s14 = inlined_call_operand.vmem [shape: f32[4,16], index: 14, kind: input, shape index: {}]
  %s15 = inlined_call_operand.vmem [shape: f32[4,1], index: 15, kind: input, shape index: {}]
  %s16 = inlined_call_operand.vmem [shape: f32[1,18], index: 16, kind: input, shape index: {}]
  %s17 = inlined_call_operand.<no memory space> [shape: f32[1,1], index: 17, kind: input, shape index: {}]
  %s18 = inlined_call_operand.vmem [shape: f32[2,18], index: 18, kind: input, shape index: {}]
  %s19 = inlined_call_operand.vmem [shape: f32[2,1], index: 19, kind: input, shape index: {}]
  %s20 = inlined_call_operand.vmem [shape: f32[1,18], index: 20, kind: input, shape index: {}]
  %s21 = inlined_call_operand.<no memory space> [shape: f32[1,1], index: 21, kind: input, shape index: {}]
  %s22 = inlined_call_operand.vmem [shape: f32[1,98], index: 22, kind: input, shape index: {}]
  %s23 = inlined_call_operand.<no memory space> [shape: f32[1,1], index: 23, kind: input, shape index: {}]
  %s24 = inlined_call_operand.vmem [shape: f32[1,3], index: 24, kind: input, shape index: {}]
  %s25 = inlined_call_operand.<no memory space> [shape: f32[1,1], index: 25, kind: input, shape index: {}]
  %s26 = inlined_call_operand.vmem [shape: f32[2,4,256], index: 26, kind: output, shape index: {}]
  %s27 = sld [smem:[#allocation0]]
  $region141: #{msrab_forward.1} parent=0
    _
  %s29 = ssub.s32 1, %s27
  %s30 = scalar_select 0, %s29, %s27
  %v31 = vstv %s17
  %32 = vst [vmem:[#allocation2] sm:$0x1] %v31
  %v33 = vstv %s21
  %34 = vst [vmem:[#allocation3] sm:$0x1] %v33
  %v35 = vstv %s23
  %36 = vst [vmem:[#allocation4] sm:$0x1] %v35
  %v37 = vstv %s25
  %38 = vst [vmem:[#allocation5] sm:$0x1] %v37
  $region1: #{msrab_forward.1} parent=0
    #allocation6 [shape = 'u8[512]{0}', space=smem, size = 0x200, scoped, tag = 'input window, operand 0, single buffered']
    #allocation7 [shape = 's32[2]{0}', space=sflag, size = 0x8, scoped, tag = 'scoped memory for msrab_forward.1']
    %39 = vsyncpa [#allocation7], 0
    loop: start=0, step=1, limit=4
    $region2: #{msrab_forward.1} parent=1 // loop_pre_header
      _
    $region3: #{msrab_forward.1} parent=1 // loop_header
      %s41 = sphi 0, %s45
      %p42 = scmp.ge.s32.totalorder %s41, 4
      %s49 = sphi 0, %s49
      %s51 = sphi 0, %s49
      %s52 = sphi 0, %s51
      %s66 = sphi 0, %s52
      %s72 = sphi 0, %s74
      %s75 = sphi 0, %s72
      %s76 = sphi 0, %s75
      %s92 = sphi 0, %s76
      %s96 = sphi 0, %s96
      %s98 = sphi 0, %s96
      %s99 = sphi 0, %s98
      %s113 = sphi 0, %s99
      %s117 = sphi 0, %s117
      %s119 = sphi 0, %s117
      %s120 = sphi 0, %s119
      %s134 = sphi 0, %s120
      %s138 = sphi 0, %s138
      %s140 = sphi 0, %s138
      %s141 = sphi 0, %s140
      %s155 = sphi 0, %s141
      %s159 = sphi 0, %s159
      %s161 = sphi 0, %s159
      %s162 = sphi 0, %s161
      %s176 = sphi 0, %s162
      %s180 = sphi 0, %s180
      %s182 = sphi 0, %s180
      %s183 = sphi 0, %s182
      %s197 = sphi 0, %s183
      %s201 = sphi 0, %s201
      %s203 = sphi 0, %s201
      %s204 = sphi 0, %s203
      %s218 = sphi 0, %s204
      %s222 = sphi 0, %s222
      %s224 = sphi 0, %s222
      %s225 = sphi 0, %s224
      %s239 = sphi 0, %s225
      %s243 = sphi 0, %s243
      %s245 = sphi 0, %s243
      %s246 = sphi 0, %s245
      %s260 = sphi 0, %s246
      %s264 = sphi 0, %s264
      %s266 = sphi 0, %s264
      %s267 = sphi 0, %s266
      %s281 = sphi 0, %s267
      %s285 = sphi 0, %s285
      %s287 = sphi 0, %s285
      %s288 = sphi 0, %s287
      %s302 = sphi 0, %s288
      %s306 = sphi 0, %s306
      %s308 = sphi 0, %s306
      %s309 = sphi 0, %s308
      %s323 = sphi 0, %s309
      %s327 = sphi 0, %s327
      %s329 = sphi 0, %s327
      %s330 = sphi 0, %s329
      %s344 = sphi 0, %s330
      %s348 = sphi 0, %s348
      %s350 = sphi 0, %s348
      %s351 = sphi 0, %s350
      %s365 = sphi 0, %s351
      %s369 = sphi 0, %s369
      %s371 = sphi 0, %s369
      %s372 = sphi 0, %s371
      %s386 = sphi 0, %s372
      %s390 = sphi 0, %s390
      %s392 = sphi 0, %s390
      %s393 = sphi 0, %s392
      %s407 = sphi 0, %s393
      %s411 = sphi 0, %s411
      %s413 = sphi 0, %s411
      %s414 = sphi 0, %s413
      %s428 = sphi 0, %s414
      %s432 = sphi 0, %s432
      %s434 = sphi 0, %s432
      %s435 = sphi 0, %s434
      %s449 = sphi 0, %s435
      %s453 = sphi 0, %s453
      %s455 = sphi 0, %s453
      %s456 = sphi 0, %s455
      %s470 = sphi 0, %s456
      %s474 = sphi 0, %s474
      %s476 = sphi 0, %s474
      %s477 = sphi 0, %s476
      %s491 = sphi 0, %s477
      %s495 = sphi 0, %s495
      %s497 = sphi 0, %s495
      %s498 = sphi 0, %s497
      %s512 = sphi 0, %s498
      %s516 = sphi 0, %s516
      %s518 = sphi 0, %s516
      %s519 = sphi 0, %s518
      %s533 = sphi 0, %s519
      %s537 = sphi 0, %s537
      %s539 = sphi 0, %s537
      %s540 = sphi 0, %s539
      %s554 = sphi 0, %s540
      %s558 = sphi 0, %s558
      %s560 = sphi 0, %s558
      %s561 = sphi 0, %s560
      %s575 = sphi 0, %s561
      %s579 = sphi 0, %s579
      %s581 = sphi 0, %s579
      %s582 = sphi 0, %s581
      %s596 = sphi 0, %s582
      %s602 = sphi 0, %s604
      %s605 = sphi 0, %s602
      %s606 = sphi 0, %s605
      %s622 = sphi 0, %s606
    $region4: #{msrab_forward.1} parent=1 // loop_header_branch
      %44 = sbr.rel (%p42) target = $region8
    $region5: #{msrab_forward.1} parent=1 // loop_body
      %s46 = ssub.s32 %s41, 1
      %s47 = ssub.s32 %s41, 2
      %s48 = sadd.s32 %s41, 1
      %s50 = sadd.s32 %s49, 1
      %p53 = scmp.eq.s32.totalorder %s41, 1
      %p54 = scmp.ne.s32.totalorder %s49, %s51
      %p55 = scmp.eq.s32.totalorder %s41, 0
      %p56 = por %p54, %p55
      %p57 = scmp.ne.s32.totalorder %s49, %s51
      %p58 = scmp.eq.s32.totalorder %s46, 1
      %p59 = por %p57, %p58
      %p60 = scmp.ne.s32.totalorder %s51, %s52
      %p61 = scmp.eq.s32.totalorder %s46, 0
      %p62 = por %p60, %p61
      %p63 = scmp.ne.s32.totalorder %s51, %s52
      %p64 = scmp.eq.s32.totalorder %s47, 1
      %p65 = por %p63, %p64
      %p67 = scmp.ne.s32.totalorder %s52, %s66
      %p68 = scmp.eq.s32.totalorder %s47, 0
      %p69 = por %p67, %p68
      %s70 = ssub.s32 %s41, %s48
      %p71 = scmp.eq.s32.totalorder %s70, 0
      %s73 = sadd.s32 %s72, 1
      %s74 = scalar_select %p71, %s72, %s73
      %p77 = pneg %p71
      %p78 = scmp.eq.s32.totalorder %s41, 1
      %p79 = por %p77, %p78
      %p80 = scmp.ne.s32.totalorder %s72, %s75
      %p81 = scmp.eq.s32.totalorder %s41, 0
      %p82 = por %p80, %p81
      %p83 = scmp.ne.s32.totalorder %s72, %s75
      %p84 = scmp.eq.s32.totalorder %s46, 1
      %p85 = por %p83, %p84
      %p86 = scmp.ne.s32.totalorder %s75, %s76
      %p87 = scmp.eq.s32.totalorder %s46, 0
      %p88 = por %p86, %p87
      %p89 = scmp.ne.s32.totalorder %s75, %s76
      %p90 = scmp.eq.s32.totalorder %s47, 1
      %p91 = por %p89, %p90
      %p93 = scmp.ne.s32.totalorder %s76, %s92
      %p94 = scmp.eq.s32.totalorder %s47, 0
      %p95 = por %p93, %p94
      %s97 = sadd.s32 %s96, 1
      %p100 = scmp.eq.s32.totalorder %s41, 1
      %p101 = scmp.ne.s32.totalorder %s96, %s98
      %p102 = scmp.eq.s32.totalorder %s41, 0
      %p103 = por %p101, %p102
      %p104 = scmp.ne.s32.totalorder %s96, %s98
      %p105 = scmp.eq.s32.totalorder %s46, 1
      %p106 = por %p104, %p105
      %p107 = scmp.ne.s32.totalorder %s98, %s99
      %p108 = scmp.eq.s32.totalorder %s46, 0
      %p109 = por %p107, %p108
      %p110 = scmp.ne.s32.totalorder %s98, %s99
      %p111 = scmp.eq.s32.totalorder %s47, 1
      %p112 = por %p110, %p111
      %p114 = scmp.ne.s32.totalorder %s99, %s113
      %p115 = scmp.eq.s32.totalorder %s47, 0
      %p116 = por %p114, %p115
      %s118 = sadd.s32 %s117, 1
      %p121 = scmp.eq.s32.totalorder %s41, 1
      %p122 = scmp.ne.s32.totalorder %s117, %s119
      %p123 = scmp.eq.s32.totalorder %s41, 0
      %p124 = por %p122, %p123
      %p125 = scmp.ne.s32.totalorder %s117, %s119
      %p126 = scmp.eq.s32.totalorder %s46, 1
      %p127 = por %p125, %p126
      %p128 = scmp.ne.s32.totalorder %s119, %s120
      %p129 = scmp.eq.s32.totalorder %s46, 0
      %p130 = por %p128, %p129
      %p131 = scmp.ne.s32.totalorder %s119, %s120
      %p132 = scmp.eq.s32.totalorder %s47, 1
      %p133 = por %p131, %p132
      %p135 = scmp.ne.s32.totalorder %s120, %s134
      %p136 = scmp.eq.s32.totalorder %s47, 0
      %p137 = por %p135, %p136
      %s139 = sadd.s32 %s138, 1
      %p142 = scmp.eq.s32.totalorder %s41, 1
      %p143 = scmp.ne.s32.totalorder %s138, %s140
      %p144 = scmp.eq.s32.totalorder %s41, 0
      %p145 = por %p143, %p144
      %p146 = scmp.ne.s32.totalorder %s138, %s140
      %p147 = scmp.eq.s32.totalorder %s46, 1
      %p148 = por %p146, %p147
      %p149 = scmp.ne.s32.totalorder %s140, %s141
      %p150 = scmp.eq.s32.totalorder %s46, 0
      %p151 = por %p149, %p150
      %p152 = scmp.ne.s32.totalorder %s140, %s141
      %p153 = scmp.eq.s32.totalorder %s47, 1
      %p154 = por %p152, %p153
      %p156 = scmp.ne.s32.totalorder %s141, %s155
      %p157 = scmp.eq.s32.totalorder %s47, 0
      %p158 = por %p156, %p157
      %s160 = sadd.s32 %s159, 1
      %p163 = scmp.eq.s32.totalorder %s41, 1
      %p164 = scmp.ne.s32.totalorder %s159, %s161
      %p165 = scmp.eq.s32.totalorder %s41, 0
      %p166 = por %p164, %p165
      %p167 = scmp.ne.s32.totalorder %s159, %s161
      %p168 = scmp.eq.s32.totalorder %s46, 1
      %p169 = por %p167, %p168
      %p170 = scmp.ne.s32.totalorder %s161, %s162
      %p171 = scmp.eq.s32.totalorder %s46, 0
      %p172 = por %p170, %p171
      %p173 = scmp.ne.s32.totalorder %s161, %s162
      %p174 = scmp.eq.s32.totalorder %s47, 1
      %p175 = por %p173, %p174
      %p177 = scmp.ne.s32.totalorder %s162, %s176
      %p178 = scmp.eq.s32.totalorder %s47, 0
      %p179 = por %p177, %p178
      %s181 = sadd.s32 %s180, 1
      %p184 = scmp.eq.s32.totalorder %s41, 1
      %p185 = scmp.ne.s32.totalorder %s180, %s182
      %p186 = scmp.eq.s32.totalorder %s41, 0
      %p187 = por %p185, %p186
      %p188 = scmp.ne.s32.totalorder %s180, %s182
      %p189 = scmp.eq.s32.totalorder %s46, 1
      %p190 = por %p188, %p189
      %p191 = scmp.ne.s32.totalorder %s182, %s183
      %p192 = scmp.eq.s32.totalorder %s46, 0
      %p193 = por %p191, %p192
      %p194 = scmp.ne.s32.totalorder %s182, %s183
      %p195 = scmp.eq.s32.totalorder %s47, 1
      %p196 = por %p194, %p195
      %p198 = scmp.ne.s32.totalorder %s183, %s197
      %p199 = scmp.eq.s32.totalorder %s47, 0
      %p200 = por %p198, %p199
      %s202 = sadd.s32 %s201, 1
      %p205 = scmp.eq.s32.totalorder %s41, 1
      %p206 = scmp.ne.s32.totalorder %s201, %s203
      %p207 = scmp.eq.s32.totalorder %s41, 0
      %p208 = por %p206, %p207
      %p209 = scmp.ne.s32.totalorder %s201, %s203
      %p210 = scmp.eq.s32.totalorder %s46, 1
      %p211 = por %p209, %p210
      %p212 = scmp.ne.s32.totalorder %s203, %s204
      %p213 = scmp.eq.s32.totalorder %s46, 0
      %p214 = por %p212, %p213
      %p215 = scmp.ne.s32.totalorder %s203, %s204
      %p216 = scmp.eq.s32.totalorder %s47, 1
      %p217 = por %p215, %p216
      %p219 = scmp.ne.s32.totalorder %s204, %s218
      %p220 = scmp.eq.s32.totalorder %s47, 0
      %p221 = por %p219, %p220
      %s223 = sadd.s32 %s222, 1
      %p226 = scmp.eq.s32.totalorder %s41, 1
      %p227 = scmp.ne.s32.totalorder %s222, %s224
      %p228 = scmp.eq.s32.totalorder %s41, 0
      %p229 = por %p227, %p228
      %p230 = scmp.ne.s32.totalorder %s222, %s224
      %p231 = scmp.eq.s32.totalorder %s46, 1
      %p232 = por %p230, %p231
      %p233 = scmp.ne.s32.totalorder %s224, %s225
      %p234 = scmp.eq.s32.totalorder %s46, 0
      %p235 = por %p233, %p234
      %p236 = scmp.ne.s32.totalorder %s224, %s225
      %p237 = scmp.eq.s32.totalorder %s47, 1
      %p238 = por %p236, %p237
      %p240 = scmp.ne.s32.totalorder %s225, %s239
      %p241 = scmp.eq.s32.totalorder %s47, 0
      %p242 = por %p240, %p241
      %s244 = sadd.s32 %s243, 1
      %p247 = scmp.eq.s32.totalorder %s41, 1
      %p248 = scmp.ne.s32.totalorder %s243, %s245
      %p249 = scmp.eq.s32.totalorder %s41, 0
      %p250 = por %p248, %p249
      %p251 = scmp.ne.s32.totalorder %s243, %s245
      %p252 = scmp.eq.s32.totalorder %s46, 1
      %p253 = por %p251, %p252
      %p254 = scmp.ne.s32.totalorder %s245, %s246
      %p255 = scmp.eq.s32.totalorder %s46, 0
      %p256 = por %p254, %p255
      %p257 = scmp.ne.s32.totalorder %s245, %s246
      %p258 = scmp.eq.s32.totalorder %s47, 1
      %p259 = por %p257, %p258
      %p261 = scmp.ne.s32.totalorder %s246, %s260
      %p262 = scmp.eq.s32.totalorder %s47, 0
      %p263 = por %p261, %p262
      %s265 = sadd.s32 %s264, 1
      %p268 = scmp.eq.s32.totalorder %s41, 1
      %p269 = scmp.ne.s32.totalorder %s264, %s266
      %p270 = scmp.eq.s32.totalorder %s41, 0
      %p271 = por %p269, %p270
      %p272 = scmp.ne.s32.totalorder %s264, %s266
      %p273 = scmp.eq.s32.totalorder %s46, 1
      %p274 = por %p272, %p273
      %p275 = scmp.ne.s32.totalorder %s266, %s267
      %p276 = scmp.eq.s32.totalorder %s46, 0
      %p277 = por %p275, %p276
      %p278 = scmp.ne.s32.totalorder %s266, %s267
      %p279 = scmp.eq.s32.totalorder %s47, 1
      %p280 = por %p278, %p279
      %p282 = scmp.ne.s32.totalorder %s267, %s281
      %p283 = scmp.eq.s32.totalorder %s47, 0
      %p284 = por %p282, %p283
      %s286 = sadd.s32 %s285, 1
      %p289 = scmp.eq.s32.totalorder %s41, 1
      %p290 = scmp.ne.s32.totalorder %s285, %s287
      %p291 = scmp.eq.s32.totalorder %s41, 0
      %p292 = por %p290, %p291
      %p293 = scmp.ne.s32.totalorder %s285, %s287
      %p294 = scmp.eq.s32.totalorder %s46, 1
      %p295 = por %p293, %p294
      %p296 = scmp.ne.s32.totalorder %s287, %s288
      %p297 = scmp.eq.s32.totalorder %s46, 0
      %p298 = por %p296, %p297
      %p299 = scmp.ne.s32.totalorder %s287, %s288
      %p300 = scmp.eq.s32.totalorder %s47, 1
      %p301 = por %p299, %p300
      %p303 = scmp.ne.s32.totalorder %s288, %s302
      %p304 = scmp.eq.s32.totalorder %s47, 0
      %p305 = por %p303, %p304
      %s307 = sadd.s32 %s306, 1
      %p310 = scmp.eq.s32.totalorder %s41, 1
      %p311 = scmp.ne.s32.totalorder %s306, %s308
      %p312 = scmp.eq.s32.totalorder %s41, 0
      %p313 = por %p311, %p312
      %p314 = scmp.ne.s32.totalorder %s306, %s308
      %p315 = scmp.eq.s32.totalorder %s46, 1
      %p316 = por %p314, %p315
      %p317 = scmp.ne.s32.totalorder %s308, %s309
      %p318 = scmp.eq.s32.totalorder %s46, 0
      %p319 = por %p317, %p318
      %p320 = scmp.ne.s32.totalorder %s308, %s309
      %p321 = scmp.eq.s32.totalorder %s47, 1
      %p322 = por %p320, %p321
      %p324 = scmp.ne.s32.totalorder %s309, %s323
      %p325 = scmp.eq.s32.totalorder %s47, 0
      %p326 = por %p324, %p325
      %s328 = sadd.s32 %s327, 1
      %p331 = scmp.eq.s32.totalorder %s41, 1
      %p332 = scmp.ne.s32.totalorder %s327, %s329
      %p333 = scmp.eq.s32.totalorder %s41, 0
      %p334 = por %p332, %p333
      %p335 = scmp.ne.s32.totalorder %s327, %s329
      %p336 = scmp.eq.s32.totalorder %s46, 1
      %p337 = por %p335, %p336
      %p338 = scmp.ne.s32.totalorder %s329, %s330
      %p339 = scmp.eq.s32.totalorder %s46, 0
      %p340 = por %p338, %p339
      %p341 = scmp.ne.s32.totalorder %s329, %s330
      %p342 = scmp.eq.s32.totalorder %s47, 1
      %p343 = por %p341, %p342
      %p345 = scmp.ne.s32.totalorder %s330, %s344
      %p346 = scmp.eq.s32.totalorder %s47, 0
      %p347 = por %p345, %p346
      %s349 = sadd.s32 %s348, 1
      %p352 = scmp.eq.s32.totalorder %s41, 1
      %p353 = scmp.ne.s32.totalorder %s348, %s350
      %p354 = scmp.eq.s32.totalorder %s41, 0
      %p355 = por %p353, %p354
      %p356 = scmp.ne.s32.totalorder %s348, %s350
      %p357 = scmp.eq.s32.totalorder %s46, 1
      %p358 = por %p356, %p357
      %p359 = scmp.ne.s32.totalorder %s350, %s351
      %p360 = scmp.eq.s32.totalorder %s46, 0
      %p361 = por %p359, %p360
      %p362 = scmp.ne.s32.totalorder %s350, %s351
      %p363 = scmp.eq.s32.totalorder %s47, 1
      %p364 = por %p362, %p363
      %p366 = scmp.ne.s32.totalorder %s351, %s365
      %p367 = scmp.eq.s32.totalorder %s47, 0
      %p368 = por %p366, %p367
      %s370 = sadd.s32 %s369, 1
      %p373 = scmp.eq.s32.totalorder %s41, 1
      %p374 = scmp.ne.s32.totalorder %s369, %s371
      %p375 = scmp.eq.s32.totalorder %s41, 0
      %p376 = por %p374, %p375
      %p377 = scmp.ne.s32.totalorder %s369, %s371
      %p378 = scmp.eq.s32.totalorder %s46, 1
      %p379 = por %p377, %p378
      %p380 = scmp.ne.s32.totalorder %s371, %s372
      %p381 = scmp.eq.s32.totalorder %s46, 0
      %p382 = por %p380, %p381
      %p383 = scmp.ne.s32.totalorder %s371, %s372
      %p384 = scmp.eq.s32.totalorder %s47, 1
      %p385 = por %p383, %p384
      %p387 = scmp.ne.s32.totalorder %s372, %s386
      %p388 = scmp.eq.s32.totalorder %s47, 0
      %p389 = por %p387, %p388
      %s391 = sadd.s32 %s390, 1
      %p394 = scmp.eq.s32.totalorder %s41, 1
      %p395 = scmp.ne.s32.totalorder %s390, %s392
      %p396 = scmp.eq.s32.totalorder %s41, 0
      %p397 = por %p395, %p396
      %p398 = scmp.ne.s32.totalorder %s390, %s392
      %p399 = scmp.eq.s32.totalorder %s46, 1
      %p400 = por %p398, %p399
      %p401 = scmp.ne.s32.totalorder %s392, %s393
      %p402 = scmp.eq.s32.totalorder %s46, 0
      %p403 = por %p401, %p402
      %p404 = scmp.ne.s32.totalorder %s392, %s393
      %p405 = scmp.eq.s32.totalorder %s47, 1
      %p406 = por %p404, %p405
      %p408 = scmp.ne.s32.totalorder %s393, %s407
      %p409 = scmp.eq.s32.totalorder %s47, 0
      %p410 = por %p408, %p409
      %s412 = sadd.s32 %s411, 1
      %p415 = scmp.eq.s32.totalorder %s41, 1
      %p416 = scmp.ne.s32.totalorder %s411, %s413
      %p417 = scmp.eq.s32.totalorder %s41, 0
      %p418 = por %p416, %p417
      %p419 = scmp.ne.s32.totalorder %s411, %s413
      %p420 = scmp.eq.s32.totalorder %s46, 1
      %p421 = por %p419, %p420
      %p422 = scmp.ne.s32.totalorder %s413, %s414
      %p423 = scmp.eq.s32.totalorder %s46, 0
      %p424 = por %p422, %p423
      %p425 = scmp.ne.s32.totalorder %s413, %s414
      %p426 = scmp.eq.s32.totalorder %s47, 1
      %p427 = por %p425, %p426
      %p429 = scmp.ne.s32.totalorder %s414, %s428
      %p430 = scmp.eq.s32.totalorder %s47, 0
      %p431 = por %p429, %p430
      %s433 = sadd.s32 %s432, 1
      %p436 = scmp.eq.s32.totalorder %s41, 1
      %p437 = scmp.ne.s32.totalorder %s432, %s434
      %p438 = scmp.eq.s32.totalorder %s41, 0
      %p439 = por %p437, %p438
      %p440 = scmp.ne.s32.totalorder %s432, %s434
      %p441 = scmp.eq.s32.totalorder %s46, 1
      %p442 = por %p440, %p441
      %p443 = scmp.ne.s32.totalorder %s434, %s435
      %p444 = scmp.eq.s32.totalorder %s46, 0
      %p445 = por %p443, %p444
      %p446 = scmp.ne.s32.totalorder %s434, %s435
      %p447 = scmp.eq.s32.totalorder %s47, 1
      %p448 = por %p446, %p447
      %p450 = scmp.ne.s32.totalorder %s435, %s449
      %p451 = scmp.eq.s32.totalorder %s47, 0
      %p452 = por %p450, %p451
      %s454 = sadd.s32 %s453, 1
      %p457 = scmp.eq.s32.totalorder %s41, 1
      %p458 = scmp.ne.s32.totalorder %s453, %s455
      %p459 = scmp.eq.s32.totalorder %s41, 0
      %p460 = por %p458, %p459
      %p461 = scmp.ne.s32.totalorder %s453, %s455
      %p462 = scmp.eq.s32.totalorder %s46, 1
      %p463 = por %p461, %p462
      %p464 = scmp.ne.s32.totalorder %s455, %s456
      %p465 = scmp.eq.s32.totalorder %s46, 0
      %p466 = por %p464, %p465
      %p467 = scmp.ne.s32.totalorder %s455, %s456
      %p468 = scmp.eq.s32.totalorder %s47, 1
      %p469 = por %p467, %p468
      %p471 = scmp.ne.s32.totalorder %s456, %s470
      %p472 = scmp.eq.s32.totalorder %s47, 0
      %p473 = por %p471, %p472
      %s475 = sadd.s32 %s474, 1
      %p478 = scmp.eq.s32.totalorder %s41, 1
      %p479 = scmp.ne.s32.totalorder %s474, %s476
      %p480 = scmp.eq.s32.totalorder %s41, 0
      %p481 = por %p479, %p480
      %p482 = scmp.ne.s32.totalorder %s474, %s476
      %p483 = scmp.eq.s32.totalorder %s46, 1
      %p484 = por %p482, %p483
      %p485 = scmp.ne.s32.totalorder %s476, %s477
      %p486 = scmp.eq.s32.totalorder %s46, 0
      %p487 = por %p485, %p486
      %p488 = scmp.ne.s32.totalorder %s476, %s477
      %p489 = scmp.eq.s32.totalorder %s47, 1
      %p490 = por %p488, %p489
      %p492 = scmp.ne.s32.totalorder %s477, %s491
      %p493 = scmp.eq.s32.totalorder %s47, 0
      %p494 = por %p492, %p493
      %s496 = sadd.s32 %s495, 1
      %p499 = scmp.eq.s32.totalorder %s41, 1
      %p500 = scmp.ne.s32.totalorder %s495, %s497
      %p501 = scmp.eq.s32.totalorder %s41, 0
      %p502 = por %p500, %p501
      %p503 = scmp.ne.s32.totalorder %s495, %s497
      %p504 = scmp.eq.s32.totalorder %s46, 1
      %p505 = por %p503, %p504
      %p506 = scmp.ne.s32.totalorder %s497, %s498
      %p507 = scmp.eq.s32.totalorder %s46, 0
      %p508 = por %p506, %p507
      %p509 = scmp.ne.s32.totalorder %s497, %s498
      %p510 = scmp.eq.s32.totalorder %s47, 1
      %p511 = por %p509, %p510
      %p513 = scmp.ne.s32.totalorder %s498, %s512
      %p514 = scmp.eq.s32.totalorder %s47, 0
      %p515 = por %p513, %p514
      %s517 = sadd.s32 %s516, 1
      %p520 = scmp.eq.s32.totalorder %s41, 1
      %p521 = scmp.ne.s32.totalorder %s516, %s518
      %p522 = scmp.eq.s32.totalorder %s41, 0
      %p523 = por %p521, %p522
      %p524 = scmp.ne.s32.totalorder %s516, %s518
      %p525 = scmp.eq.s32.totalorder %s46, 1
      %p526 = por %p524, %p525
      %p527 = scmp.ne.s32.totalorder %s518, %s519
      %p528 = scmp.eq.s32.totalorder %s46, 0
      %p529 = por %p527, %p528
      %p530 = scmp.ne.s32.totalorder %s518, %s519
      %p531 = scmp.eq.s32.totalorder %s47, 1
      %p532 = por %p530, %p531
      %p534 = scmp.ne.s32.totalorder %s519, %s533
      %p535 = scmp.eq.s32.totalorder %s47, 0
      %p536 = por %p534, %p535
      %s538 = sadd.s32 %s537, 1
      %p541 = scmp.eq.s32.totalorder %s41, 1
      %p542 = scmp.ne.s32.totalorder %s537, %s539
      %p543 = scmp.eq.s32.totalorder %s41, 0
      %p544 = por %p542, %p543
      %p545 = scmp.ne.s32.totalorder %s537, %s539
      %p546 = scmp.eq.s32.totalorder %s46, 1
      %p547 = por %p545, %p546
      %p548 = scmp.ne.s32.totalorder %s539, %s540
      %p549 = scmp.eq.s32.totalorder %s46, 0
      %p550 = por %p548, %p549
      %p551 = scmp.ne.s32.totalorder %s539, %s540
      %p552 = scmp.eq.s32.totalorder %s47, 1
      %p553 = por %p551, %p552
      %p555 = scmp.ne.s32.totalorder %s540, %s554
      %p556 = scmp.eq.s32.totalorder %s47, 0
      %p557 = por %p555, %p556
      %s559 = sadd.s32 %s558, 1
      %p562 = scmp.eq.s32.totalorder %s41, 1
      %p563 = scmp.ne.s32.totalorder %s558, %s560
      %p564 = scmp.eq.s32.totalorder %s41, 0
      %p565 = por %p563, %p564
      %p566 = scmp.ne.s32.totalorder %s558, %s560
      %p567 = scmp.eq.s32.totalorder %s46, 1
      %p568 = por %p566, %p567
      %p569 = scmp.ne.s32.totalorder %s560, %s561
      %p570 = scmp.eq.s32.totalorder %s46, 0
      %p571 = por %p569, %p570
      %p572 = scmp.ne.s32.totalorder %s560, %s561
      %p573 = scmp.eq.s32.totalorder %s47, 1
      %p574 = por %p572, %p573
      %p576 = scmp.ne.s32.totalorder %s561, %s575
      %p577 = scmp.eq.s32.totalorder %s47, 0
      %p578 = por %p576, %p577
      %s580 = sadd.s32 %s579, 1
      %p583 = scmp.eq.s32.totalorder %s41, 1
      %p584 = scmp.ne.s32.totalorder %s579, %s581
      %p585 = scmp.eq.s32.totalorder %s41, 0
      %p586 = por %p584, %p585
      %p587 = scmp.ne.s32.totalorder %s579, %s581
      %p588 = scmp.eq.s32.totalorder %s46, 1
      %p589 = por %p587, %p588
      %p590 = scmp.ne.s32.totalorder %s581, %s582
      %p591 = scmp.eq.s32.totalorder %s46, 0
      %p592 = por %p590, %p591
      %p593 = scmp.ne.s32.totalorder %s581, %s582
      %p594 = scmp.eq.s32.totalorder %s47, 1
      %p595 = por %p593, %p594
      %p597 = scmp.ne.s32.totalorder %s582, %s596
      %p598 = scmp.eq.s32.totalorder %s47, 0
      %p599 = por %p597, %p598
      %s600 = ssub.s32 %s41, %s48
      %p601 = scmp.eq.s32.totalorder %s600, 0
      %s603 = sadd.s32 %s602, 1
      %s604 = scalar_select %p601, %s602, %s603
      %p607 = pneg %p601
      %p608 = scmp.eq.s32.totalorder %s41, 1
      %p609 = por %p607, %p608
      %p610 = scmp.ne.s32.totalorder %s602, %s605
      %p611 = scmp.eq.s32.totalorder %s41, 0
      %p612 = por %p610, %p611
      %p613 = scmp.ne.s32.totalorder %s602, %s605
      %p614 = scmp.eq.s32.totalorder %s46, 1
      %p615 = por %p613, %p614
      %p616 = scmp.ne.s32.totalorder %s605, %s606
      %p617 = scmp.eq.s32.totalorder %s46, 0
      %p618 = por %p616, %p617
      %p619 = scmp.ne.s32.totalorder %s605, %s606
      %p620 = scmp.eq.s32.totalorder %s47, 1
      %p621 = por %p619, %p620
      %p623 = scmp.ne.s32.totalorder %s606, %s622
      %p624 = scmp.eq.s32.totalorder %s47, 0
      %p625 = por %p623, %p624
      %p626 = scmp.le.s32.totalorder 1, %s41
      %p627 = scmp.lt.s32.totalorder %s41, 3
      %p628 = pnand %p626, %p627
      %p629 = pneg %p628
      // Predicated region
      $region9: #{msrab_forward.1} parent=5 // pred_check
        _
      $region10: #{msrab_forward.1} parent=5 // pred_check_branch
        %631 = sbr.rel (%p628) target = $region12
      $region11: #{msrab_forward.1} parent=5 // pred_region
        %s632 = ssub.s32 %s41, 1
        // Predicated region
        $region13: #{msrab_forward.1} parent=11 // pred_check
          %p633 = pneg %p62
        $region14: #{msrab_forward.1} parent=11 // pred_check_branch
          %635 = sbr.rel (%p633) target = $region16
        $region15: #{msrab_forward.1} parent=11 // pred_region
          %s637 = ssub.s32 16, 16
          %638 = vsyncadd [#allocation7], %s637
          %s640 = sshll.u32 %s0, 4
          %s641 = int_to_ptr.vmem [resolvable:$true] %s640
          %643 = dma.vmem_to_smem %s641, 16, [#allocation6], [#allocation7]
        $region16: #{msrab_forward.1} parent=11 // pred_fallthru
          _
        // Predicated region
        $region17: #{msrab_forward.1} parent=11 // pred_check
          %p644 = pneg %p109
        $region18: #{msrab_forward.1} parent=11 // pred_check_branch
          %646 = sbr.rel (%p644) target = $region20
        $region19: #{msrab_forward.1} parent=11 // pred_region
          _
        $region20: #{msrab_forward.1} parent=11 // pred_fallthru
          _
        // Predicated region
        $region21: #{msrab_forward.1} parent=11 // pred_check
          %p647 = pneg %p130
        $region22: #{msrab_forward.1} parent=11 // pred_check_branch
          %649 = sbr.rel (%p647) target = $region24
        $region23: #{msrab_forward.1} parent=11 // pred_region
          _
        $region24: #{msrab_forward.1} parent=11 // pred_fallthru
          _
        // Predicated region
        $region25: #{msrab_forward.1} parent=11 // pred_check
          %p650 = pneg %p151
        $region26: #{msrab_forward.1} parent=11 // pred_check_branch
          %652 = sbr.rel (%p650) target = $region28
        $region27: #{msrab_forward.1} parent=11 // pred_region
          _
        $region28: #{msrab_forward.1} parent=11 // pred_fallthru
          _
        // Predicated region
        $region29: #{msrab_forward.1} parent=11 // pred_check
          %p653 = pneg %p172
        $region30: #{msrab_forward.1} parent=11 // pred_check_branch
          %655 = sbr.rel (%p653) target = $region32
        $region31: #{msrab_forward.1} parent=11 // pred_region
          _
        $region32: #{msrab_forward.1} parent=11 // pred_fallthru
          _
        // Predicated region
        $region33: #{msrab_forward.1} parent=11 // pred_check
          %p656 = pneg %p193
        $region34: #{msrab_forward.1} parent=11 // pred_check_branch
          %658 = sbr.rel (%p656) target = $region36
        $region35: #{msrab_forward.1} parent=11 // pred_region
          _
        $region36: #{msrab_forward.1} parent=11 // pred_fallthru
          _
        // Predicated region
        $region37: #{msrab_forward.1} parent=11 // pred_check
          %p659 = pneg %p214
        $region38: #{msrab_forward.1} parent=11 // pred_check_branch
          %661 = sbr.rel (%p659) target = $region40
        $region39: #{msrab_forward.1} parent=11 // pred_region
          _
        $region40: #{msrab_forward.1} parent=11 // pred_fallthru
          _
        // Predicated region
        $region41: #{msrab_forward.1} parent=11 // pred_check
          %p662 = pneg %p235
        $region42: #{msrab_forward.1} parent=11 // pred_check_branch
          %664 = sbr.rel (%p662) target = $region44
        $region43: #{msrab_forward.1} parent=11 // pred_region
          _
        $region44: #{msrab_forward.1} parent=11 // pred_fallthru
          _
        // Predicated region
        $region45: #{msrab_forward.1} parent=11 // pred_check
          %p665 = pneg %p256
        $region46: #{msrab_forward.1} parent=11 // pred_check_branch
          %667 = sbr.rel (%p665) target = $region48
        $region47: #{msrab_forward.1} parent=11 // pred_region
          _
        $region48: #{msrab_forward.1} parent=11 // pred_fallthru
          _
        // Predicated region
        $region49: #{msrab_forward.1} parent=11 // pred_check
          %p668 = pneg %p277
        $region50: #{msrab_forward.1} parent=11 // pred_check_branch
          %670 = sbr.rel (%p668) target = $region52
        $region51: #{msrab_forward.1} parent=11 // pred_region
          _
        $region52: #{msrab_forward.1} parent=11 // pred_fallthru
          _
        // Predicated region
        $region53: #{msrab_forward.1} parent=11 // pred_check
          %p671 = pneg %p298
        $region54: #{msrab_forward.1} parent=11 // pred_check_branch
          %673 = sbr.rel (%p671) target = $region56
        $region55: #{msrab_forward.1} parent=11 // pred_region
          _
        $region56: #{msrab_forward.1} parent=11 // pred_fallthru
          _
        // Predicated region
        $region57: #{msrab_forward.1} parent=11 // pred_check
          %p674 = pneg %p319
        $region58: #{msrab_forward.1} parent=11 // pred_check_branch
          %676 = sbr.rel (%p674) target = $region60
        $region59: #{msrab_forward.1} parent=11 // pred_region
          _
        $region60: #{msrab_forward.1} parent=11 // pred_fallthru
          _
        // Predicated region
        $region61: #{msrab_forward.1} parent=11 // pred_check
          %p677 = pneg %p340
        $region62: #{msrab_forward.1} parent=11 // pred_check_branch
          %679 = sbr.rel (%p677) target = $region64
        $region63: #{msrab_forward.1} parent=11 // pred_region
          _
        $region64: #{msrab_forward.1} parent=11 // pred_fallthru
          _
        // Predicated region
        $region65: #{msrab_forward.1} parent=11 // pred_check
          %p680 = pneg %p361
        $region66: #{msrab_forward.1} parent=11 // pred_check_branch
          %682 = sbr.rel (%p680) target = $region68
        $region67: #{msrab_forward.1} parent=11 // pred_region
          _
        $region68: #{msrab_forward.1} parent=11 // pred_fallthru
          _
        // Predicated region
        $region69: #{msrab_forward.1} parent=11 // pred_check
          %p683 = pneg %p382
        $region70: #{msrab_forward.1} parent=11 // pred_check_branch
          %685 = sbr.rel (%p683) target = $region72
        $region71: #{msrab_forward.1} parent=11 // pred_region
          _
        $region72: #{msrab_forward.1} parent=11 // pred_fallthru
          _
        // Predicated region
        $region73: #{msrab_forward.1} parent=11 // pred_check
          %p686 = pneg %p403
        $region74: #{msrab_forward.1} parent=11 // pred_check_branch
          %688 = sbr.rel (%p686) target = $region76
        $region75: #{msrab_forward.1} parent=11 // pred_region
          _
        $region76: #{msrab_forward.1} parent=11 // pred_fallthru
          _
        // Predicated region
        $region77: #{msrab_forward.1} parent=11 // pred_check
          %p689 = pneg %p424
        $region78: #{msrab_forward.1} parent=11 // pred_check_branch
          %691 = sbr.rel (%p689) target = $region80
        $region79: #{msrab_forward.1} parent=11 // pred_region
          _
        $region80: #{msrab_forward.1} parent=11 // pred_fallthru
          _
        // Predicated region
        $region81: #{msrab_forward.1} parent=11 // pred_check
          %p692 = pneg %p445
        $region82: #{msrab_forward.1} parent=11 // pred_check_branch
          %694 = sbr.rel (%p692) target = $region84
        $region83: #{msrab_forward.1} parent=11 // pred_region
          _
        $region84: #{msrab_forward.1} parent=11 // pred_fallthru
          _
        // Predicated region
        $region85: #{msrab_forward.1} parent=11 // pred_check
          %p695 = pneg %p466
        $region86: #{msrab_forward.1} parent=11 // pred_check_branch
          %697 = sbr.rel (%p695) target = $region88
        $region87: #{msrab_forward.1} parent=11 // pred_region
          _
        $region88: #{msrab_forward.1} parent=11 // pred_fallthru
          _
        // Predicated region
        $region89: #{msrab_forward.1} parent=11 // pred_check
          %p698 = pneg %p487
        $region90: #{msrab_forward.1} parent=11 // pred_check_branch
          %700 = sbr.rel (%p698) target = $region92
        $region91: #{msrab_forward.1} parent=11 // pred_region
          _
        $region92: #{msrab_forward.1} parent=11 // pred_fallthru
          _
        // Predicated region
        $region93: #{msrab_forward.1} parent=11 // pred_check
          %p701 = pneg %p508
        $region94: #{msrab_forward.1} parent=11 // pred_check_branch
          %703 = sbr.rel (%p701) target = $region96
        $region95: #{msrab_forward.1} parent=11 // pred_region
          _
        $region96: #{msrab_forward.1} parent=11 // pred_fallthru
          _
        // Predicated region
        $region97: #{msrab_forward.1} parent=11 // pred_check
          %p704 = pneg %p529
        $region98: #{msrab_forward.1} parent=11 // pred_check_branch
          %706 = sbr.rel (%p704) target = $region100
        $region99: #{msrab_forward.1} parent=11 // pred_region
          _
        $region100: #{msrab_forward.1} parent=11 // pred_fallthru
          _
        // Predicated region
        $region101: #{msrab_forward.1} parent=11 // pred_check
          %p707 = pneg %p550
        $region102: #{msrab_forward.1} parent=11 // pred_check_branch
          %709 = sbr.rel (%p707) target = $region104
        $region103: #{msrab_forward.1} parent=11 // pred_region
          _
        $region104: #{msrab_forward.1} parent=11 // pred_fallthru
          _
        // Predicated region
        $region105: #{msrab_forward.1} parent=11 // pred_check
          %p710 = pneg %p571
        $region106: #{msrab_forward.1} parent=11 // pred_check_branch
          %712 = sbr.rel (%p710) target = $region108
        $region107: #{msrab_forward.1} parent=11 // pred_region
          _
        $region108: #{msrab_forward.1} parent=11 // pred_fallthru
          _
        // Predicated region
        $region109: #{msrab_forward.1} parent=11 // pred_check
          %p713 = pneg %p592
        $region110: #{msrab_forward.1} parent=11 // pred_check_branch
          %715 = sbr.rel (%p713) target = $region112
        $region111: #{msrab_forward.1} parent=11 // pred_region
          _
        $region112: #{msrab_forward.1} parent=11 // pred_fallthru
          _
      $region12: #{msrab_forward.1} parent=5 // pred_fallthru
        _
      %p716 = scmp.lt.s32.totalorder %s41, 2
      // Predicated region
      $region113: #{msrab_forward.1} parent=5 // pred_check
        %p717 = pneg %p716
      $region114: #{msrab_forward.1} parent=5 // pred_check_branch
        %719 = sbr.rel (%p717) target = $region116
      $region115: #{msrab_forward.1} parent=5 // pred_region
        // Predicated region
        $region117: #{msrab_forward.1} parent=115 // pred_check
          %p720 = pneg %p82
        $region118: #{msrab_forward.1} parent=115 // pred_check_branch
          %722 = sbr.rel (%p720) target = $region120
        $region119: #{msrab_forward.1} parent=115 // pred_region
          %p723 = scmp.lt.s32.totalorder %s41, 1
          %s724 = scalar_select %p723, %s41, 1
          %s725 = smul.addr %s724, 2
          %s726 = smul.addr %s725, 4
          %s727 = scalar_lea.vmem %s1, %s726
        $region120: #{msrab_forward.1} parent=115 // pred_fallthru
          _
      $region116: #{msrab_forward.1} parent=5 // pred_fallthru
        _
      %p728 = scmp.le.s32.totalorder 1, %s41
      %p729 = scmp.lt.s32.totalorder %s41, 3
      %p730 = pnand %p728, %p729
      %p731 = pneg %p730
      // Predicated region
      $region121: #{msrab_forward.1} parent=5 // pred_check
        _
      $region122: #{msrab_forward.1} parent=5 // pred_check_branch
        %733 = sbr.rel (%p730) target = $region124
      $region123: #{msrab_forward.1} parent=5 // pred_region
        %s734 = ssub.s32 %s41, 1
        // Predicated region
        $region125: #{msrab_forward.1} parent=123 // pred_check
          %p735 = pneg %p62
        $region126: #{msrab_forward.1} parent=123 // pred_check_branch
          %737 = sbr.rel (%p735) target = $region128
        $region127: #{msrab_forward.1} parent=123 // pred_region
          %738 = dma.done [#allocation7], 16
        $region128: #{msrab_forward.1} parent=123 // pred_fallthru
          _
        %739 = sfence
        %p740 = pneg %p62
        %p741 = pneg %p59
        %p742 = scmp.lt.s32.totalorder %s46, 1
        %s743 = scalar_select %p742, %s46, 1
        %s744 = smul.addr %s743, 2
        %s745 = smul.addr %s744, 4
        %s746 = scalar_lea.vmem %s1, %s745
        %p747 = pneg %p88
        %p748 = pneg %p85
        %p749 = pneg %p109
        %p750 = pneg %p106
        %p751 = pneg %p130
        %p752 = pneg %p127
        %p753 = pneg %p151
        %p754 = pneg %p148
        %p755 = pneg %p172
        %p756 = pneg %p169
        %p757 = pneg %p193
        %p758 = pneg %p190
        %p759 = pneg %p214
        %p760 = pneg %p211
        %p761 = pneg %p235
        %p762 = pneg %p232
        %p763 = pneg %p256
        %p764 = pneg %p253
        %p765 = pneg %p277
        %p766 = pneg %p274
        %p767 = pneg %p298
        %p768 = pneg %p295
        %p769 = pneg %p319
        %p770 = pneg %p316
        %p771 = pneg %p340
        %p772 = pneg %p337
        %p773 = pneg %p361
        %p774 = pneg %p358
        %p775 = pneg %p382
        %p776 = pneg %p379
        %p777 = pneg %p403
        %p778 = pneg %p400
        %p779 = pneg %p424
        %p780 = pneg %p421
        %p781 = pneg %p445
        %p782 = pneg %p442
        %p783 = pneg %p466
        %p784 = pneg %p463
        %p785 = pneg %p487
        %p786 = pneg %p484
        %p787 = pneg %p508
        %p788 = pneg %p505
        %p789 = pneg %p529
        %p790 = pneg %p526
        %p791 = pneg %p550
        %p792 = pneg %p547
        %p793 = pneg %p571
        %p794 = pneg %p568
        %p795 = pneg %p592
        %p796 = pneg %p589
        %p797 = pneg %p618
        %p798 = pneg %p615
        %p799 = scmp.lt.s32.totalorder %s46, 1
        %s800 = scalar_select %p799, %s46, 1
        %s801 = smul.addr %s800, 2
        %s802 = smul.addr %s801, 4
        %s803 = scalar_lea.vmem %s26, %s802
        %p804 = scmp.lt.s32.totalorder %s46, 1
        %s805 = scalar_select %p804, %s46, 1
        %s806 = smul.addr %s805, 2
        %s807 = smul.addr %s806, 4
        %s808 = scalar_lea.vmem %s1, %s807
        %p809 = scmp.lt.s32.totalorder %s46, 1
        %s810 = scalar_select %p809, %s46, 1
        %s811 = smul.addr %s810, 2
        %s812 = smul.addr %s811, 4
        %s813 = scalar_lea.vmem %s26, %s812
        %s814 = sld [smem:[#allocation6]]
        %s815 = sld [smem:[#allocation6 + $0x1]]
        %s816 = sld [smem:[#allocation6 + $0x2]]
        %v817 = vld [vmem:[%s808] sm:$0xff]
        %v818 = vlaneseq
        %v819 = vand.u32 %v818, 127
        %v820 = vadd.s32 %v819, 128
        %v821 = vshra.s32 %v819, 4
        %v822 = vshra.s32 %v820, 4
        %v823 = vand.u32 %v819, 15
        %v824 = vand.u32 %v820, 15
        %v826 = vcombine.high %v817, %v817
        %828 = vrot.lane.b32.xlu0 %v817, 17
        %v829 = vpop.permute.xlu0 %828
        %830 = vrot.lane.b32.xlu0 %v826, 17
        %v831 = vpop.permute.xlu0 %830
        %vm832 = vcmp.lt.s32.totalorder %v819, 17
        %v833 = vsel %vm832, %v829, %v831
        %v834 = vsel %vm832, %v831, %v829
        %vm835 = vcmp.ge.s32.totalorder %v821, 1
        %vm836 = vcmp.ge.s32.totalorder %v822, 1
        %vm837 = vcmp.ge.s32.totalorder %v823, 1
        %vm838 = vcmp.ge.s32.totalorder %v824, 1
        %vm839 = vmand %vm835, %vm837
        %vm840 = vmand %vm836, %vm838
        %v841 = vsel %vm839, 1, 0
        %v842 = vsel %vm840, 1, 0
        %vm843 = vcmp.eq.s32.totalorder %v841, 1
        %vm844 = vcmp.eq.s32.totalorder %v842, 1
        %v845 = vsel %vm843, %v834, 0.0
        %v846 = vsel %vm844, %v833, 0.0
        %847 = vrot.lane.b32.xlu0 %v817, 16
        %v848 = vpop.permute.xlu0 %847
        %849 = vrot.lane.b32.xlu0 %v826, 16
        %v850 = vpop.permute.xlu0 %849
        %vm851 = vcmp.lt.s32.totalorder %v819, 16
        %v852 = vsel %vm851, %v848, %v850
        %v853 = vsel %vm851, %v850, %v848
        %v854 = vsel %vm835, 1, 0
        %v855 = vsel %vm836, 1, 0
        %vm856 = vcmp.eq.s32.totalorder %v854, 1
        %vm857 = vcmp.eq.s32.totalorder %v855, 1
        %v858 = vsel %vm856, %v853, 0.0
        %v859 = vsel %vm857, %v852, 0.0
        %860 = vrot.lane.b32.xlu0 %v817, 15
        %v861 = vpop.permute.xlu0 %860
        %862 = vrot.lane.b32.xlu0 %v826, 15
        %v863 = vpop.permute.xlu0 %862
        %vm864 = vcmp.lt.s32.totalorder %v819, 15
        %v865 = vsel %vm864, %v861, %v863
        %v866 = vsel %vm864, %v863, %v861
        %vm867 = vcmp.lt.s32.totalorder %v823, 15
        %vm868 = vcmp.lt.s32.totalorder %v824, 15
        %vm869 = vmand %vm835, %vm867
        %vm870 = vmand %vm836, %vm868
        %v871 = vsel %vm869, 1, 0
        %v872 = vsel %vm870, 1, 0
        %vm873 = vcmp.eq.s32.totalorder %v871, 1
        %vm874 = vcmp.eq.s32.totalorder %v872, 1
        %v875 = vsel %vm873, %v866, 0.0
        %v876 = vsel %vm874, %v865, 0.0
        %877 = vrot.lane.b32.xlu0 %v817, 1
        %v878 = vpop.permute.xlu0 %877
        %879 = vrot.lane.b32.xlu0 %v826, 1
        %v880 = vpop.permute.xlu0 %879
        %vm881 = vcmp.lt.s32.totalorder %v819, 1
        %v882 = vsel %vm881, %v878, %v880
        %v883 = vsel %vm881, %v880, %v878
        %v884 = vsel %vm837, 1, 0
        %v885 = vsel %vm838, 1, 0
        %vm886 = vcmp.eq.s32.totalorder %v884, 1
        %vm887 = vcmp.eq.s32.totalorder %v885, 1
        %v888 = vsel %vm886, %v883, 0.0
        %v889 = vsel %vm887, %v882, 0.0
        %890 = vrot.lane.b32.xlu0 %v817, 127
        %v891 = vpop.permute.xlu0 %890
        %892 = vrot.lane.b32.xlu0 %v826, 127
        %v893 = vpop.permute.xlu0 %892
        %vm894 = vcmp.lt.s32.totalorder %v819, 127
        %v895 = vsel %vm894, %v891, %v893
        %v896 = vsel %vm894, %v893, %v891
        %v897 = vsel %vm867, 1, 0
        %v898 = vsel %vm868, 1, 0
        %vm899 = vcmp.eq.s32.totalorder %v897, 1
        %vm900 = vcmp.eq.s32.totalorder %v898, 1
        %v901 = vsel %vm899, %v895, 0.0
        %v902 = vsel %vm900, %v896, 0.0
        %903 = vrot.lane.b32.xlu0 %v817, 113
        %v904 = vpop.permute.xlu0 %903
        %905 = vrot.lane.b32.xlu0 %v826, 113
        %v906 = vpop.permute.xlu0 %905
        %vm907 = vcmp.lt.s32.totalorder %v819, 113
        %v908 = vsel %vm907, %v904, %v906
        %v909 = vsel %vm907, %v906, %v904
        %vm910 = vcmp.lt.s32.totalorder %v821, 15
        %vm911 = vcmp.lt.s32.totalorder %v822, 15
        %vm912 = vmand %vm910, %vm837
        %vm913 = vmand %vm911, %vm838
        %v914 = vsel %vm912, 1, 0
        %v915 = vsel %vm913, 1, 0
        %vm916 = vcmp.eq.s32.totalorder %v914, 1
        %vm917 = vcmp.eq.s32.totalorder %v915, 1
        %v918 = vsel %vm916, %v908, 0.0
        %v919 = vsel %vm917, %v909, 0.0
        %920 = vrot.lane.b32.xlu0 %v817, 112
        %v921 = vpop.permute.xlu0 %920
        %922 = vrot.lane.b32.xlu0 %v826, 112
        %v923 = vpop.permute.xlu0 %922
        %vm924 = vcmp.lt.s32.totalorder %v819, 112
        %v925 = vsel %vm924, %v921, %v923
        %v926 = vsel %vm924, %v923, %v921
        %v927 = vsel %vm910, 1, 0
        %v928 = vsel %vm911, 1, 0
        %vm929 = vcmp.eq.s32.totalorder %v927, 1
        %vm930 = vcmp.eq.s32.totalorder %v928, 1
        %v931 = vsel %vm929, %v925, 0.0
        %v932 = vsel %vm930, %v926, 0.0
        %933 = vrot.lane.b32.xlu0 %v817, 111
        %v934 = vpop.permute.xlu0 %933
        %935 = vrot.lane.b32.xlu0 %v826, 111
        %v936 = vpop.permute.xlu0 %935
        %vm937 = vcmp.lt.s32.totalorder %v819, 111
        %v938 = vsel %vm937, %v934, %v936
        %v939 = vsel %vm937, %v936, %v934
        %vm940 = vmand %vm910, %vm867
        %vm941 = vmand %vm911, %vm868
        %v942 = vsel %vm940, 1, 0
        %v943 = vsel %vm941, 1, 0
        %vm944 = vcmp.eq.s32.totalorder %v942, 1
        %vm945 = vcmp.eq.s32.totalorder %v943, 1
        %v946 = vsel %vm944, %v938, 0.0
        %v947 = vsel %vm945, %v939, 0.0
        %v950 = vrot.slane %v858, 4
        %v951 = vrot.slane %v859, 4
        %v956 = vrot.slane %v888, 4
        %v957 = vrot.slane %v889, 4
        %v962 = vrot.slane %v901, 4
        %v963 = vrot.slane %v902, 4
        %v968 = vrot.slane %v931, 4
        %v969 = vrot.slane %v932, 4
        %vm972 = vcmask 1043456
        %v973 = vsel %vm972, %v845, %v950
        %v974 = vsel %vm972, %v846, %v951
        %v975 = vsel %vm972, %v875, %v956
        %v976 = vsel %vm972, %v876, %v957
        %v977 = vsel %vm972, %v817, %v962
        %v978 = vsel %vm972, %v826, %v963
        %v979 = vsel %vm972, %v918, %v968
        %v980 = vsel %vm972, %v919, %v969
        %v981 = vld [vmem:[%s2] sm:$0xf]
        %v982 = vld [vmem:[%s3] sm:$0xf]
        %984 = vset.pattern.permute.xlu0 0
        %985 = vperm.xlu0 %984, %v982
        %v986 = vpop.permute.xlu0 %985
        %vm988 = vcmask 293888
        %v990 = vsel %vm988, %v981, 0
        %v993 = vsel %vm972, %v946, 0
        %v996 = vsel %vm972, %v947, 0
        %998 = vmatprep.subr.mxu0 0.0
        %999 = vmatpush1.msra.mxu0 0.0
        %1000 = vmatprep.subr.mxu0 0.0
        %1001 = vmatpush1.msra.mxu0 0.0
        %1002 = vmatprep.subr.mxu0 0.0
        %1003 = vmatpush1.msra.mxu0 0.0
        %1004 = vmatprep.subr.mxu0 0.0
        %1005 = vmatpush1.msra.mxu0 0.0
        %1006 = vmatprep.subr.mxu0 0.0
        %1007 = vmatpush1.msra.mxu0 0.0
        %1008 = vmatprep.subr.mxu0 0.0
        %1009 = vmatpush1.msra.mxu0 0.0
        %1010 = vmatprep.subr.mxu0 0.0
        %1011 = vmatpush1.msra.mxu0 0.0
        %1012 = vmatprep.subr.mxu0 0.0
        %1013 = vmatpush1.msra.mxu0 0.0
        %1014 = vmatprep.subr.mxu0 0.0
        %1015 = vmatpush1.msra.mxu0 0.0
        %1016 = vmatprep.subr.mxu0 0.0
        %1017 = vmatpush1.msra.mxu0 0.0
        %1018 = vmatprep.subr.mxu0 0.0
        %1019 = vmatpush1.msra.mxu0 0.0
        %1020 = vmatprep.subr.mxu0 %v996
        %1021 = vmatpush1.msra.mxu0 %v993
        %1022 = vmatprep.subr.mxu0 %v980
        %1023 = vmatpush1.msra.mxu0 %v979
        %1024 = vmatprep.subr.mxu0 %v978
        %1025 = vmatpush1.msra.mxu0 %v977
        %1026 = vmatprep.subr.mxu0 %v976
        %1027 = vmatpush1.msra.mxu0 %v975
        %1028 = vmatprep.subr.mxu0 %v974
        %1029 = vmatpush1.msra.mxu0 %v973
        %1030 = vmatprep.subr.mxu0 0.0
        %1031 = vmatpush2.msra.mxu0 0.0
        %1032 = vmatprep.subr.mxu0 0.0
        %1033 = vmatpush2.msra.mxu0 0.0
        %1034 = vmatprep.subr.mxu0 0.0
        %1035 = vmatpush2.msra.mxu0 0.0
        %1036 = vmatprep.subr.mxu0 0.0
        %1037 = vmatpush2.msra.mxu0 0.0
        %1038 = vmatprep.subr.mxu0 0.0
        %1039 = vmatpush2.msra.mxu0 0.0
        %1040 = vmatprep.subr.mxu0 0.0
        %1041 = vmatpush2.msra.mxu0 0.0
        %1042 = vmatprep.subr.mxu0 0.0
        %1043 = vmatpush2.msra.mxu0 0.0
        %1044 = vmatprep.subr.mxu0 0.0
        %1045 = vmatpush2.msra.mxu0 0.0
        %1046 = vmatprep.subr.mxu0 0.0
        %1047 = vmatpush2.msra.mxu0 0.0
        %1048 = vmatprep.subr.mxu0 0.0
        %1049 = vmatpush2.msra.mxu0 0.0
        %1050 = vmatprep.subr.mxu0 0.0
        %1051 = vmatpush2.msra.mxu0 0.0
        %1052 = vmatprep.subr.mxu0 0.0
        %1053 = vmatpush2.msra.mxu0 0.0
        %1054 = vmatprep.subr.mxu0 0.0
        %1055 = vmatpush2.msra.mxu0 0.0
        %1056 = vmatprep.subr.mxu0 0.0
        %1057 = vmatpush2.msra.mxu0 0.0
        %1058 = vmatprep.subr.mxu0 0.0
        %1059 = vmatpush2.msra.mxu0 0.0
        %1060 = vmatprep.subr.mxu0 0.0
        %1061 = vmatpush2.msra.mxu0 0.0
        %1062 = vmatprep.mubr.f32.mxu0 0.0
        %1063 = vmatmul.mubr.f32.gmra.mxu0 %v990
        %v1064 = vpop.f32.mrf.mxu0
        %v1065 = vadd.f32 %v986, %v1064
        %v1066 = vpop.f32.mrf.mxu0
        %v1067 = vadd.f32 %v986, %v1066
        %1068 = vdwg.mxu0
        %v1069 = vld [vmem:[%s4] sm:$0xf]
        %v1070 = vld [vmem:[%s5] sm:$0xf]
        %1072 = vset.pattern.permute.xlu0 0
        %1073 = vperm.xlu0 %1072, %v1070
        %v1074 = vpop.permute.xlu0 %1073
        %v1077 = vsel %vm988, %v1069, 0
        %1079 = vmatprep.subr.mxu0 0.0
        %1080 = vmatpush1.msra.mxu0 0.0
        %1081 = vmatprep.subr.mxu0 0.0
        %1082 = vmatpush1.msra.mxu0 0.0
        %1083 = vmatprep.subr.mxu0 0.0
        %1084 = vmatpush1.msra.mxu0 0.0
        %1085 = vmatprep.subr.mxu0 0.0
        %1086 = vmatpush1.msra.mxu0 0.0
        %1087 = vmatprep.subr.mxu0 0.0
        %1088 = vmatpush1.msra.mxu0 0.0
        %1089 = vmatprep.subr.mxu0 0.0
        %1090 = vmatpush1.msra.mxu0 0.0
        %1091 = vmatprep.subr.mxu0 0.0
        %1092 = vmatpush1.msra.mxu0 0.0
        %1093 = vmatprep.subr.mxu0 0.0
        %1094 = vmatpush1.msra.mxu0 0.0
        %1095 = vmatprep.subr.mxu0 0.0
        %1096 = vmatpush1.msra.mxu0 0.0
        %1097 = vmatprep.subr.mxu0 0.0
        %1098 = vmatpush1.msra.mxu0 0.0
        %1099 = vmatprep.subr.mxu0 0.0
        %1100 = vmatpush1.msra.mxu0 0.0
        %1101 = vmatprep.subr.mxu0 %v996
        %1102 = vmatpush1.msra.mxu0 %v993
        %1103 = vmatprep.subr.mxu0 %v980
        %1104 = vmatpush1.msra.mxu0 %v979
        %1105 = vmatprep.subr.mxu0 %v978
        %1106 = vmatpush1.msra.mxu0 %v977
        %1107 = vmatprep.subr.mxu0 %v976
        %1108 = vmatpush1.msra.mxu0 %v975
        %1109 = vmatprep.subr.mxu0 %v974
        %1110 = vmatpush1.msra.mxu0 %v973
        %1111 = vmatprep.subr.mxu0 0.0
        %1112 = vmatpush2.msra.mxu0 0.0
        %1113 = vmatprep.subr.mxu0 0.0
        %1114 = vmatpush2.msra.mxu0 0.0
        %1115 = vmatprep.subr.mxu0 0.0
        %1116 = vmatpush2.msra.mxu0 0.0
        %1117 = vmatprep.subr.mxu0 0.0
        %1118 = vmatpush2.msra.mxu0 0.0
        %1119 = vmatprep.subr.mxu0 0.0
        %1120 = vmatpush2.msra.mxu0 0.0
        %1121 = vmatprep.subr.mxu0 0.0
        %1122 = vmatpush2.msra.mxu0 0.0
        %1123 = vmatprep.subr.mxu0 0.0
        %1124 = vmatpush2.msra.mxu0 0.0
        %1125 = vmatprep.subr.mxu0 0.0
        %1126 = vmatpush2.msra.mxu0 0.0
        %1127 = vmatprep.subr.mxu0 0.0
        %1128 = vmatpush2.msra.mxu0 0.0
        %1129 = vmatprep.subr.mxu0 0.0
        %1130 = vmatpush2.msra.mxu0 0.0
        %1131 = vmatprep.subr.mxu0 0.0
        %1132 = vmatpush2.msra.mxu0 0.0
        %1133 = vmatprep.subr.mxu0 0.0
        %1134 = vmatpush2.msra.mxu0 0.0
        %1135 = vmatprep.subr.mxu0 0.0
        %1136 = vmatpush2.msra.mxu0 0.0
        %1137 = vmatprep.subr.mxu0 0.0
        %1138 = vmatpush2.msra.mxu0 0.0
        %1139 = vmatprep.subr.mxu0 0.0
        %1140 = vmatpush2.msra.mxu0 0.0
        %1141 = vmatprep.subr.mxu0 0.0
        %1142 = vmatpush2.msra.mxu0 0.0
        %1143 = vmatprep.mubr.f32.mxu0 0.0
        %1144 = vmatmul.mubr.f32.gmra.mxu0 %v1077
        %v1145 = vpop.f32.mrf.mxu0
        %v1146 = vadd.f32 %v1074, %v1145
        %v1147 = vpop.f32.mrf.mxu0
        %v1148 = vadd.f32 %v1074, %v1147
        %1149 = vdwg.mxu0
        %vm1150 = vcmp.ge.f32.partialorder %v1146, 0.0
        %vm1151 = vcmp.ge.f32.partialorder %v1148, 0.0
        %v1152 = vstv %s814
        %v1153 = vmul.f32 %v1152, %v1146
        %v1154 = vmul.f32 %v1152, %v1148
        %v1155 = vsel %vm1150, %v1146, %v1153
        %v1156 = vsel %vm1151, %v1148, %v1154
        %1157 = vrot.lane.b32.xlu0 %v1155, 17
        %v1158 = vpop.permute.xlu0 %1157
        %1159 = vrot.lane.b32.xlu0 %v1156, 17
        %v1160 = vpop.permute.xlu0 %1159
        %v1161 = vsel %vm832, %v1158, %v1160
        %v1162 = vsel %vm832, %v1160, %v1158
        %v1163 = vsel %vm843, %v1162, 0.0
        %v1164 = vsel %vm844, %v1161, 0.0
        %1165 = vrot.lane.b32.xlu0 %v1155, 16
        %v1166 = vpop.permute.xlu0 %1165
        %1167 = vrot.lane.b32.xlu0 %v1156, 16
        %v1168 = vpop.permute.xlu0 %1167
        %v1169 = vsel %vm851, %v1166, %v1168
        %v1170 = vsel %vm851, %v1168, %v1166
        %v1171 = vsel %vm856, %v1170, 0.0
        %v1172 = vsel %vm857, %v1169, 0.0
        %1173 = vrot.lane.b32.xlu0 %v1155, 15
        %v1174 = vpop.permute.xlu0 %1173
        %1175 = vrot.lane.b32.xlu0 %v1156, 15
        %v1176 = vpop.permute.xlu0 %1175
        %v1177 = vsel %vm864, %v1174, %v1176
        %v1178 = vsel %vm864, %v1176, %v1174
        %v1179 = vsel %vm873, %v1178, 0.0
        %v1180 = vsel %vm874, %v1177, 0.0
        %1181 = vrot.lane.b32.xlu0 %v1155, 1
        %v1182 = vpop.permute.xlu0 %1181
        %1183 = vrot.lane.b32.xlu0 %v1156, 1
        %v1184 = vpop.permute.xlu0 %1183
        %v1185 = vsel %vm881, %v1182, %v1184
        %v1186 = vsel %vm881, %v1184, %v1182
        %v1187 = vsel %vm886, %v1186, 0.0
        %v1188 = vsel %vm887, %v1185, 0.0
        %1189 = vrot.lane.b32.xlu0 %v1155, 127
        %v1190 = vpop.permute.xlu0 %1189
        %1191 = vrot.lane.b32.xlu0 %v1156, 127
        %v1192 = vpop.permute.xlu0 %1191
        %v1193 = vsel %vm894, %v1190, %v1192
        %v1194 = vsel %vm894, %v1192, %v1190
        %v1195 = vsel %vm899, %v1193, 0.0
        %v1196 = vsel %vm900, %v1194, 0.0
        %1197 = vrot.lane.b32.xlu0 %v1155, 113
        %v1198 = vpop.permute.xlu0 %1197
        %1199 = vrot.lane.b32.xlu0 %v1156, 113
        %v1200 = vpop.permute.xlu0 %1199
        %v1201 = vsel %vm907, %v1198, %v1200
        %v1202 = vsel %vm907, %v1200, %v1198
        %v1203 = vsel %vm916, %v1201, 0.0
        %v1204 = vsel %vm917, %v1202, 0.0
        %1205 = vrot.lane.b32.xlu0 %v1155, 112
        %v1206 = vpop.permute.xlu0 %1205
        %1207 = vrot.lane.b32.xlu0 %v1156, 112
        %v1208 = vpop.permute.xlu0 %1207
        %v1209 = vsel %vm924, %v1206, %v1208
        %v1210 = vsel %vm924, %v1208, %v1206
        %v1211 = vsel %vm929, %v1209, 0.0
        %v1212 = vsel %vm930, %v1210, 0.0
        %1213 = vrot.lane.b32.xlu0 %v1155, 111
        %v1214 = vpop.permute.xlu0 %1213
        %1215 = vrot.lane.b32.xlu0 %v1156, 111
        %v1216 = vpop.permute.xlu0 %1215
        %v1217 = vsel %vm937, %v1214, %v1216
        %v1218 = vsel %vm937, %v1216, %v1214
        %v1219 = vsel %vm944, %v1217, 0.0
        %v1220 = vsel %vm945, %v1218, 0.0
        %v1223 = vrot.slane %v1171, 4
        %v1224 = vrot.slane %v1172, 4
        %v1229 = vrot.slane %v1187, 4
        %v1230 = vrot.slane %v1188, 4
        %v1235 = vrot.slane %v1195, 4
        %v1236 = vrot.slane %v1196, 4
        %v1241 = vrot.slane %v1211, 4
        %v1242 = vrot.slane %v1212, 4
        %v1245 = vsel %vm972, %v1163, %v1223
        %v1246 = vsel %vm972, %v1164, %v1224
        %v1247 = vsel %vm972, %v1179, %v1229
        %v1248 = vsel %vm972, %v1180, %v1230
        %v1249 = vsel %vm972, %v1155, %v1235
        %v1250 = vsel %vm972, %v1156, %v1236
        %v1251 = vsel %vm972, %v1203, %v1241
        %v1252 = vsel %vm972, %v1204, %v1242
        %v1253 = vld [vmem:[%s6] sm:$0xf]
        %v1254 = vld [vmem:[%s7] sm:$0xf]
        %1256 = vset.pattern.permute.xlu0 0
        %1257 = vperm.xlu0 %1256, %v1254
        %v1258 = vpop.permute.xlu0 %1257
        %v1261 = vsel %vm988, %v1253, 0
        %v1264 = vsel %vm972, %v1219, 0
        %v1267 = vsel %vm972, %v1220, 0
        %1269 = vmatprep.subr.mxu0 0.0
        %1270 = vmatpush1.msra.mxu0 0.0
        %1271 = vmatprep.subr.mxu0 0.0
        %1272 = vmatpush1.msra.mxu0 0.0
        %1273 = vmatprep.subr.mxu0 0.0
        %1274 = vmatpush1.msra.mxu0 0.0
        %1275 = vmatprep.subr.mxu0 0.0
        %1276 = vmatpush1.msra.mxu0 0.0
        %1277 = vmatprep.subr.mxu0 0.0
        %1278 = vmatpush1.msra.mxu0 0.0
        %1279 = vmatprep.subr.mxu0 0.0
        %1280 = vmatpush1.msra.mxu0 0.0
        %1281 = vmatprep.subr.mxu0 0.0
        %1282 = vmatpush1.msra.mxu0 0.0
        %1283 = vmatprep.subr.mxu0 0.0
        %1284 = vmatpush1.msra.mxu0 0.0
        %1285 = vmatprep.subr.mxu0 0.0
        %1286 = vmatpush1.msra.mxu0 0.0
        %1287 = vmatprep.subr.mxu0 0.0
        %1288 = vmatpush1.msra.mxu0 0.0
        %1289 = vmatprep.subr.mxu0 0.0
        %1290 = vmatpush1.msra.mxu0 0.0
        %1291 = vmatprep.subr.mxu0 %v1267
        %1292 = vmatpush1.msra.mxu0 %v1264
        %1293 = vmatprep.subr.mxu0 %v1252
        %1294 = vmatpush1.msra.mxu0 %v1251
        %1295 = vmatprep.subr.mxu0 %v1250
        %1296 = vmatpush1.msra.mxu0 %v1249
        %1297 = vmatprep.subr.mxu0 %v1248
        %1298 = vmatpush1.msra.mxu0 %v1247
        %1299 = vmatprep.subr.mxu0 %v1246
        %1300 = vmatpush1.msra.mxu0 %v1245
        %1301 = vmatprep.subr.mxu0 0.0
        %1302 = vmatpush2.msra.mxu0 0.0
        %1303 = vmatprep.subr.mxu0 0.0
        %1304 = vmatpush2.msra.mxu0 0.0
        %1305 = vmatprep.subr.mxu0 0.0
        %1306 = vmatpush2.msra.mxu0 0.0
        %1307 = vmatprep.subr.mxu0 0.0
        %1308 = vmatpush2.msra.mxu0 0.0
        %1309 = vmatprep.subr.mxu0 0.0
        %1310 = vmatpush2.msra.mxu0 0.0
        %1311 = vmatprep.subr.mxu0 0.0
        %1312 = vmatpush2.msra.mxu0 0.0
        %1313 = vmatprep.subr.mxu0 0.0
        %1314 = vmatpush2.msra.mxu0 0.0
        %1315 = vmatprep.subr.mxu0 0.0
        %1316 = vmatpush2.msra.mxu0 0.0
        %1317 = vmatprep.subr.mxu0 0.0
        %1318 = vmatpush2.msra.mxu0 0.0
        %1319 = vmatprep.subr.mxu0 0.0
        %1320 = vmatpush2.msra.mxu0 0.0
        %1321 = vmatprep.subr.mxu0 0.0
        %1322 = vmatpush2.msra.mxu0 0.0
        %1323 = vmatprep.subr.mxu0 0.0
        %1324 = vmatpush2.msra.mxu0 0.0
        %1325 = vmatprep.subr.mxu0 0.0
        %1326 = vmatpush2.msra.mxu0 0.0
        %1327 = vmatprep.subr.mxu0 0.0
        %1328 = vmatpush2.msra.mxu0 0.0
        %1329 = vmatprep.subr.mxu0 0.0
        %1330 = vmatpush2.msra.mxu0 0.0
        %1331 = vmatprep.subr.mxu0 0.0
        %1332 = vmatpush2.msra.mxu0 0.0
        %1333 = vmatprep.mubr.f32.mxu0 0.0
        %1334 = vmatmul.mubr.f32.gmra.mxu0 %v1261
        %v1335 = vpop.f32.mrf.mxu0
        %v1336 = vadd.f32 %v1258, %v1335
        %v1337 = vpop.f32.mrf.mxu0
        %v1338 = vadd.f32 %v1258, %v1337
        %1339 = vdwg.mxu0
        %v1342 = vrot.slane %v1336, 4
        %v1343 = vrot.slane %v1338, 4
        %v1346 = vsel %vm972, %v1065, %v1342
        %v1347 = vsel %vm972, %v1067, %v1343
        %1348 = vrot.lane.b32.xlu0 %v1346, 17
        %v1349 = vpop.permute.xlu0 %1348
        %1350 = vrot.lane.b32.xlu0 %v1347, 17
        %v1351 = vpop.permute.xlu0 %1350
        %v1352 = vsel %vm832, %v1349, %v1351
        %v1353 = vsel %vm832, %v1351, %v1349
        %v1354 = vsel %vm843, %v1353, 0.0
        %v1355 = vsel %vm844, %v1352, 0.0
        %1356 = vrot.lane.b32.xlu0 %v1346, 16
        %v1357 = vpop.permute.xlu0 %1356
        %1358 = vrot.lane.b32.xlu0 %v1347, 16
        %v1359 = vpop.permute.xlu0 %1358
        %v1360 = vsel %vm851, %v1357, %v1359
        %v1361 = vsel %vm851, %v1359, %v1357
        %v1362 = vsel %vm856, %v1361, 0.0
        %v1363 = vsel %vm857, %v1360, 0.0
        %1364 = vrot.lane.b32.xlu0 %v1346, 15
        %v1365 = vpop.permute.xlu0 %1364
        %1366 = vrot.lane.b32.xlu0 %v1347, 15
        %v1367 = vpop.permute.xlu0 %1366
        %v1368 = vsel %vm864, %v1365, %v1367
        %v1369 = vsel %vm864, %v1367, %v1365
        %v1370 = vsel %vm873, %v1369, 0.0
        %v1371 = vsel %vm874, %v1368, 0.0
        %1372 = vrot.lane.b32.xlu0 %v1346, 1
        %v1373 = vpop.permute.xlu0 %1372
        %1374 = vrot.lane.b32.xlu0 %v1347, 1
        %v1375 = vpop.permute.xlu0 %1374
        %v1376 = vsel %vm881, %v1373, %v1375
        %v1377 = vsel %vm881, %v1375, %v1373
        %v1378 = vsel %vm886, %v1377, 0.0
        %v1379 = vsel %vm887, %v1376, 0.0
        %1380 = vrot.lane.b32.xlu0 %v1346, 127
        %v1381 = vpop.permute.xlu0 %1380
        %1382 = vrot.lane.b32.xlu0 %v1347, 127
        %v1383 = vpop.permute.xlu0 %1382
        %v1384 = vsel %vm894, %v1381, %v1383
        %v1385 = vsel %vm894, %v1383, %v1381
        %v1386 = vsel %vm899, %v1384, 0.0
        %v1387 = vsel %vm900, %v1385, 0.0
        %1388 = vrot.lane.b32.xlu0 %v1346, 113
        %v1389 = vpop.permute.xlu0 %1388
        %1390 = vrot.lane.b32.xlu0 %v1347, 113
        %v1391 = vpop.permute.xlu0 %1390
        %v1392 = vsel %vm907, %v1389, %v1391
        %v1393 = vsel %vm907, %v1391, %v1389
        %v1394 = vsel %vm916, %v1392, 0.0
        %v1395 = vsel %vm917, %v1393, 0.0
        %1396 = vrot.lane.b32.xlu0 %v1346, 112
        %v1397 = vpop.permute.xlu0 %1396
        %1398 = vrot.lane.b32.xlu0 %v1347, 112
        %v1399 = vpop.permute.xlu0 %1398
        %v1400 = vsel %vm924, %v1397, %v1399
        %v1401 = vsel %vm924, %v1399, %v1397
        %v1402 = vsel %vm929, %v1400, 0.0
        %v1403 = vsel %vm930, %v1401, 0.0
        %1404 = vrot.lane.b32.xlu0 %v1346, 111
        %v1405 = vpop.permute.xlu0 %1404
        %1406 = vrot.lane.b32.xlu0 %v1347, 111
        %v1407 = vpop.permute.xlu0 %1406
        %v1408 = vsel %vm937, %v1405, %v1407
        %v1409 = vsel %vm937, %v1407, %v1405
        %v1410 = vsel %vm944, %v1408, 0.0
        %v1411 = vsel %vm945, %v1409, 0.0
        %v1412 = vld [vmem:[%s8] sm:$0xff]
        %v1413 = vld [vmem:[%s9] sm:$0xff]
        %1415 = vset.pattern.permute.xlu0 0
        %1416 = vperm.xlu0 %1415, %v1413
        %v1417 = vpop.permute.xlu0 %1416
        %vm1419 = vcmask 588800
        %v1421 = vsel %vm1419, %v1412, 0
        %1423 = vmatprep.subr.mxu0 0.0
        %1424 = vmatpush1.msra.mxu0 0.0
        %1425 = vmatprep.subr.mxu0 0.0
        %1426 = vmatpush1.msra.mxu0 0.0
        %1427 = vmatprep.subr.mxu0 0.0
        %1428 = vmatpush1.msra.mxu0 0.0
        %1429 = vmatprep.subr.mxu0 0.0
        %1430 = vmatpush1.msra.mxu0 0.0
        %1431 = vmatprep.subr.mxu0 0.0
        %1432 = vmatpush1.msra.mxu0 0.0
        %1433 = vmatprep.subr.mxu0 0.0
        %1434 = vmatpush1.msra.mxu0 0.0
        %1435 = vmatprep.subr.mxu0 0.0
        %1436 = vmatpush1.msra.mxu0 0.0
        %1437 = vmatprep.subr.mxu0 %v1411
        %1438 = vmatpush1.msra.mxu0 %v1410
        %1439 = vmatprep.subr.mxu0 %v1403
        %1440 = vmatpush1.msra.mxu0 %v1402
        %1441 = vmatprep.subr.mxu0 %v1395
        %1442 = vmatpush1.msra.mxu0 %v1394
        %1443 = vmatprep.subr.mxu0 %v1387
        %1444 = vmatpush1.msra.mxu0 %v1386
        %1445 = vmatprep.subr.mxu0 %v1347
        %1446 = vmatpush1.msra.mxu0 %v1346
        %1447 = vmatprep.subr.mxu0 %v1379
        %1448 = vmatpush1.msra.mxu0 %v1378
        %1449 = vmatprep.subr.mxu0 %v1371
        %1450 = vmatpush1.msra.mxu0 %v1370
        %1451 = vmatprep.subr.mxu0 %v1363
        %1452 = vmatpush1.msra.mxu0 %v1362
        %1453 = vmatprep.subr.mxu0 %v1355
        %1454 = vmatpush1.msra.mxu0 %v1354
        %1455 = vmatprep.subr.mxu0 0.0
        %1456 = vmatpush2.msra.mxu0 0.0
        %1457 = vmatprep.subr.mxu0 0.0
        %1458 = vmatpush2.msra.mxu0 0.0
        %1459 = vmatprep.subr.mxu0 0.0
        %1460 = vmatpush2.msra.mxu0 0.0
        %1461 = vmatprep.subr.mxu0 0.0
        %1462 = vmatpush2.msra.mxu0 0.0
        %1463 = vmatprep.subr.mxu0 0.0
        %1464 = vmatpush2.msra.mxu0 0.0
        %1465 = vmatprep.subr.mxu0 0.0
        %1466 = vmatpush2.msra.mxu0 0.0
        %1467 = vmatprep.subr.mxu0 0.0
        %1468 = vmatpush2.msra.mxu0 0.0
        %1469 = vmatprep.subr.mxu0 0.0
        %1470 = vmatpush2.msra.mxu0 0.0
        %1471 = vmatprep.subr.mxu0 0.0
        %1472 = vmatpush2.msra.mxu0 0.0
        %1473 = vmatprep.subr.mxu0 0.0
        %1474 = vmatpush2.msra.mxu0 0.0
        %1475 = vmatprep.subr.mxu0 0.0
        %1476 = vmatpush2.msra.mxu0 0.0
        %1477 = vmatprep.subr.mxu0 0.0
        %1478 = vmatpush2.msra.mxu0 0.0
        %1479 = vmatprep.subr.mxu0 0.0
        %1480 = vmatpush2.msra.mxu0 0.0
        %1481 = vmatprep.subr.mxu0 0.0
        %1482 = vmatpush2.msra.mxu0 0.0
        %1483 = vmatprep.subr.mxu0 0.0
        %1484 = vmatpush2.msra.mxu0 0.0
        %1485 = vmatprep.subr.mxu0 0.0
        %1486 = vmatpush2.msra.mxu0 0.0
        %1487 = vmatprep.mubr.f32.mxu0 0.0
        %1488 = vmatmul.mubr.f32.gmra.mxu0 %v1421
        %v1489 = vpop.f32.mrf.mxu0
        %v1490 = vadd.f32 %v1417, %v1489
        %v1491 = vpop.f32.mrf.mxu0
        %v1492 = vadd.f32 %v1417, %v1491
        %1493 = vdwg.mxu0
        %v1494 = vld [vmem:[%s10] sm:$0xff]
        %v1495 = vld [vmem:[%s11] sm:$0xff]
        %1497 = vset.pattern.permute.xlu0 0
        %1498 = vperm.xlu0 %1497, %v1495
        %v1499 = vpop.permute.xlu0 %1498
        %v1502 = vsel %vm1419, %v1494, 0
        %1504 = vmatprep.subr.mxu0 0.0
        %1505 = vmatpush1.msra.mxu0 0.0
        %1506 = vmatprep.subr.mxu0 0.0
        %1507 = vmatpush1.msra.mxu0 0.0
        %1508 = vmatprep.subr.mxu0 0.0
        %1509 = vmatpush1.msra.mxu0 0.0
        %1510 = vmatprep.subr.mxu0 0.0
        %1511 = vmatpush1.msra.mxu0 0.0
        %1512 = vmatprep.subr.mxu0 0.0
        %1513 = vmatpush1.msra.mxu0 0.0
        %1514 = vmatprep.subr.mxu0 0.0
        %1515 = vmatpush1.msra.mxu0 0.0
        %1516 = vmatprep.subr.mxu0 0.0
        %1517 = vmatpush1.msra.mxu0 0.0
        %1518 = vmatprep.subr.mxu0 %v1411
        %1519 = vmatpush1.msra.mxu0 %v1410
        %1520 = vmatprep.subr.mxu0 %v1403
        %1521 = vmatpush1.msra.mxu0 %v1402
        %1522 = vmatprep.subr.mxu0 %v1395
        %1523 = vmatpush1.msra.mxu0 %v1394
        %1524 = vmatprep.subr.mxu0 %v1387
        %1525 = vmatpush1.msra.mxu0 %v1386
        %1526 = vmatprep.subr.mxu0 %v1347
        %1527 = vmatpush1.msra.mxu0 %v1346
        %1528 = vmatprep.subr.mxu0 %v1379
        %1529 = vmatpush1.msra.mxu0 %v1378
        %1530 = vmatprep.subr.mxu0 %v1371
        %1531 = vmatpush1.msra.mxu0 %v1370
        %1532 = vmatprep.subr.mxu0 %v1363
        %1533 = vmatpush1.msra.mxu0 %v1362
        %1534 = vmatprep.subr.mxu0 %v1355
        %1535 = vmatpush1.msra.mxu0 %v1354
        %1536 = vmatprep.subr.mxu0 0.0
        %1537 = vmatpush2.msra.mxu0 0.0
        %1538 = vmatprep.subr.mxu0 0.0
        %1539 = vmatpush2.msra.mxu0 0.0
        %1540 = vmatprep.subr.mxu0 0.0
        %1541 = vmatpush2.msra.mxu0 0.0
        %1542 = vmatprep.subr.mxu0 0.0
        %1543 = vmatpush2.msra.mxu0 0.0
        %1544 = vmatprep.subr.mxu0 0.0
        %1545 = vmatpush2.msra.mxu0 0.0
        %1546 = vmatprep.subr.mxu0 0.0
        %1547 = vmatpush2.msra.mxu0 0.0
        %1548 = vmatprep.subr.mxu0 0.0
        %1549 = vmatpush2.msra.mxu0 0.0
        %1550 = vmatprep.subr.mxu0 0.0
        %1551 = vmatpush2.msra.mxu0 0.0
        %1552 = vmatprep.subr.mxu0 0.0
        %1553 = vmatpush2.msra.mxu0 0.0
        %1554 = vmatprep.subr.mxu0 0.0
        %1555 = vmatpush2.msra.mxu0 0.0
        %1556 = vmatprep.subr.mxu0 0.0
        %1557 = vmatpush2.msra.mxu0 0.0
        %1558 = vmatprep.subr.mxu0 0.0
        %1559 = vmatpush2.msra.mxu0 0.0
        %1560 = vmatprep.subr.mxu0 0.0
        %1561 = vmatpush2.msra.mxu0 0.0
        %1562 = vmatprep.subr.mxu0 0.0
        %1563 = vmatpush2.msra.mxu0 0.0
        %1564 = vmatprep.subr.mxu0 0.0
        %1565 = vmatpush2.msra.mxu0 0.0
        %1566 = vmatprep.subr.mxu0 0.0
        %1567 = vmatpush2.msra.mxu0 0.0
        %1568 = vmatprep.mubr.f32.mxu0 0.0
        %1569 = vmatmul.mubr.f32.gmra.mxu0 %v1502
        %v1570 = vpop.f32.mrf.mxu0
        %v1571 = vadd.f32 %v1499, %v1570
        %v1572 = vpop.f32.mrf.mxu0
        %v1573 = vadd.f32 %v1499, %v1572
        %1574 = vdwg.mxu0
        %vm1575 = vcmp.ge.f32.partialorder %v1571, 0.0
        %vm1576 = vcmp.ge.f32.partialorder %v1573, 0.0
        %v1577 = vstv %s815
        %v1578 = vmul.f32 %v1577, %v1571
        %v1579 = vmul.f32 %v1577, %v1573
        %v1580 = vsel %vm1575, %v1571, %v1578
        %v1581 = vsel %vm1576, %v1573, %v1579
        %1582 = vrot.lane.b32.xlu0 %v1580, 17
        %v1583 = vpop.permute.xlu0 %1582
        %1584 = vrot.lane.b32.xlu0 %v1581, 17
        %v1585 = vpop.permute.xlu0 %1584
        %v1586 = vsel %vm832, %v1583, %v1585
        %v1587 = vsel %vm832, %v1585, %v1583
        %v1588 = vsel %vm843, %v1587, 0.0
        %v1589 = vsel %vm844, %v1586, 0.0
        %1590 = vrot.lane.b32.xlu0 %v1580, 16
        %v1591 = vpop.permute.xlu0 %1590
        %1592 = vrot.lane.b32.xlu0 %v1581, 16
        %v1593 = vpop.permute.xlu0 %1592
        %v1594 = vsel %vm851, %v1591, %v1593
        %v1595 = vsel %vm851, %v1593, %v1591
        %v1596 = vsel %vm856, %v1595, 0.0
        %v1597 = vsel %vm857, %v1594, 0.0
        %1598 = vrot.lane.b32.xlu0 %v1580, 15
        %v1599 = vpop.permute.xlu0 %1598
        %1600 = vrot.lane.b32.xlu0 %v1581, 15
        %v1601 = vpop.permute.xlu0 %1600
        %v1602 = vsel %vm864, %v1599, %v1601
        %v1603 = vsel %vm864, %v1601, %v1599
        %v1604 = vsel %vm873, %v1603, 0.0
        %v1605 = vsel %vm874, %v1602, 0.0
        %1606 = vrot.lane.b32.xlu0 %v1580, 1
        %v1607 = vpop.permute.xlu0 %1606
        %1608 = vrot.lane.b32.xlu0 %v1581, 1
        %v1609 = vpop.permute.xlu0 %1608
        %v1610 = vsel %vm881, %v1607, %v1609
        %v1611 = vsel %vm881, %v1609, %v1607
        %v1612 = vsel %vm886, %v1611, 0.0
        %v1613 = vsel %vm887, %v1610, 0.0
        %1614 = vrot.lane.b32.xlu0 %v1580, 127
        %v1615 = vpop.permute.xlu0 %1614
        %1616 = vrot.lane.b32.xlu0 %v1581, 127
        %v1617 = vpop.permute.xlu0 %1616
        %v1618 = vsel %vm894, %v1615, %v1617
        %v1619 = vsel %vm894, %v1617, %v1615
        %v1620 = vsel %vm899, %v1618, 0.0
        %v1621 = vsel %vm900, %v1619, 0.0
        %1622 = vrot.lane.b32.xlu0 %v1580, 113
        %v1623 = vpop.permute.xlu0 %1622
        %1624 = vrot.lane.b32.xlu0 %v1581, 113
        %v1625 = vpop.permute.xlu0 %1624
        %v1626 = vsel %vm907, %v1623, %v1625
        %v1627 = vsel %vm907, %v1625, %v1623
        %v1628 = vsel %vm916, %v1626, 0.0
        %v1629 = vsel %vm917, %v1627, 0.0
        %1630 = vrot.lane.b32.xlu0 %v1580, 112
        %v1631 = vpop.permute.xlu0 %1630
        %1632 = vrot.lane.b32.xlu0 %v1581, 112
        %v1633 = vpop.permute.xlu0 %1632
        %v1634 = vsel %vm924, %v1631, %v1633
        %v1635 = vsel %vm924, %v1633, %v1631
        %v1636 = vsel %vm929, %v1634, 0.0
        %v1637 = vsel %vm930, %v1635, 0.0
        %1638 = vrot.lane.b32.xlu0 %v1580, 111
        %v1639 = vpop.permute.xlu0 %1638
        %1640 = vrot.lane.b32.xlu0 %v1581, 111
        %v1641 = vpop.permute.xlu0 %1640
        %v1642 = vsel %vm937, %v1639, %v1641
        %v1643 = vsel %vm937, %v1641, %v1639
        %v1644 = vsel %vm944, %v1642, 0.0
        %v1645 = vsel %vm945, %v1643, 0.0
        %v1646 = vld [vmem:[%s12] sm:$0xff]
        %v1647 = vld [vmem:[%s13] sm:$0xff]
        %1649 = vset.pattern.permute.xlu0 0
        %1650 = vperm.xlu0 %1649, %v1647
        %v1651 = vpop.permute.xlu0 %1650
        %v1654 = vsel %vm1419, %v1646, 0
        %1656 = vmatprep.subr.mxu0 0.0
        %1657 = vmatpush1.msra.mxu0 0.0
        %1658 = vmatprep.subr.mxu0 0.0
        %1659 = vmatpush1.msra.mxu0 0.0
        %1660 = vmatprep.subr.mxu0 0.0
        %1661 = vmatpush1.msra.mxu0 0.0
        %1662 = vmatprep.subr.mxu0 0.0
        %1663 = vmatpush1.msra.mxu0 0.0
        %1664 = vmatprep.subr.mxu0 0.0
        %1665 = vmatpush1.msra.mxu0 0.0
        %1666 = vmatprep.subr.mxu0 0.0
        %1667 = vmatpush1.msra.mxu0 0.0
        %1668 = vmatprep.subr.mxu0 0.0
        %1669 = vmatpush1.msra.mxu0 0.0
        %1670 = vmatprep.subr.mxu0 %v1645
        %1671 = vmatpush1.msra.mxu0 %v1644
        %1672 = vmatprep.subr.mxu0 %v1637
        %1673 = vmatpush1.msra.mxu0 %v1636
        %1674 = vmatprep.subr.mxu0 %v1629
        %1675 = vmatpush1.msra.mxu0 %v1628
        %1676 = vmatprep.subr.mxu0 %v1621
        %1677 = vmatpush1.msra.mxu0 %v1620
        %1678 = vmatprep.subr.mxu0 %v1581
        %1679 = vmatpush1.msra.mxu0 %v1580
        %1680 = vmatprep.subr.mxu0 %v1613
        %1681 = vmatpush1.msra.mxu0 %v1612
        %1682 = vmatprep.subr.mxu0 %v1605
        %1683 = vmatpush1.msra.mxu0 %v1604
        %1684 = vmatprep.subr.mxu0 %v1597
        %1685 = vmatpush1.msra.mxu0 %v1596
        %1686 = vmatprep.subr.mxu0 %v1589
        %1687 = vmatpush1.msra.mxu0 %v1588
        %1688 = vmatprep.subr.mxu0 0.0
        %1689 = vmatpush2.msra.mxu0 0.0
        %1690 = vmatprep.subr.mxu0 0.0
        %1691 = vmatpush2.msra.mxu0 0.0
        %1692 = vmatprep.subr.mxu0 0.0
        %1693 = vmatpush2.msra.mxu0 0.0
        %1694 = vmatprep.subr.mxu0 0.0
        %1695 = vmatpush2.msra.mxu0 0.0
        %1696 = vmatprep.subr.mxu0 0.0
        %1697 = vmatpush2.msra.mxu0 0.0
        %1698 = vmatprep.subr.mxu0 0.0
        %1699 = vmatpush2.msra.mxu0 0.0
        %1700 = vmatprep.subr.mxu0 0.0
        %1701 = vmatpush2.msra.mxu0 0.0
        %1702 = vmatprep.subr.mxu0 0.0
        %1703 = vmatpush2.msra.mxu0 0.0
        %1704 = vmatprep.subr.mxu0 0.0
        %1705 = vmatpush2.msra.mxu0 0.0
        %1706 = vmatprep.subr.mxu0 0.0
        %1707 = vmatpush2.msra.mxu0 0.0
        %1708 = vmatprep.subr.mxu0 0.0
        %1709 = vmatpush2.msra.mxu0 0.0
        %1710 = vmatprep.subr.mxu0 0.0
        %1711 = vmatpush2.msra.mxu0 0.0
        %1712 = vmatprep.subr.mxu0 0.0
        %1713 = vmatpush2.msra.mxu0 0.0
        %1714 = vmatprep.subr.mxu0 0.0
        %1715 = vmatpush2.msra.mxu0 0.0
        %1716 = vmatprep.subr.mxu0 0.0
        %1717 = vmatpush2.msra.mxu0 0.0
        %1718 = vmatprep.subr.mxu0 0.0
        %1719 = vmatpush2.msra.mxu0 0.0
        %1720 = vmatprep.mubr.f32.mxu0 0.0
        %1721 = vmatmul.mubr.f32.gmra.mxu0 %v1654
        %v1722 = vpop.f32.mrf.mxu0
        %v1723 = vadd.f32 %v1651, %v1722
        %v1724 = vpop.f32.mrf.mxu0
        %v1725 = vadd.f32 %v1651, %v1724
        %1726 = vdwg.mxu0
        %v1727 = vld [vmem:[%s14] sm:$0xf]
        %v1728 = vld [vmem:[%s15] sm:$0xf]
        %1730 = vset.pattern.permute.xlu0 0
        %1731 = vperm.xlu0 %1730, %v1728
        %v1732 = vpop.permute.xlu0 %1731
        %vm1734 = vcmask 130048
        %v1736 = vsel %vm1734, %v1727, 0
        %1738 = vmatprep.subr.mxu0 0.0
        %1739 = vmatpush1.msra.mxu0 0.0
        %1740 = vmatprep.subr.mxu0 0.0
        %1741 = vmatpush1.msra.mxu0 0.0
        %1742 = vmatprep.subr.mxu0 0.0
        %1743 = vmatpush1.msra.mxu0 0.0
        %1744 = vmatprep.subr.mxu0 0.0
        %1745 = vmatpush1.msra.mxu0 0.0
        %1746 = vmatprep.subr.mxu0 0.0
        %1747 = vmatpush1.msra.mxu0 0.0
        %1748 = vmatprep.subr.mxu0 0.0
        %1749 = vmatpush1.msra.mxu0 0.0
        %1750 = vmatprep.subr.mxu0 0.0
        %1751 = vmatpush1.msra.mxu0 0.0
        %1752 = vmatprep.subr.mxu0 0.0
        %1753 = vmatpush1.msra.mxu0 0.0
        %1754 = vmatprep.subr.mxu0 0.0
        %1755 = vmatpush1.msra.mxu0 0.0
        %1756 = vmatprep.subr.mxu0 0.0
        %1757 = vmatpush1.msra.mxu0 0.0
        %1758 = vmatprep.subr.mxu0 0.0
        %1759 = vmatpush1.msra.mxu0 0.0
        %1760 = vmatprep.subr.mxu0 0.0
        %1761 = vmatpush1.msra.mxu0 0.0
        %1762 = vmatprep.subr.mxu0 0.0
        %1763 = vmatpush1.msra.mxu0 0.0
        %1764 = vmatprep.subr.mxu0 0.0
        %1765 = vmatpush1.msra.mxu0 0.0
        %1766 = vmatprep.subr.mxu0 %v1725
        %1767 = vmatpush1.msra.mxu0 %v1723
        %1768 = vmatprep.subr.mxu0 %v1492
        %1769 = vmatpush1.msra.mxu0 %v1490
        %1770 = vmatprep.subr.mxu0 0.0
        %1771 = vmatpush2.msra.mxu0 0.0
        %1772 = vmatprep.subr.mxu0 0.0
        %1773 = vmatpush2.msra.mxu0 0.0
        %1774 = vmatprep.subr.mxu0 0.0
        %1775 = vmatpush2.msra.mxu0 0.0
        %1776 = vmatprep.subr.mxu0 0.0
        %1777 = vmatpush2.msra.mxu0 0.0
        %1778 = vmatprep.subr.mxu0 0.0
        %1779 = vmatpush2.msra.mxu0 0.0
        %1780 = vmatprep.subr.mxu0 0.0
        %1781 = vmatpush2.msra.mxu0 0.0
        %1782 = vmatprep.subr.mxu0 0.0
        %1783 = vmatpush2.msra.mxu0 0.0
        %1784 = vmatprep.subr.mxu0 0.0
        %1785 = vmatpush2.msra.mxu0 0.0
        %1786 = vmatprep.subr.mxu0 0.0
        %1787 = vmatpush2.msra.mxu0 0.0
        %1788 = vmatprep.subr.mxu0 0.0
        %1789 = vmatpush2.msra.mxu0 0.0
        %1790 = vmatprep.subr.mxu0 0.0
        %1791 = vmatpush2.msra.mxu0 0.0
        %1792 = vmatprep.subr.mxu0 0.0
        %1793 = vmatpush2.msra.mxu0 0.0
        %1794 = vmatprep.subr.mxu0 0.0
        %1795 = vmatpush2.msra.mxu0 0.0
        %1796 = vmatprep.subr.mxu0 0.0
        %1797 = vmatpush2.msra.mxu0 0.0
        %1798 = vmatprep.subr.mxu0 0.0
        %1799 = vmatpush2.msra.mxu0 0.0
        %1800 = vmatprep.subr.mxu0 0.0
        %1801 = vmatpush2.msra.mxu0 0.0
        %1802 = vmatprep.mubr.f32.mxu0 0.0
        %1803 = vmatmul.mubr.f32.gmra.mxu0 %v1736
        %v1804 = vpop.f32.mrf.mxu0
        %v1805 = vadd.f32 %v1732, %v1804
        %v1806 = vpop.f32.mrf.mxu0
        %v1807 = vadd.f32 %v1732, %v1806
        %1808 = vdwg.mxu0
        %v1809 = vsel %vm972, %v1805, 0.0
        %v1810 = vrot.slane %v1809, 4
        %v1811 = vadd.f32 %v1809, %v1810
        %v1812 = vrot.slane %v1811, 2
        %v1813 = vadd.f32 %v1811, %v1812
        %v1814 = vrot.slane %v1813, 1
        %v1815 = vadd.f32 %v1813, %v1814
        %v1816 = vsel %vm972, %v1807, 0.0
        %v1817 = vrot.slane %v1816, 4
        %v1818 = vadd.f32 %v1816, %v1817
        %v1819 = vrot.slane %v1818, 2
        %v1820 = vadd.f32 %v1818, %v1819
        %v1821 = vrot.slane %v1820, 1
        %v1822 = vadd.f32 %v1820, %v1821
        %v1823 = vrcp.pop 4.0
        %v1824 = vmul.f32 %v1815, %v1823
        %v1825 = vmul.f32 %v1822, %v1823
        %v1826 = vsel %vm972, %v1805, -inf
        %v1827 = vrot.slane %v1826, 4
        %v1828 = vmax.f32 %v1826, %v1827
        %v1829 = vrot.slane %v1828, 2
        %v1830 = vmax.f32 %v1828, %v1829
        %v1831 = vrot.slane %v1830, 1
        %v1832 = vmax.f32 %v1830, %v1831
        %v1833 = vsel %vm972, %v1807, -inf
        %v1834 = vrot.slane %v1833, 4
        %v1835 = vmax.f32 %v1833, %v1834
        %v1836 = vrot.slane %v1835, 2
        %v1837 = vmax.f32 %v1835, %v1836
        %v1838 = vrot.slane %v1837, 1
        %v1839 = vmax.f32 %v1837, %v1838
        %vm1840 = vcmask 1040384
        %v1841 = vsel %vm1840, %v1824, %v1832
        %v1842 = vsel %vm1840, %v1825, %v1839
        %1843 = vrot.lane.b32.xlu0 %v1841, 17
        %v1844 = vpop.permute.xlu0 %1843
        %1845 = vrot.lane.b32.xlu0 %v1842, 17
        %v1846 = vpop.permute.xlu0 %1845
        %v1847 = vsel %vm832, %v1844, %v1846
        %v1848 = vsel %vm832, %v1846, %v1844
        %v1849 = vsel %vm843, %v1848, 0.0
        %v1850 = vsel %vm844, %v1847, 0.0
        %1851 = vrot.lane.b32.xlu0 %v1841, 16
        %v1852 = vpop.permute.xlu0 %1851
        %1853 = vrot.lane.b32.xlu0 %v1842, 16
        %v1854 = vpop.permute.xlu0 %1853
        %v1855 = vsel %vm851, %v1852, %v1854
        %v1856 = vsel %vm851, %v1854, %v1852
        %v1857 = vsel %vm856, %v1856, 0.0
        %v1858 = vsel %vm857, %v1855, 0.0
        %1859 = vrot.lane.b32.xlu0 %v1841, 15
        %v1860 = vpop.permute.xlu0 %1859
        %1861 = vrot.lane.b32.xlu0 %v1842, 15
        %v1862 = vpop.permute.xlu0 %1861
        %v1863 = vsel %vm864, %v1860, %v1862
        %v1864 = vsel %vm864, %v1862, %v1860
        %v1865 = vsel %vm873, %v1864, 0.0
        %v1866 = vsel %vm874, %v1863, 0.0
        %1867 = vrot.lane.b32.xlu0 %v1841, 1
        %v1868 = vpop.permute.xlu0 %1867
        %1869 = vrot.lane.b32.xlu0 %v1842, 1
        %v1870 = vpop.permute.xlu0 %1869
        %v1871 = vsel %vm881, %v1868, %v1870
        %v1872 = vsel %vm881, %v1870, %v1868
        %v1873 = vsel %vm886, %v1872, 0.0
        %v1874 = vsel %vm887, %v1871, 0.0
        %1875 = vrot.lane.b32.xlu0 %v1841, 127
        %v1876 = vpop.permute.xlu0 %1875
        %1877 = vrot.lane.b32.xlu0 %v1842, 127
        %v1878 = vpop.permute.xlu0 %1877
        %v1879 = vsel %vm894, %v1876, %v1878
        %v1880 = vsel %vm894, %v1878, %v1876
        %v1881 = vsel %vm899, %v1879, 0.0
        %v1882 = vsel %vm900, %v1880, 0.0
        %1883 = vrot.lane.b32.xlu0 %v1841, 113
        %v1884 = vpop.permute.xlu0 %1883
        %1885 = vrot.lane.b32.xlu0 %v1842, 113
        %v1886 = vpop.permute.xlu0 %1885
        %v1887 = vsel %vm907, %v1884, %v1886
        %v1888 = vsel %vm907, %v1886, %v1884
        %v1889 = vsel %vm916, %v1887, 0.0
        %v1890 = vsel %vm917, %v1888, 0.0
        %1891 = vrot.lane.b32.xlu0 %v1841, 112
        %v1892 = vpop.permute.xlu0 %1891
        %1893 = vrot.lane.b32.xlu0 %v1842, 112
        %v1894 = vpop.permute.xlu0 %1893
        %v1895 = vsel %vm924, %v1892, %v1894
        %v1896 = vsel %vm924, %v1894, %v1892
        %v1897 = vsel %vm929, %v1895, 0.0
        %v1898 = vsel %vm930, %v1896, 0.0
        %1899 = vrot.lane.b32.xlu0 %v1841, 111
        %v1900 = vpop.permute.xlu0 %1899
        %1901 = vrot.lane.b32.xlu0 %v1842, 111
        %v1902 = vpop.permute.xlu0 %1901
        %v1903 = vsel %vm937, %v1900, %v1902
        %v1904 = vsel %vm937, %v1902, %v1900
        %v1905 = vsel %vm944, %v1903, 0.0
        %v1906 = vsel %vm945, %v1904, 0.0
        %v1909 = vrot.slane %v1857, 6
        %v1910 = vrot.slane %v1858, 6
        %v1915 = vrot.slane %v1865, 4
        %v1916 = vrot.slane %v1866, 4
        %v1921 = vrot.slane %v1873, 2
        %v1922 = vrot.slane %v1874, 2
        %v1927 = vrot.slane %v1881, 6
        %v1928 = vrot.slane %v1882, 6
        %v1933 = vrot.slane %v1889, 4
        %v1934 = vrot.slane %v1890, 4
        %v1939 = vrot.slane %v1897, 2
        %v1940 = vrot.slane %v1898, 2
        %vm1943 = vcmask 1041408
        %v1944 = vsel %vm1943, %v1849, %v1909
        %v1945 = vsel %vm1943, %v1850, %v1910
        %v1946 = vsel %vm972, %v1944, %v1915
        %v1947 = vsel %vm972, %v1945, %v1916
        %vm1948 = vcmask 1045504
        %v1949 = vsel %vm1948, %v1946, %v1921
        %v1950 = vsel %vm1948, %v1947, %v1922
        %v1951 = vsel %vm1943, %v1841, %v1927
        %v1952 = vsel %vm1943, %v1842, %v1928
        %v1953 = vsel %vm972, %v1951, %v1933
        %v1954 = vsel %vm972, %v1952, %v1934
        %v1955 = vsel %vm1948, %v1953, %v1939
        %v1956 = vsel %vm1948, %v1954, %v1940
        %v1957 = vld [vmem:[%s16] sm:$0x1]
        %v1958 = vld [vmem:[#allocation2] sm:$0x1]
        %1960 = vset.pattern.permute.xlu0 0
        %1961 = vperm.xlu0 %1960, %v1958
        %v1962 = vpop.permute.xlu0 %1961
        %v1964 = vlaneseq
        %v1965 = vshrl.u32 %v1964, 7
        %v1966 = vsub.s32 0, %v1965
        %v1967 = vrot.slane %v1962, %v1966
        %vm1968 = vcmask 146432
        %v1970 = vsel %vm1968, %v1957, 0
        %v1973 = vsel %vm1943, %v1905, 0
        %v1976 = vsel %vm1943, %v1906, 0
        %1978 = vmatprep.subr.mxu0 0.0
        %1979 = vmatpush1.msra.mxu0 0.0
        %1980 = vmatprep.subr.mxu0 0.0
        %1981 = vmatpush1.msra.mxu0 0.0
        %1982 = vmatprep.subr.mxu0 0.0
        %1983 = vmatpush1.msra.mxu0 0.0
        %1984 = vmatprep.subr.mxu0 0.0
        %1985 = vmatpush1.msra.mxu0 0.0
        %1986 = vmatprep.subr.mxu0 0.0
        %1987 = vmatpush1.msra.mxu0 0.0
        %1988 = vmatprep.subr.mxu0 0.0
        %1989 = vmatpush1.msra.mxu0 0.0
        %1990 = vmatprep.subr.mxu0 0.0
        %1991 = vmatpush1.msra.mxu0 0.0
        %1992 = vmatprep.subr.mxu0 0.0
        %1993 = vmatpush1.msra.mxu0 0.0
        %1994 = vmatprep.subr.mxu0 0.0
        %1995 = vmatpush1.msra.mxu0 0.0
        %1996 = vmatprep.subr.mxu0 0.0
        %1997 = vmatpush1.msra.mxu0 0.0
        %1998 = vmatprep.subr.mxu0 0.0
        %1999 = vmatpush1.msra.mxu0 0.0
        %2000 = vmatprep.subr.mxu0 0.0
        %2001 = vmatpush1.msra.mxu0 0.0
        %2002 = vmatprep.subr.mxu0 0.0
        %2003 = vmatpush1.msra.mxu0 0.0
        %2004 = vmatprep.subr.mxu0 %v1976
        %2005 = vmatpush1.msra.mxu0 %v1973
        %2006 = vmatprep.subr.mxu0 %v1956
        %2007 = vmatpush1.msra.mxu0 %v1955
        %2008 = vmatprep.subr.mxu0 %v1950
        %2009 = vmatpush1.msra.mxu0 %v1949
        %2010 = vmatprep.subr.mxu0 0.0
        %2011 = vmatpush2.msra.mxu0 0.0
        %2012 = vmatprep.subr.mxu0 0.0
        %2013 = vmatpush2.msra.mxu0 0.0
        %2014 = vmatprep.subr.mxu0 0.0
        %2015 = vmatpush2.msra.mxu0 0.0
        %2016 = vmatprep.subr.mxu0 0.0
        %2017 = vmatpush2.msra.mxu0 0.0
        %2018 = vmatprep.subr.mxu0 0.0
        %2019 = vmatpush2.msra.mxu0 0.0
        %2020 = vmatprep.subr.mxu0 0.0
        %2021 = vmatpush2.msra.mxu0 0.0
        %2022 = vmatprep.subr.mxu0 0.0
        %2023 = vmatpush2.msra.mxu0 0.0
        %2024 = vmatprep.subr.mxu0 0.0
        %2025 = vmatpush2.msra.mxu0 0.0
        %2026 = vmatprep.subr.mxu0 0.0
        %2027 = vmatpush2.msra.mxu0 0.0
        %2028 = vmatprep.subr.mxu0 0.0
        %2029 = vmatpush2.msra.mxu0 0.0
        %2030 = vmatprep.subr.mxu0 0.0
        %2031 = vmatpush2.msra.mxu0 0.0
        %2032 = vmatprep.subr.mxu0 0.0
        %2033 = vmatpush2.msra.mxu0 0.0
        %2034 = vmatprep.subr.mxu0 0.0
        %2035 = vmatpush2.msra.mxu0 0.0
        %2036 = vmatprep.subr.mxu0 0.0
        %2037 = vmatpush2.msra.mxu0 0.0
        %2038 = vmatprep.subr.mxu0 0.0
        %2039 = vmatpush2.msra.mxu0 0.0
        %2040 = vmatprep.subr.mxu0 0.0
        %2041 = vmatpush2.msra.mxu0 0.0
        %2042 = vmatprep.mubr.f32.mxu0 0.0
        %2043 = vmatmul.mubr.f32.gmra.mxu0 %v1970
        %v2044 = vpop.f32.mrf.mxu0
        %v2045 = vadd.f32 %v1967, %v2044
        %v2046 = vpop.f32.mrf.mxu0
        %v2047 = vadd.f32 %v1967, %v2046
        %2048 = vdwg.mxu0
        %v2049 = vld [vmem:[%s18] sm:$0x3]
        %v2050 = vld [vmem:[%s19] sm:$0x3]
        %2052 = vset.pattern.permute.xlu0 0
        %2053 = vperm.xlu0 %2052, %v2050
        %v2054 = vpop.permute.xlu0 %2053
        %v2057 = vsel %vm1968, %v2049, 0
        %2059 = vmatprep.subr.mxu0 0.0
        %2060 = vmatpush1.msra.mxu0 0.0
        %2061 = vmatprep.subr.mxu0 0.0
        %2062 = vmatpush1.msra.mxu0 0.0
        %2063 = vmatprep.subr.mxu0 0.0
        %2064 = vmatpush1.msra.mxu0 0.0
        %2065 = vmatprep.subr.mxu0 0.0
        %2066 = vmatpush1.msra.mxu0 0.0
        %2067 = vmatprep.subr.mxu0 0.0
        %2068 = vmatpush1.msra.mxu0 0.0
        %2069 = vmatprep.subr.mxu0 0.0
        %2070 = vmatpush1.msra.mxu0 0.0
        %2071 = vmatprep.subr.mxu0 0.0
        %2072 = vmatpush1.msra.mxu0 0.0
        %2073 = vmatprep.subr.mxu0 0.0
        %2074 = vmatpush1.msra.mxu0 0.0
        %2075 = vmatprep.subr.mxu0 0.0
        %2076 = vmatpush1.msra.mxu0 0.0
        %2077 = vmatprep.subr.mxu0 0.0
        %2078 = vmatpush1.msra.mxu0 0.0
        %2079 = vmatprep.subr.mxu0 0.0
        %2080 = vmatpush1.msra.mxu0 0.0
        %2081 = vmatprep.subr.mxu0 0.0
        %2082 = vmatpush1.msra.mxu0 0.0
        %2083 = vmatprep.subr.mxu0 0.0
        %2084 = vmatpush1.msra.mxu0 0.0
        %2085 = vmatprep.subr.mxu0 %v1976
        %2086 = vmatpush1.msra.mxu0 %v1973
        %2087 = vmatprep.subr.mxu0 %v1956
        %2088 = vmatpush1.msra.mxu0 %v1955
        %2089 = vmatprep.subr.mxu0 %v1950
        %2090 = vmatpush1.msra.mxu0 %v1949
        %2091 = vmatprep.subr.mxu0 0.0
        %2092 = vmatpush2.msra.mxu0 0.0
        %2093 = vmatprep.subr.mxu0 0.0
        %2094 = vmatpush2.msra.mxu0 0.0
        %2095 = vmatprep.subr.mxu0 0.0
        %2096 = vmatpush2.msra.mxu0 0.0
        %2097 = vmatprep.subr.mxu0 0.0
        %2098 = vmatpush2.msra.mxu0 0.0
        %2099 = vmatprep.subr.mxu0 0.0
        %2100 = vmatpush2.msra.mxu0 0.0
        %2101 = vmatprep.subr.mxu0 0.0
        %2102 = vmatpush2.msra.mxu0 0.0
        %2103 = vmatprep.subr.mxu0 0.0
        %2104 = vmatpush2.msra.mxu0 0.0
        %2105 = vmatprep.subr.mxu0 0.0
        %2106 = vmatpush2.msra.mxu0 0.0
        %2107 = vmatprep.subr.mxu0 0.0
        %2108 = vmatpush2.msra.mxu0 0.0
        %2109 = vmatprep.subr.mxu0 0.0
        %2110 = vmatpush2.msra.mxu0 0.0
        %2111 = vmatprep.subr.mxu0 0.0
        %2112 = vmatpush2.msra.mxu0 0.0
        %2113 = vmatprep.subr.mxu0 0.0
        %2114 = vmatpush2.msra.mxu0 0.0
        %2115 = vmatprep.subr.mxu0 0.0
        %2116 = vmatpush2.msra.mxu0 0.0
        %2117 = vmatprep.subr.mxu0 0.0
        %2118 = vmatpush2.msra.mxu0 0.0
        %2119 = vmatprep.subr.mxu0 0.0
        %2120 = vmatpush2.msra.mxu0 0.0
        %2121 = vmatprep.subr.mxu0 0.0
        %2122 = vmatpush2.msra.mxu0 0.0
        %2123 = vmatprep.mubr.f32.mxu0 0.0
        %2124 = vmatmul.mubr.f32.gmra.mxu0 %v2057
        %v2125 = vpop.f32.mrf.mxu0
        %v2126 = vadd.f32 %v2054, %v2125
        %v2127 = vpop.f32.mrf.mxu0
        %v2128 = vadd.f32 %v2054, %v2127
        %2129 = vdwg.mxu0
        %vm2130 = vcmp.ge.f32.partialorder %v2126, 0.0
        %vm2131 = vcmp.ge.f32.partialorder %v2128, 0.0
        %v2132 = vstv %s816
        %v2133 = vmul.f32 %v2132, %v2126
        %v2134 = vmul.f32 %v2132, %v2128
        %v2135 = vsel %vm2130, %v2126, %v2133
        %v2136 = vsel %vm2131, %v2128, %v2134
        %2137 = vrot.lane.b32.xlu0 %v2135, 17
        %v2138 = vpop.permute.xlu0 %2137
        %2139 = vrot.lane.b32.xlu0 %v2136, 17
        %v2140 = vpop.permute.xlu0 %2139
        %v2141 = vsel %vm832, %v2138, %v2140
        %v2142 = vsel %vm832, %v2140, %v2138
        %v2143 = vsel %vm843, %v2142, 0.0
        %v2144 = vsel %vm844, %v2141, 0.0
        %2145 = vrot.lane.b32.xlu0 %v2135, 16
        %v2146 = vpop.permute.xlu0 %2145
        %2147 = vrot.lane.b32.xlu0 %v2136, 16
        %v2148 = vpop.permute.xlu0 %2147
        %v2149 = vsel %vm851, %v2146, %v2148
        %v2150 = vsel %vm851, %v2148, %v2146
        %v2151 = vsel %vm856, %v2150, 0.0
        %v2152 = vsel %vm857, %v2149, 0.0
        %2153 = vrot.lane.b32.xlu0 %v2135, 15
        %v2154 = vpop.permute.xlu0 %2153
        %2155 = vrot.lane.b32.xlu0 %v2136, 15
        %v2156 = vpop.permute.xlu0 %2155
        %v2157 = vsel %vm864, %v2154, %v2156
        %v2158 = vsel %vm864, %v2156, %v2154
        %v2159 = vsel %vm873, %v2158, 0.0
        %v2160 = vsel %vm874, %v2157, 0.0
        %2161 = vrot.lane.b32.xlu0 %v2135, 1
        %v2162 = vpop.permute.xlu0 %2161
        %2163 = vrot.lane.b32.xlu0 %v2136, 1
        %v2164 = vpop.permute.xlu0 %2163
        %v2165 = vsel %vm881, %v2162, %v2164
        %v2166 = vsel %vm881, %v2164, %v2162
        %v2167 = vsel %vm886, %v2166, 0.0
        %v2168 = vsel %vm887, %v2165, 0.0
        %2169 = vrot.lane.b32.xlu0 %v2135, 127
        %v2170 = vpop.permute.xlu0 %2169
        %2171 = vrot.lane.b32.xlu0 %v2136, 127
        %v2172 = vpop.permute.xlu0 %2171
        %v2173 = vsel %vm894, %v2170, %v2172
        %v2174 = vsel %vm894, %v2172, %v2170
        %v2175 = vsel %vm899, %v2173, 0.0
        %v2176 = vsel %vm900, %v2174, 0.0
        %2177 = vrot.lane.b32.xlu0 %v2135, 113
        %v2178 = vpop.permute.xlu0 %2177
        %2179 = vrot.lane.b32.xlu0 %v2136, 113
        %v2180 = vpop.permute.xlu0 %2179
        %v2181 = vsel %vm907, %v2178, %v2180
        %v2182 = vsel %vm907, %v2180, %v2178
        %v2183 = vsel %vm916, %v2181, 0.0
        %v2184 = vsel %vm917, %v2182, 0.0
        %2185 = vrot.lane.b32.xlu0 %v2135, 112
        %v2186 = vpop.permute.xlu0 %2185
        %2187 = vrot.lane.b32.xlu0 %v2136, 112
        %v2188 = vpop.permute.xlu0 %2187
        %v2189 = vsel %vm924, %v2186, %v2188
        %v2190 = vsel %vm924, %v2188, %v2186
        %v2191 = vsel %vm929, %v2189, 0.0
        %v2192 = vsel %vm930, %v2190, 0.0
        %2193 = vrot.lane.b32.xlu0 %v2135, 111
        %v2194 = vpop.permute.xlu0 %2193
        %2195 = vrot.lane.b32.xlu0 %v2136, 111
        %v2196 = vpop.permute.xlu0 %2195
        %v2197 = vsel %vm937, %v2194, %v2196
        %v2198 = vsel %vm937, %v2196, %v2194
        %v2199 = vsel %vm944, %v2197, 0.0
        %v2200 = vsel %vm945, %v2198, 0.0
        %v2203 = vrot.slane %v2151, 6
        %v2204 = vrot.slane %v2152, 6
        %v2209 = vrot.slane %v2159, 4
        %v2210 = vrot.slane %v2160, 4
        %v2215 = vrot.slane %v2167, 2
        %v2216 = vrot.slane %v2168, 2
        %v2221 = vrot.slane %v2175, 6
        %v2222 = vrot.slane %v2176, 6
        %v2227 = vrot.slane %v2183, 4
        %v2228 = vrot.slane %v2184, 4
        %v2233 = vrot.slane %v2191, 2
        %v2234 = vrot.slane %v2192, 2
        %v2237 = vsel %vm1943, %v2143, %v2203
        %v2238 = vsel %vm1943, %v2144, %v2204
        %v2239 = vsel %vm972, %v2237, %v2209
        %v2240 = vsel %vm972, %v2238, %v2210
        %v2241 = vsel %vm1948, %v2239, %v2215
        %v2242 = vsel %vm1948, %v2240, %v2216
        %v2243 = vsel %vm1943, %v2135, %v2221
        %v2244 = vsel %vm1943, %v2136, %v2222
        %v2245 = vsel %vm972, %v2243, %v2227
        %v2246 = vsel %vm972, %v2244, %v2228
        %v2247 = vsel %vm1948, %v2245, %v2233
        %v2248 = vsel %vm1948, %v2246, %v2234
        %v2249 = vld [vmem:[%s20] sm:$0x1]
        %v2250 = vld [vmem:[#allocation3] sm:$0x1]
        %2252 = vset.pattern.permute.xlu0 0
        %2253 = vperm.xlu0 %2252, %v2250
        %v2254 = vpop.permute.xlu0 %2253
        %v2256 = vlaneseq
        %v2257 = vshrl.u32 %v2256, 7
        %v2258 = vsub.s32 0, %v2257
        %v2259 = vrot.slane %v2254, %v2258
        %v2261 = vsel %vm1968, %v2249, 0
        %v2264 = vsel %vm1943, %v2199, 0
        %v2267 = vsel %vm1943, %v2200, 0
        %2269 = vmatprep.subr.mxu0 0.0
        %2270 = vmatpush1.msra.mxu0 0.0
        %2271 = vmatprep.subr.mxu0 0.0
        %2272 = vmatpush1.msra.mxu0 0.0
        %2273 = vmatprep.subr.mxu0 0.0
        %2274 = vmatpush1.msra.mxu0 0.0
        %2275 = vmatprep.subr.mxu0 0.0
        %2276 = vmatpush1.msra.mxu0 0.0
        %2277 = vmatprep.subr.mxu0 0.0
        %2278 = vmatpush1.msra.mxu0 0.0
        %2279 = vmatprep.subr.mxu0 0.0
        %2280 = vmatpush1.msra.mxu0 0.0
        %2281 = vmatprep.subr.mxu0 0.0
        %2282 = vmatpush1.msra.mxu0 0.0
        %2283 = vmatprep.subr.mxu0 0.0
        %2284 = vmatpush1.msra.mxu0 0.0
        %2285 = vmatprep.subr.mxu0 0.0
        %2286 = vmatpush1.msra.mxu0 0.0
        %2287 = vmatprep.subr.mxu0 0.0
        %2288 = vmatpush1.msra.mxu0 0.0
        %2289 = vmatprep.subr.mxu0 0.0
        %2290 = vmatpush1.msra.mxu0 0.0
        %2291 = vmatprep.subr.mxu0 0.0
        %2292 = vmatpush1.msra.mxu0 0.0
        %2293 = vmatprep.subr.mxu0 0.0
        %2294 = vmatpush1.msra.mxu0 0.0
        %2295 = vmatprep.subr.mxu0 %v2267
        %2296 = vmatpush1.msra.mxu0 %v2264
        %2297 = vmatprep.subr.mxu0 %v2248
        %2298 = vmatpush1.msra.mxu0 %v2247
        %2299 = vmatprep.subr.mxu0 %v2242
        %2300 = vmatpush1.msra.mxu0 %v2241
        %2301 = vmatprep.subr.mxu0 0.0
        %2302 = vmatpush2.msra.mxu0 0.0
        %2303 = vmatprep.subr.mxu0 0.0
        %2304 = vmatpush2.msra.mxu0 0.0
        %2305 = vmatprep.subr.mxu0 0.0
        %2306 = vmatpush2.msra.mxu0 0.0
        %2307 = vmatprep.subr.mxu0 0.0
        %2308 = vmatpush2.msra.mxu0 0.0
        %2309 = vmatprep.subr.mxu0 0.0
        %2310 = vmatpush2.msra.mxu0 0.0
        %2311 = vmatprep.subr.mxu0 0.0
        %2312 = vmatpush2.msra.mxu0 0.0
        %2313 = vmatprep.subr.mxu0 0.0
        %2314 = vmatpush2.msra.mxu0 0.0
        %2315 = vmatprep.subr.mxu0 0.0
        %2316 = vmatpush2.msra.mxu0 0.0
        %2317 = vmatprep.subr.mxu0 0.0
        %2318 = vmatpush2.msra.mxu0 0.0
        %2319 = vmatprep.subr.mxu0 0.0
        %2320 = vmatpush2.msra.mxu0 0.0
        %2321 = vmatprep.subr.mxu0 0.0
        %2322 = vmatpush2.msra.mxu0 0.0
        %2323 = vmatprep.subr.mxu0 0.0
        %2324 = vmatpush2.msra.mxu0 0.0
        %2325 = vmatprep.subr.mxu0 0.0
        %2326 = vmatpush2.msra.mxu0 0.0
        %2327 = vmatprep.subr.mxu0 0.0
        %2328 = vmatpush2.msra.mxu0 0.0
        %2329 = vmatprep.subr.mxu0 0.0
        %2330 = vmatpush2.msra.mxu0 0.0
        %2331 = vmatprep.subr.mxu0 0.0
        %2332 = vmatpush2.msra.mxu0 0.0
        %2333 = vmatprep.mubr.f32.mxu0 0.0
        %2334 = vmatmul.mubr.f32.gmra.mxu0 %v2261
        %v2335 = vpop.f32.mrf.mxu0
        %v2336 = vadd.f32 %v2259, %v2335
        %v2337 = vpop.f32.mrf.mxu0
        %v2338 = vadd.f32 %v2259, %v2337
        %2339 = vdwg.mxu0
        %2340 = vrot.lane.b32.xlu0 %v1841, 51
        %v2341 = vpop.permute.xlu0 %2340
        %2342 = vrot.lane.b32.xlu0 %v1842, 51
        %v2343 = vpop.permute.xlu0 %2342
        %vm2344 = vcmp.lt.s32.totalorder %v819, 51
        %v2345 = vsel %vm2344, %v2341, %v2343
        %v2346 = vsel %vm2344, %v2343, %v2341
        %vm2347 = vcmp.ge.s32.totalorder %v821, 3
        %vm2348 = vcmp.ge.s32.totalorder %v822, 3
        %vm2349 = vcmp.ge.s32.totalorder %v823, 3
        %vm2350 = vcmp.ge.s32.totalorder %v824, 3
        %vm2351 = vmand %vm2347, %vm2349
        %vm2352 = vmand %vm2348, %vm2350
        %v2353 = vsel %vm2351, 1, 0
        %v2354 = vsel %vm2352, 1, 0
        %vm2355 = vcmp.eq.s32.totalorder %v2353, 1
        %vm2356 = vcmp.eq.s32.totalorder %v2354, 1
        %v2357 = vsel %vm2355, %v2346, 0.0
        %v2358 = vsel %vm2356, %v2345, 0.0
        %2359 = vrot.lane.b32.xlu0 %v1841, 50
        %v2360 = vpop.permute.xlu0 %2359
        %2361 = vrot.lane.b32.xlu0 %v1842, 50
        %v2362 = vpop.permute.xlu0 %2361
        %vm2363 = vcmp.lt.s32.totalorder %v819, 50
        %v2364 = vsel %vm2363, %v2360, %v2362
        %v2365 = vsel %vm2363, %v2362, %v2360
        %vm2366 = vcmp.ge.s32.totalorder %v823, 2
        %vm2367 = vcmp.ge.s32.totalorder %v824, 2
        %vm2368 = vmand %vm2347, %vm2366
        %vm2369 = vmand %vm2348, %vm2367
        %v2370 = vsel %vm2368, 1, 0
        %v2371 = vsel %vm2369, 1, 0
        %vm2372 = vcmp.eq.s32.totalorder %v2370, 1
        %vm2373 = vcmp.eq.s32.totalorder %v2371, 1
        %v2374 = vsel %vm2372, %v2365, 0.0
        %v2375 = vsel %vm2373, %v2364, 0.0
        %2376 = vrot.lane.b32.xlu0 %v1841, 49
        %v2377 = vpop.permute.xlu0 %2376
        %2378 = vrot.lane.b32.xlu0 %v1842, 49
        %v2379 = vpop.permute.xlu0 %2378
        %vm2380 = vcmp.lt.s32.totalorder %v819, 49
        %v2381 = vsel %vm2380, %v2377, %v2379
        %v2382 = vsel %vm2380, %v2379, %v2377
        %vm2383 = vmand %vm2347, %vm837
        %vm2384 = vmand %vm2348, %vm838
        %v2385 = vsel %vm2383, 1, 0
        %v2386 = vsel %vm2384, 1, 0
        %vm2387 = vcmp.eq.s32.totalorder %v2385, 1
        %vm2388 = vcmp.eq.s32.totalorder %v2386, 1
        %v2389 = vsel %vm2387, %v2382, 0.0
        %v2390 = vsel %vm2388, %v2381, 0.0
        %2391 = vrot.lane.b32.xlu0 %v1841, 48
        %v2392 = vpop.permute.xlu0 %2391
        %2393 = vrot.lane.b32.xlu0 %v1842, 48
        %v2394 = vpop.permute.xlu0 %2393
        %vm2395 = vcmp.lt.s32.totalorder %v819, 48
        %v2396 = vsel %vm2395, %v2392, %v2394
        %v2397 = vsel %vm2395, %v2394, %v2392
        %v2398 = vsel %vm2347, 1, 0
        %v2399 = vsel %vm2348, 1, 0
        %vm2400 = vcmp.eq.s32.totalorder %v2398, 1
        %vm2401 = vcmp.eq.s32.totalorder %v2399, 1
        %v2402 = vsel %vm2400, %v2397, 0.0
        %v2403 = vsel %vm2401, %v2396, 0.0
        %2404 = vrot.lane.b32.xlu0 %v1841, 47
        %v2405 = vpop.permute.xlu0 %2404
        %2406 = vrot.lane.b32.xlu0 %v1842, 47
        %v2407 = vpop.permute.xlu0 %2406
        %vm2408 = vcmp.lt.s32.totalorder %v819, 47
        %v2409 = vsel %vm2408, %v2405, %v2407
        %v2410 = vsel %vm2408, %v2407, %v2405
        %vm2411 = vmand %vm2347, %vm867
        %vm2412 = vmand %vm2348, %vm868
        %v2413 = vsel %vm2411, 1, 0
        %v2414 = vsel %vm2412, 1, 0
        %vm2415 = vcmp.eq.s32.totalorder %v2413, 1
        %vm2416 = vcmp.eq.s32.totalorder %v2414, 1
        %v2417 = vsel %vm2415, %v2410, 0.0
        %v2418 = vsel %vm2416, %v2409, 0.0
        %2419 = vrot.lane.b32.xlu0 %v1841, 46
        %v2420 = vpop.permute.xlu0 %2419
        %2421 = vrot.lane.b32.xlu0 %v1842, 46
        %v2422 = vpop.permute.xlu0 %2421
        %vm2423 = vcmp.lt.s32.totalorder %v819, 46
        %v2424 = vsel %vm2423, %v2420, %v2422
        %v2425 = vsel %vm2423, %v2422, %v2420
        %vm2426 = vcmp.lt.s32.totalorder %v823, 14
        %vm2427 = vcmp.lt.s32.totalorder %v824, 14
        %vm2428 = vmand %vm2347, %vm2426
        %vm2429 = vmand %vm2348, %vm2427
        %v2430 = vsel %vm2428, 1, 0
        %v2431 = vsel %vm2429, 1, 0
        %vm2432 = vcmp.eq.s32.totalorder %v2430, 1
        %vm2433 = vcmp.eq.s32.totalorder %v2431, 1
        %v2434 = vsel %vm2432, %v2425, 0.0
        %v2435 = vsel %vm2433, %v2424, 0.0
        %2436 = vrot.lane.b32.xlu0 %v1841, 45
        %v2437 = vpop.permute.xlu0 %2436
        %2438 = vrot.lane.b32.xlu0 %v1842, 45
        %v2439 = vpop.permute.xlu0 %2438
        %vm2440 = vcmp.lt.s32.totalorder %v819, 45
        %v2441 = vsel %vm2440, %v2437, %v2439
        %v2442 = vsel %vm2440, %v2439, %v2437
        %vm2443 = vcmp.lt.s32.totalorder %v823, 13
        %vm2444 = vcmp.lt.s32.totalorder %v824, 13
        %vm2445 = vmand %vm2347, %vm2443
        %vm2446 = vmand %vm2348, %vm2444
        %v2447 = vsel %vm2445, 1, 0
        %v2448 = vsel %vm2446, 1, 0
        %vm2449 = vcmp.eq.s32.totalorder %v2447, 1
        %vm2450 = vcmp.eq.s32.totalorder %v2448, 1
        %v2451 = vsel %vm2449, %v2442, 0.0
        %v2452 = vsel %vm2450, %v2441, 0.0
        %2453 = vrot.lane.b32.xlu0 %v1841, 35
        %v2454 = vpop.permute.xlu0 %2453
        %2455 = vrot.lane.b32.xlu0 %v1842, 35
        %v2456 = vpop.permute.xlu0 %2455
        %vm2457 = vcmp.lt.s32.totalorder %v819, 35
        %v2458 = vsel %vm2457, %v2454, %v2456
        %v2459 = vsel %vm2457, %v2456, %v2454
        %vm2460 = vcmp.ge.s32.totalorder %v821, 2
        %vm2461 = vcmp.ge.s32.totalorder %v822, 2
        %vm2462 = vmand %vm2460, %vm2349
        %vm2463 = vmand %vm2461, %vm2350
        %v2464 = vsel %vm2462, 1, 0
        %v2465 = vsel %vm2463, 1, 0
        %vm2466 = vcmp.eq.s32.totalorder %v2464, 1
        %vm2467 = vcmp.eq.s32.totalorder %v2465, 1
        %v2468 = vsel %vm2466, %v2459, 0.0
        %v2469 = vsel %vm2467, %v2458, 0.0
        %2470 = vrot.lane.b32.xlu0 %v1841, 34
        %v2471 = vpop.permute.xlu0 %2470
        %2472 = vrot.lane.b32.xlu0 %v1842, 34
        %v2473 = vpop.permute.xlu0 %2472
        %vm2474 = vcmp.lt.s32.totalorder %v819, 34
        %v2475 = vsel %vm2474, %v2471, %v2473
        %v2476 = vsel %vm2474, %v2473, %v2471
        %vm2477 = vmand %vm2460, %vm2366
        %vm2478 = vmand %vm2461, %vm2367
        %v2479 = vsel %vm2477, 1, 0
        %v2480 = vsel %vm2478, 1, 0
        %vm2481 = vcmp.eq.s32.totalorder %v2479, 1
        %vm2482 = vcmp.eq.s32.totalorder %v2480, 1
        %v2483 = vsel %vm2481, %v2476, 0.0
        %v2484 = vsel %vm2482, %v2475, 0.0
        %2485 = vrot.lane.b32.xlu0 %v1841, 33
        %v2486 = vpop.permute.xlu0 %2485
        %2487 = vrot.lane.b32.xlu0 %v1842, 33
        %v2488 = vpop.permute.xlu0 %2487
        %vm2489 = vcmp.lt.s32.totalorder %v819, 33
        %v2490 = vsel %vm2489, %v2486, %v2488
        %v2491 = vsel %vm2489, %v2488, %v2486
        %vm2492 = vmand %vm2460, %vm837
        %vm2493 = vmand %vm2461, %vm838
        %v2494 = vsel %vm2492, 1, 0
        %v2495 = vsel %vm2493, 1, 0
        %vm2496 = vcmp.eq.s32.totalorder %v2494, 1
        %vm2497 = vcmp.eq.s32.totalorder %v2495, 1
        %v2498 = vsel %vm2496, %v2491, 0.0
        %v2499 = vsel %vm2497, %v2490, 0.0
        %2500 = vrot.lane.b32.xlu0 %v1841, 32
        %v2501 = vpop.permute.xlu0 %2500
        %2502 = vrot.lane.b32.xlu0 %v1842, 32
        %v2503 = vpop.permute.xlu0 %2502
        %vm2504 = vcmp.lt.s32.totalorder %v819, 32
        %v2505 = vsel %vm2504, %v2501, %v2503
        %v2506 = vsel %vm2504, %v2503, %v2501
        %v2507 = vsel %vm2460, 1, 0
        %v2508 = vsel %vm2461, 1, 0
        %vm2509 = vcmp.eq.s32.totalorder %v2507, 1
        %vm2510 = vcmp.eq.s32.totalorder %v2508, 1
        %v2511 = vsel %vm2509, %v2506, 0.0
        %v2512 = vsel %vm2510, %v2505, 0.0
        %2513 = vrot.lane.b32.xlu0 %v1841, 31
        %v2514 = vpop.permute.xlu0 %2513
        %2515 = vrot.lane.b32.xlu0 %v1842, 31
        %v2516 = vpop.permute.xlu0 %2515
        %vm2517 = vcmp.lt.s32.totalorder %v819, 31
        %v2518 = vsel %vm2517, %v2514, %v2516
        %v2519 = vsel %vm2517, %v2516, %v2514
        %vm2520 = vmand %vm2460, %vm867
        %vm2521 = vmand %vm2461, %vm868
        %v2522 = vsel %vm2520, 1, 0
        %v2523 = vsel %vm2521, 1, 0
        %vm2524 = vcmp.eq.s32.totalorder %v2522, 1
        %vm2525 = vcmp.eq.s32.totalorder %v2523, 1
        %v2526 = vsel %vm2524, %v2519, 0.0
        %v2527 = vsel %vm2525, %v2518, 0.0
        %2528 = vrot.lane.b32.xlu0 %v1841, 30
        %v2529 = vpop.permute.xlu0 %2528
        %2530 = vrot.lane.b32.xlu0 %v1842, 30
        %v2531 = vpop.permute.xlu0 %2530
        %vm2532 = vcmp.lt.s32.totalorder %v819, 30
        %v2533 = vsel %vm2532, %v2529, %v2531
        %v2534 = vsel %vm2532, %v2531, %v2529
        %vm2535 = vmand %vm2460, %vm2426
        %vm2536 = vmand %vm2461, %vm2427
        %v2537 = vsel %vm2535, 1, 0
        %v2538 = vsel %vm2536, 1, 0
        %vm2539 = vcmp.eq.s32.totalorder %v2537, 1
        %vm2540 = vcmp.eq.s32.totalorder %v2538, 1
        %v2541 = vsel %vm2539, %v2534, 0.0
        %v2542 = vsel %vm2540, %v2533, 0.0
        %2543 = vrot.lane.b32.xlu0 %v1841, 29
        %v2544 = vpop.permute.xlu0 %2543
        %2545 = vrot.lane.b32.xlu0 %v1842, 29
        %v2546 = vpop.permute.xlu0 %2545
        %vm2547 = vcmp.lt.s32.totalorder %v819, 29
        %v2548 = vsel %vm2547, %v2544, %v2546
        %v2549 = vsel %vm2547, %v2546, %v2544
        %vm2550 = vmand %vm2460, %vm2443
        %vm2551 = vmand %vm2461, %vm2444
        %v2552 = vsel %vm2550, 1, 0
        %v2553 = vsel %vm2551, 1, 0
        %vm2554 = vcmp.eq.s32.totalorder %v2552, 1
        %vm2555 = vcmp.eq.s32.totalorder %v2553, 1
        %v2556 = vsel %vm2554, %v2549, 0.0
        %v2557 = vsel %vm2555, %v2548, 0.0
        %2558 = vrot.lane.b32.xlu0 %v1841, 19
        %v2559 = vpop.permute.xlu0 %2558
        %2560 = vrot.lane.b32.xlu0 %v1842, 19
        %v2561 = vpop.permute.xlu0 %2560
        %vm2562 = vcmp.lt.s32.totalorder %v819, 19
        %v2563 = vsel %vm2562, %v2559, %v2561
        %v2564 = vsel %vm2562, %v2561, %v2559
        %vm2565 = vmand %vm835, %vm2349
        %vm2566 = vmand %vm836, %vm2350
        %v2567 = vsel %vm2565, 1, 0
        %v2568 = vsel %vm2566, 1, 0
        %vm2569 = vcmp.eq.s32.totalorder %v2567, 1
        %vm2570 = vcmp.eq.s32.totalorder %v2568, 1
        %v2571 = vsel %vm2569, %v2564, 0.0
        %v2572 = vsel %vm2570, %v2563, 0.0
        %2573 = vrot.lane.b32.xlu0 %v1841, 18
        %v2574 = vpop.permute.xlu0 %2573
        %2575 = vrot.lane.b32.xlu0 %v1842, 18
        %v2576 = vpop.permute.xlu0 %2575
        %vm2577 = vcmp.lt.s32.totalorder %v819, 18
        %v2578 = vsel %vm2577, %v2574, %v2576
        %v2579 = vsel %vm2577, %v2576, %v2574
        %vm2580 = vmand %vm835, %vm2366
        %vm2581 = vmand %vm836, %vm2367
        %v2582 = vsel %vm2580, 1, 0
        %v2583 = vsel %vm2581, 1, 0
        %vm2584 = vcmp.eq.s32.totalorder %v2582, 1
        %vm2585 = vcmp.eq.s32.totalorder %v2583, 1
        %v2586 = vsel %vm2584, %v2579, 0.0
        %v2587 = vsel %vm2585, %v2578, 0.0
        %2588 = vrot.lane.b32.xlu0 %v1841, 14
        %v2589 = vpop.permute.xlu0 %2588
        %2590 = vrot.lane.b32.xlu0 %v1842, 14
        %v2591 = vpop.permute.xlu0 %2590
        %vm2592 = vcmp.lt.s32.totalorder %v819, 14
        %v2593 = vsel %vm2592, %v2589, %v2591
        %v2594 = vsel %vm2592, %v2591, %v2589
        %vm2595 = vmand %vm835, %vm2426
        %vm2596 = vmand %vm836, %vm2427
        %v2597 = vsel %vm2595, 1, 0
        %v2598 = vsel %vm2596, 1, 0
        %vm2599 = vcmp.eq.s32.totalorder %v2597, 1
        %vm2600 = vcmp.eq.s32.totalorder %v2598, 1
        %v2601 = vsel %vm2599, %v2594, 0.0
        %v2602 = vsel %vm2600, %v2593, 0.0
        %2603 = vrot.lane.b32.xlu0 %v1841, 13
        %v2604 = vpop.permute.xlu0 %2603
        %2605 = vrot.lane.b32.xlu0 %v1842, 13
        %v2606 = vpop.permute.xlu0 %2605
        %vm2607 = vcmp.lt.s32.totalorder %v819, 13
        %v2608 = vsel %vm2607, %v2604, %v2606
        %v2609 = vsel %vm2607, %v2606, %v2604
        %vm2610 = vmand %vm835, %vm2443
        %vm2611 = vmand %vm836, %vm2444
        %v2612 = vsel %vm2610, 1, 0
        %v2613 = vsel %vm2611, 1, 0
        %vm2614 = vcmp.eq.s32.totalorder %v2612, 1
        %vm2615 = vcmp.eq.s32.totalorder %v2613, 1
        %v2616 = vsel %vm2614, %v2609, 0.0
        %v2617 = vsel %vm2615, %v2608, 0.0
        %2618 = vrot.lane.b32.xlu0 %v1841, 3
        %v2619 = vpop.permute.xlu0 %2618
        %2620 = vrot.lane.b32.xlu0 %v1842, 3
        %v2621 = vpop.permute.xlu0 %2620
        %vm2622 = vcmp.lt.s32.totalorder %v819, 3
        %v2623 = vsel %vm2622, %v2619, %v2621
        %v2624 = vsel %vm2622, %v2621, %v2619
        %v2625 = vsel %vm2349, 1, 0
        %v2626 = vsel %vm2350, 1, 0
        %vm2627 = vcmp.eq.s32.totalorder %v2625, 1
        %vm2628 = vcmp.eq.s32.totalorder %v2626, 1
        %v2629 = vsel %vm2627, %v2624, 0.0
        %v2630 = vsel %vm2628, %v2623, 0.0
        %2631 = vrot.lane.b32.xlu0 %v1841, 2
        %v2632 = vpop.permute.xlu0 %2631
        %2633 = vrot.lane.b32.xlu0 %v1842, 2
        %v2634 = vpop.permute.xlu0 %2633
        %vm2635 = vcmp.lt.s32.totalorder %v819, 2
        %v2636 = vsel %vm2635, %v2632, %v2634
        %v2637 = vsel %vm2635, %v2634, %v2632
        %v2638 = vsel %vm2366, 1, 0
        %v2639 = vsel %vm2367, 1, 0
        %vm2640 = vcmp.eq.s32.totalorder %v2638, 1
        %vm2641 = vcmp.eq.s32.totalorder %v2639, 1
        %v2642 = vsel %vm2640, %v2637, 0.0
        %v2643 = vsel %vm2641, %v2636, 0.0
        %2644 = vrot.lane.b32.xlu0 %v1841, 126
        %v2645 = vpop.permute.xlu0 %2644
        %2646 = vrot.lane.b32.xlu0 %v1842, 126
        %v2647 = vpop.permute.xlu0 %2646
        %vm2648 = vcmp.lt.s32.totalorder %v819, 126
        %v2649 = vsel %vm2648, %v2645, %v2647
        %v2650 = vsel %vm2648, %v2647, %v2645
        %v2651 = vsel %vm2426, 1, 0
        %v2652 = vsel %vm2427, 1, 0
        %vm2653 = vcmp.eq.s32.totalorder %v2651, 1
        %vm2654 = vcmp.eq.s32.totalorder %v2652, 1
        %v2655 = vsel %vm2653, %v2649, 0.0
        %v2656 = vsel %vm2654, %v2650, 0.0
        %2657 = vrot.lane.b32.xlu0 %v1841, 125
        %v2658 = vpop.permute.xlu0 %2657
        %2659 = vrot.lane.b32.xlu0 %v1842, 125
        %v2660 = vpop.permute.xlu0 %2659
        %vm2661 = vcmp.lt.s32.totalorder %v819, 125
        %v2662 = vsel %vm2661, %v2658, %v2660
        %v2663 = vsel %vm2661, %v2660, %v2658
        %v2664 = vsel %vm2443, 1, 0
        %v2665 = vsel %vm2444, 1, 0
        %vm2666 = vcmp.eq.s32.totalorder %v2664, 1
        %vm2667 = vcmp.eq.s32.totalorder %v2665, 1
        %v2668 = vsel %vm2666, %v2662, 0.0
        %v2669 = vsel %vm2667, %v2663, 0.0
        %2670 = vrot.lane.b32.xlu0 %v1841, 115
        %v2671 = vpop.permute.xlu0 %2670
        %2672 = vrot.lane.b32.xlu0 %v1842, 115
        %v2673 = vpop.permute.xlu0 %2672
        %vm2674 = vcmp.lt.s32.totalorder %v819, 115
        %v2675 = vsel %vm2674, %v2671, %v2673
        %v2676 = vsel %vm2674, %v2673, %v2671
        %vm2677 = vmand %vm910, %vm2349
        %vm2678 = vmand %vm911, %vm2350
        %v2679 = vsel %vm2677, 1, 0
        %v2680 = vsel %vm2678, 1, 0
        %vm2681 = vcmp.eq.s32.totalorder %v2679, 1
        %vm2682 = vcmp.eq.s32.totalorder %v2680, 1
        %v2683 = vsel %vm2681, %v2675, 0.0
        %v2684 = vsel %vm2682, %v2676, 0.0
        %2685 = vrot.lane.b32.xlu0 %v1841, 114
        %v2686 = vpop.permute.xlu0 %2685
        %2687 = vrot.lane.b32.xlu0 %v1842, 114
        %v2688 = vpop.permute.xlu0 %2687
        %vm2689 = vcmp.lt.s32.totalorder %v819, 114
        %v2690 = vsel %vm2689, %v2686, %v2688
        %v2691 = vsel %vm2689, %v2688, %v2686
        %vm2692 = vmand %vm910, %vm2366
        %vm2693 = vmand %vm911, %vm2367
        %v2694 = vsel %vm2692, 1, 0
        %v2695 = vsel %vm2693, 1, 0
        %vm2696 = vcmp.eq.s32.totalorder %v2694, 1
        %vm2697 = vcmp.eq.s32.totalorder %v2695, 1
        %v2698 = vsel %vm2696, %v2690, 0.0
        %v2699 = vsel %vm2697, %v2691, 0.0
        %2700 = vrot.lane.b32.xlu0 %v1841, 110
        %v2701 = vpop.permute.xlu0 %2700
        %2702 = vrot.lane.b32.xlu0 %v1842, 110
        %v2703 = vpop.permute.xlu0 %2702
        %vm2704 = vcmp.lt.s32.totalorder %v819, 110
        %v2705 = vsel %vm2704, %v2701, %v2703
        %v2706 = vsel %vm2704, %v2703, %v2701
        %vm2707 = vmand %vm910, %vm2426
        %vm2708 = vmand %vm911, %vm2427
        %v2709 = vsel %vm2707, 1, 0
        %v2710 = vsel %vm2708, 1, 0
        %vm2711 = vcmp.eq.s32.totalorder %v2709, 1
        %vm2712 = vcmp.eq.s32.totalorder %v2710, 1
        %v2713 = vsel %vm2711, %v2705, 0.0
        %v2714 = vsel %vm2712, %v2706, 0.0
        %2715 = vrot.lane.b32.xlu0 %v1841, 109
        %v2716 = vpop.permute.xlu0 %2715
        %2717 = vrot.lane.b32.xlu0 %v1842, 109
        %v2718 = vpop.permute.xlu0 %2717
        %vm2719 = vcmp.lt.s32.totalorder %v819, 109
        %v2720 = vsel %vm2719, %v2716, %v2718
        %v2721 = vsel %vm2719, %v2718, %v2716
        %vm2722 = vmand %vm910, %vm2443
        %vm2723 = vmand %vm911, %vm2444
        %v2724 = vsel %vm2722, 1, 0
        %v2725 = vsel %vm2723, 1, 0
        %vm2726 = vcmp.eq.s32.totalorder %v2724, 1
        %vm2727 = vcmp.eq.s32.totalorder %v2725, 1
        %v2728 = vsel %vm2726, %v2720, 0.0
        %v2729 = vsel %vm2727, %v2721, 0.0
        %2730 = vrot.lane.b32.xlu0 %v1841, 99
        %v2731 = vpop.permute.xlu0 %2730
        %2732 = vrot.lane.b32.xlu0 %v1842, 99
        %v2733 = vpop.permute.xlu0 %2732
        %vm2734 = vcmp.lt.s32.totalorder %v819, 99
        %v2735 = vsel %vm2734, %v2731, %v2733
        %v2736 = vsel %vm2734, %v2733, %v2731
        %vm2737 = vcmp.lt.s32.totalorder %v821, 14
        %vm2738 = vcmp.lt.s32.totalorder %v822, 14
        %vm2739 = vmand %vm2737, %vm2349
        %vm2740 = vmand %vm2738, %vm2350
        %v2741 = vsel %vm2739, 1, 0
        %v2742 = vsel %vm2740, 1, 0
        %vm2743 = vcmp.eq.s32.totalorder %v2741, 1
        %vm2744 = vcmp.eq.s32.totalorder %v2742, 1
        %v2745 = vsel %vm2743, %v2735, 0.0
        %v2746 = vsel %vm2744, %v2736, 0.0
        %2747 = vrot.lane.b32.xlu0 %v1841, 98
        %v2748 = vpop.permute.xlu0 %2747
        %2749 = vrot.lane.b32.xlu0 %v1842, 98
        %v2750 = vpop.permute.xlu0 %2749
        %vm2751 = vcmp.lt.s32.totalorder %v819, 98
        %v2752 = vsel %vm2751, %v2748, %v2750
        %v2753 = vsel %vm2751, %v2750, %v2748
        %vm2754 = vmand %vm2737, %vm2366
        %vm2755 = vmand %vm2738, %vm2367
        %v2756 = vsel %vm2754, 1, 0
        %v2757 = vsel %vm2755, 1, 0
        %vm2758 = vcmp.eq.s32.totalorder %v2756, 1
        %vm2759 = vcmp.eq.s32.totalorder %v2757, 1
        %v2760 = vsel %vm2758, %v2752, 0.0
        %v2761 = vsel %vm2759, %v2753, 0.0
        %2762 = vrot.lane.b32.xlu0 %v1841, 97
        %v2763 = vpop.permute.xlu0 %2762
        %2764 = vrot.lane.b32.xlu0 %v1842, 97
        %v2765 = vpop.permute.xlu0 %2764
        %vm2766 = vcmp.lt.s32.totalorder %v819, 97
        %v2767 = vsel %vm2766, %v2763, %v2765
        %v2768 = vsel %vm2766, %v2765, %v2763
        %vm2769 = vmand %vm2737, %vm837
        %vm2770 = vmand %vm2738, %vm838
        %v2771 = vsel %vm2769, 1, 0
        %v2772 = vsel %vm2770, 1, 0
        %vm2773 = vcmp.eq.s32.totalorder %v2771, 1
        %vm2774 = vcmp.eq.s32.totalorder %v2772, 1
        %v2775 = vsel %vm2773, %v2767, 0.0
        %v2776 = vsel %vm2774, %v2768, 0.0
        %2777 = vrot.lane.b32.xlu0 %v1841, 96
        %v2778 = vpop.permute.xlu0 %2777
        %2779 = vrot.lane.b32.xlu0 %v1842, 96
        %v2780 = vpop.permute.xlu0 %2779
        %vm2781 = vcmp.lt.s32.totalorder %v819, 96
        %v2782 = vsel %vm2781, %v2778, %v2780
        %v2783 = vsel %vm2781, %v2780, %v2778
        %v2784 = vsel %vm2737, 1, 0
        %v2785 = vsel %vm2738, 1, 0
        %vm2786 = vcmp.eq.s32.totalorder %v2784, 1
        %vm2787 = vcmp.eq.s32.totalorder %v2785, 1
        %v2788 = vsel %vm2786, %v2782, 0.0
        %v2789 = vsel %vm2787, %v2783, 0.0
        %2790 = vrot.lane.b32.xlu0 %v1841, 95
        %v2791 = vpop.permute.xlu0 %2790
        %2792 = vrot.lane.b32.xlu0 %v1842, 95
        %v2793 = vpop.permute.xlu0 %2792
        %vm2794 = vcmp.lt.s32.totalorder %v819, 95
        %v2795 = vsel %vm2794, %v2791, %v2793
        %v2796 = vsel %vm2794, %v2793, %v2791
        %vm2797 = vmand %vm2737, %vm867
        %vm2798 = vmand %vm2738, %vm868
        %v2799 = vsel %vm2797, 1, 0
        %v2800 = vsel %vm2798, 1, 0
        %vm2801 = vcmp.eq.s32.totalorder %v2799, 1
        %vm2802 = vcmp.eq.s32.totalorder %v2800, 1
        %v2803 = vsel %vm2801, %v2795, 0.0
        %v2804 = vsel %vm2802, %v2796, 0.0
        %2805 = vrot.lane.b32.xlu0 %v1841, 94
        %v2806 = vpop.permute.xlu0 %2805
        %2807 = vrot.lane.b32.xlu0 %v1842, 94
        %v2808 = vpop.permute.xlu0 %2807
        %vm2809 = vcmp.lt.s32.totalorder %v819, 94
        %v2810 = vsel %vm2809, %v2806, %v2808
        %v2811 = vsel %vm2809, %v2808, %v2806
        %vm2812 = vmand %vm2737, %vm2426
        %vm2813 = vmand %vm2738, %vm2427
        %v2814 = vsel %vm2812, 1, 0
        %v2815 = vsel %vm2813, 1, 0
        %vm2816 = vcmp.eq.s32.totalorder %v2814, 1
        %vm2817 = vcmp.eq.s32.totalorder %v2815, 1
        %v2818 = vsel %vm2816, %v2810, 0.0
        %v2819 = vsel %vm2817, %v2811, 0.0
        %2820 = vrot.lane.b32.xlu0 %v1841, 93
        %v2821 = vpop.permute.xlu0 %2820
        %2822 = vrot.lane.b32.xlu0 %v1842, 93
        %v2823 = vpop.permute.xlu0 %2822
        %vm2824 = vcmp.lt.s32.totalorder %v819, 93
        %v2825 = vsel %vm2824, %v2821, %v2823
        %v2826 = vsel %vm2824, %v2823, %v2821
        %vm2827 = vmand %vm2737, %vm2443
        %vm2828 = vmand %vm2738, %vm2444
        %v2829 = vsel %vm2827, 1, 0
        %v2830 = vsel %vm2828, 1, 0
        %vm2831 = vcmp.eq.s32.totalorder %v2829, 1
        %vm2832 = vcmp.eq.s32.totalorder %v2830, 1
        %v2833 = vsel %vm2831, %v2825, 0.0
        %v2834 = vsel %vm2832, %v2826, 0.0
        %2835 = vrot.lane.b32.xlu0 %v1841, 83
        %v2836 = vpop.permute.xlu0 %2835
        %2837 = vrot.lane.b32.xlu0 %v1842, 83
        %v2838 = vpop.permute.xlu0 %2837
        %vm2839 = vcmp.lt.s32.totalorder %v819, 83
        %v2840 = vsel %vm2839, %v2836, %v2838
        %v2841 = vsel %vm2839, %v2838, %v2836
        %vm2842 = vcmp.lt.s32.totalorder %v821, 13
        %vm2843 = vcmp.lt.s32.totalorder %v822, 13
        %vm2844 = vmand %vm2842, %vm2349
        %vm2845 = vmand %vm2843, %vm2350
        %v2846 = vsel %vm2844, 1, 0
        %v2847 = vsel %vm2845, 1, 0
        %vm2848 = vcmp.eq.s32.totalorder %v2846, 1
        %vm2849 = vcmp.eq.s32.totalorder %v2847, 1
        %v2850 = vsel %vm2848, %v2840, 0.0
        %v2851 = vsel %vm2849, %v2841, 0.0
        %2852 = vrot.lane.b32.xlu0 %v1841, 82
        %v2853 = vpop.permute.xlu0 %2852
        %2854 = vrot.lane.b32.xlu0 %v1842, 82
        %v2855 = vpop.permute.xlu0 %2854
        %vm2856 = vcmp.lt.s32.totalorder %v819, 82
        %v2857 = vsel %vm2856, %v2853, %v2855
        %v2858 = vsel %vm2856, %v2855, %v2853
        %vm2859 = vmand %vm2842, %vm2366
        %vm2860 = vmand %vm2843, %vm2367
        %v2861 = vsel %vm2859, 1, 0
        %v2862 = vsel %vm2860, 1, 0
        %vm2863 = vcmp.eq.s32.totalorder %v2861, 1
        %vm2864 = vcmp.eq.s32.totalorder %v2862, 1
        %v2865 = vsel %vm2863, %v2857, 0.0
        %v2866 = vsel %vm2864, %v2858, 0.0
        %2867 = vrot.lane.b32.xlu0 %v1841, 81
        %v2868 = vpop.permute.xlu0 %2867
        %2869 = vrot.lane.b32.xlu0 %v1842, 81
        %v2870 = vpop.permute.xlu0 %2869
        %vm2871 = vcmp.lt.s32.totalorder %v819, 81
        %v2872 = vsel %vm2871, %v2868, %v2870
        %v2873 = vsel %vm2871, %v2870, %v2868
        %vm2874 = vmand %vm2842, %vm837
        %vm2875 = vmand %vm2843, %vm838
        %v2876 = vsel %vm2874, 1, 0
        %v2877 = vsel %vm2875, 1, 0
        %vm2878 = vcmp.eq.s32.totalorder %v2876, 1
        %vm2879 = vcmp.eq.s32.totalorder %v2877, 1
        %v2880 = vsel %vm2878, %v2872, 0.0
        %v2881 = vsel %vm2879, %v2873, 0.0
        %2882 = vrot.lane.b32.xlu0 %v1841, 80
        %v2883 = vpop.permute.xlu0 %2882
        %2884 = vrot.lane.b32.xlu0 %v1842, 80
        %v2885 = vpop.permute.xlu0 %2884
        %vm2886 = vcmp.lt.s32.totalorder %v819, 80
        %v2887 = vsel %vm2886, %v2883, %v2885
        %v2888 = vsel %vm2886, %v2885, %v2883
        %v2889 = vsel %vm2842, 1, 0
        %v2890 = vsel %vm2843, 1, 0
        %vm2891 = vcmp.eq.s32.totalorder %v2889, 1
        %vm2892 = vcmp.eq.s32.totalorder %v2890, 1
        %v2893 = vsel %vm2891, %v2887, 0.0
        %v2894 = vsel %vm2892, %v2888, 0.0
        %2895 = vrot.lane.b32.xlu0 %v1841, 79
        %v2896 = vpop.permute.xlu0 %2895
        %2897 = vrot.lane.b32.xlu0 %v1842, 79
        %v2898 = vpop.permute.xlu0 %2897
        %vm2899 = vcmp.lt.s32.totalorder %v819, 79
        %v2900 = vsel %vm2899, %v2896, %v2898
        %v2901 = vsel %vm2899, %v2898, %v2896
        %vm2902 = vmand %vm2842, %vm867
        %vm2903 = vmand %vm2843, %vm868
        %v2904 = vsel %vm2902, 1, 0
        %v2905 = vsel %vm2903, 1, 0
        %vm2906 = vcmp.eq.s32.totalorder %v2904, 1
        %vm2907 = vcmp.eq.s32.totalorder %v2905, 1
        %v2908 = vsel %vm2906, %v2900, 0.0
        %v2909 = vsel %vm2907, %v2901, 0.0
        %2910 = vrot.lane.b32.xlu0 %v1841, 78
        %v2911 = vpop.permute.xlu0 %2910
        %2912 = vrot.lane.b32.xlu0 %v1842, 78
        %v2913 = vpop.permute.xlu0 %2912
        %vm2914 = vcmp.lt.s32.totalorder %v819, 78
        %v2915 = vsel %vm2914, %v2911, %v2913
        %v2916 = vsel %vm2914, %v2913, %v2911
        %vm2917 = vmand %vm2842, %vm2426
        %vm2918 = vmand %vm2843, %vm2427
        %v2919 = vsel %vm2917, 1, 0
        %v2920 = vsel %vm2918, 1, 0
        %vm2921 = vcmp.eq.s32.totalorder %v2919, 1
        %vm2922 = vcmp.eq.s32.totalorder %v2920, 1
        %v2923 = vsel %vm2921, %v2915, 0.0
        %v2924 = vsel %vm2922, %v2916, 0.0
        %2925 = vrot.lane.b32.xlu0 %v1841, 77
        %v2926 = vpop.permute.xlu0 %2925
        %2927 = vrot.lane.b32.xlu0 %v1842, 77
        %v2928 = vpop.permute.xlu0 %2927
        %vm2929 = vcmp.lt.s32.totalorder %v819, 77
        %v2930 = vsel %vm2929, %v2926, %v2928
        %v2931 = vsel %vm2929, %v2928, %v2926
        %vm2932 = vmand %vm2842, %vm2443
        %vm2933 = vmand %vm2843, %vm2444
        %v2934 = vsel %vm2932, 1, 0
        %v2935 = vsel %vm2933, 1, 0
        %vm2936 = vcmp.eq.s32.totalorder %v2934, 1
        %vm2937 = vcmp.eq.s32.totalorder %v2935, 1
        %v2938 = vsel %vm2936, %v2930, 0.0
        %v2939 = vsel %vm2937, %v2931, 0.0
        %v2942 = vrot.slane %v2374, 6
        %v2943 = vrot.slane %v2375, 6
        %v2948 = vrot.slane %v2389, 4
        %v2949 = vrot.slane %v2390, 4
        %v2954 = vrot.slane %v2402, 2
        %v2955 = vrot.slane %v2403, 2
        %v2960 = vrot.slane %v2434, 6
        %v2961 = vrot.slane %v2435, 6
        %v2966 = vrot.slane %v2451, 4
        %v2967 = vrot.slane %v2452, 4
        %v2972 = vrot.slane %v2468, 2
        %v2973 = vrot.slane %v2469, 2
        %v2978 = vrot.slane %v2498, 6
        %v2979 = vrot.slane %v2499, 6
        %v2984 = vrot.slane %v2511, 4
        %v2985 = vrot.slane %v2512, 4
        %v2990 = vrot.slane %v2526, 2
        %v2991 = vrot.slane %v2527, 2
        %v2996 = vrot.slane %v2556, 6
        %v2997 = vrot.slane %v2557, 6
        %v3002 = vrot.slane %v2571, 4
        %v3003 = vrot.slane %v2572, 4
        %v3008 = vrot.slane %v2586, 2
        %v3009 = vrot.slane %v2587, 2
        %v3012 = vsel %vm1943, %v2357, %v2942
        %v3013 = vsel %vm1943, %v2358, %v2943
        %v3014 = vsel %vm972, %v3012, %v2948
        %v3015 = vsel %vm972, %v3013, %v2949
        %v3016 = vsel %vm1948, %v3014, %v2954
        %v3017 = vsel %vm1948, %v3015, %v2955
        %v3018 = vsel %vm1943, %v2417, %v2960
        %v3019 = vsel %vm1943, %v2418, %v2961
        %v3020 = vsel %vm972, %v3018, %v2966
        %v3021 = vsel %vm972, %v3019, %v2967
        %v3022 = vsel %vm1948, %v3020, %v2972
        %v3023 = vsel %vm1948, %v3021, %v2973
        %v3024 = vsel %vm1943, %v2483, %v2978
        %v3025 = vsel %vm1943, %v2484, %v2979
        %v3026 = vsel %vm972, %v3024, %v2984
        %v3027 = vsel %vm972, %v3025, %v2985
        %v3028 = vsel %vm1948, %v3026, %v2990
        %v3029 = vsel %vm1948, %v3027, %v2991
        %v3030 = vsel %vm1943, %v2541, %v2996
        %v3031 = vsel %vm1943, %v2542, %v2997
        %v3032 = vsel %vm972, %v3030, %v3002
        %v3033 = vsel %vm972, %v3031, %v3003
        %v3034 = vsel %vm1948, %v3032, %v3008
        %v3035 = vsel %vm1948, %v3033, %v3009
        %v3038 = vrot.slane %v2601, 2
        %v3039 = vrot.slane %v2602, 2
        %v3044 = vrot.slane %v2629, 6
        %v3045 = vrot.slane %v2630, 6
        %v3050 = vrot.slane %v2642, 4
        %v3051 = vrot.slane %v2643, 4
        %v3056 = vrot.slane %v2655, 4
        %v3057 = vrot.slane %v2656, 4
        %v3062 = vrot.slane %v2668, 2
        %v3063 = vrot.slane %v2669, 2
        %v3068 = vrot.slane %v2698, 6
        %v3069 = vrot.slane %v2699, 6
        %v3072 = vsel %vm1948, %v1946, %v3038
        %v3073 = vsel %vm1948, %v1947, %v3039
        %v3074 = vsel %vm1943, %v2616, %v3044
        %v3075 = vsel %vm1943, %v2617, %v3045
        %v3076 = vsel %vm972, %v3074, %v3050
        %v3077 = vsel %vm972, %v3075, %v3051
        %v3078 = vsel %vm1948, %v3076, %v1921
        %v3079 = vsel %vm1948, %v3077, %v1922
        %v3080 = vsel %vm972, %v1951, %v3056
        %v3081 = vsel %vm972, %v1952, %v3057
        %v3082 = vsel %vm1948, %v3080, %v3062
        %v3083 = vsel %vm1948, %v3081, %v3063
        %v3084 = vsel %vm1943, %v2683, %v3068
        %v3085 = vsel %vm1943, %v2684, %v3069
        %v3086 = vsel %vm972, %v3084, %v1933
        %v3087 = vsel %vm972, %v3085, %v1934
        %v3088 = vsel %vm1948, %v3086, %v1939
        %v3089 = vsel %vm1948, %v3087, %v1940
        %v3092 = vrot.slane %v2713, 6
        %v3093 = vrot.slane %v2714, 6
        %v3098 = vrot.slane %v2728, 4
        %v3099 = vrot.slane %v2729, 4
        %v3104 = vrot.slane %v2745, 2
        %v3105 = vrot.slane %v2746, 2
        %v3110 = vrot.slane %v2775, 6
        %v3111 = vrot.slane %v2776, 6
        %v3116 = vrot.slane %v2788, 4
        %v3117 = vrot.slane %v2789, 4
        %v3122 = vrot.slane %v2803, 2
        %v3123 = vrot.slane %v2804, 2
        %v3128 = vrot.slane %v2833, 6
        %v3129 = vrot.slane %v2834, 6
        %v3134 = vrot.slane %v2850, 4
        %v3135 = vrot.slane %v2851, 4
        %v3140 = vrot.slane %v2865, 2
        %v3141 = vrot.slane %v2866, 2
        %v3146 = vrot.slane %v2893, 6
        %v3147 = vrot.slane %v2894, 6
        %v3152 = vrot.slane %v2908, 4
        %v3153 = vrot.slane %v2909, 4
        %v3158 = vrot.slane %v2923, 2
        %v3159 = vrot.slane %v2924, 2
        %v3162 = vsel %vm1943, %v1905, %v3092
        %v3163 = vsel %vm1943, %v1906, %v3093
        %v3164 = vsel %vm972, %v3162, %v3098
        %v3165 = vsel %vm972, %v3163, %v3099
        %v3166 = vsel %vm1948, %v3164, %v3104
        %v3167 = vsel %vm1948, %v3165, %v3105
        %v3168 = vsel %vm1943, %v2760, %v3110
        %v3169 = vsel %vm1943, %v2761, %v3111
        %v3170 = vsel %vm972, %v3168, %v3116
        %v3171 = vsel %vm972, %v3169, %v3117
        %v3172 = vsel %vm1948, %v3170, %v3122
        %v3173 = vsel %vm1948, %v3171, %v3123
        %v3174 = vsel %vm1943, %v2818, %v3128
        %v3175 = vsel %vm1943, %v2819, %v3129
        %v3176 = vsel %vm972, %v3174, %v3134
        %v3177 = vsel %vm972, %v3175, %v3135
        %v3178 = vsel %vm1948, %v3176, %v3140
        %v3179 = vsel %vm1948, %v3177, %v3141
        %v3180 = vsel %vm1943, %v2880, %v3146
        %v3181 = vsel %vm1943, %v2881, %v3147
        %v3182 = vsel %vm972, %v3180, %v3152
        %v3183 = vsel %vm972, %v3181, %v3153
        %v3184 = vsel %vm1948, %v3182, %v3158
        %v3185 = vsel %vm1948, %v3183, %v3159
        %v3186 = vld [vmem:[%s22] sm:$0x1]
        %v3187 = vld [vmem:[#allocation4] sm:$0x1]
        %3189 = vset.pattern.permute.xlu0 0
        %3190 = vperm.xlu0 %3189, %v3187
        %v3191 = vpop.permute.xlu0 %3190
        %v3193 = vlaneseq
        %v3194 = vshrl.u32 %v3193, 7
        %v3195 = vsub.s32 0, %v3194
        %v3196 = vrot.slane %v3191, %v3195
        %vm3197 = vcmask 801792
        %v3199 = vsel %vm3197, %v3186, 0
        %v3202 = vsel %vm1943, %v2938, 0
        %v3205 = vsel %vm1943, %v2939, 0
        %3207 = vmatprep.subr.mxu0 0.0
        %3208 = vmatpush1.msra.mxu0 0.0
        %3209 = vmatprep.subr.mxu0 0.0
        %3210 = vmatpush1.msra.mxu0 0.0
        %3211 = vmatprep.subr.mxu0 0.0
        %3212 = vmatpush1.msra.mxu0 0.0
        %3213 = vmatprep.subr.mxu0 %v3205
        %3214 = vmatpush1.msra.mxu0 %v3202
        %3215 = vmatprep.subr.mxu0 %v3185
        %3216 = vmatpush1.msra.mxu0 %v3184
        %3217 = vmatprep.subr.mxu0 %v3179
        %3218 = vmatpush1.msra.mxu0 %v3178
        %3219 = vmatprep.subr.mxu0 %v3173
        %3220 = vmatpush1.msra.mxu0 %v3172
        %3221 = vmatprep.subr.mxu0 %v3167
        %3222 = vmatpush1.msra.mxu0 %v3166
        %3223 = vmatprep.subr.mxu0 %v3089
        %3224 = vmatpush1.msra.mxu0 %v3088
        %3225 = vmatprep.subr.mxu0 %v3083
        %3226 = vmatpush1.msra.mxu0 %v3082
        %3227 = vmatprep.subr.mxu0 %v3079
        %3228 = vmatpush1.msra.mxu0 %v3078
        %3229 = vmatprep.subr.mxu0 %v3073
        %3230 = vmatpush1.msra.mxu0 %v3072
        %3231 = vmatprep.subr.mxu0 %v3035
        %3232 = vmatpush1.msra.mxu0 %v3034
        %3233 = vmatprep.subr.mxu0 %v3029
        %3234 = vmatpush1.msra.mxu0 %v3028
        %3235 = vmatprep.subr.mxu0 %v3023
        %3236 = vmatpush1.msra.mxu0 %v3022
        %3237 = vmatprep.subr.mxu0 %v3017
        %3238 = vmatpush1.msra.mxu0 %v3016
        %3239 = vmatprep.subr.mxu0 0.0
        %3240 = vmatpush2.msra.mxu0 0.0
        %3241 = vmatprep.subr.mxu0 0.0
        %3242 = vmatpush2.msra.mxu0 0.0
        %3243 = vmatprep.subr.mxu0 0.0
        %3244 = vmatpush2.msra.mxu0 0.0
        %3245 = vmatprep.subr.mxu0 0.0
        %3246 = vmatpush2.msra.mxu0 0.0
        %3247 = vmatprep.subr.mxu0 0.0
        %3248 = vmatpush2.msra.mxu0 0.0
        %3249 = vmatprep.subr.mxu0 0.0
        %3250 = vmatpush2.msra.mxu0 0.0
        %3251 = vmatprep.subr.mxu0 0.0
        %3252 = vmatpush2.msra.mxu0 0.0
        %3253 = vmatprep.subr.mxu0 0.0
        %3254 = vmatpush2.msra.mxu0 0.0
        %3255 = vmatprep.subr.mxu0 0.0
        %3256 = vmatpush2.msra.mxu0 0.0
        %3257 = vmatprep.subr.mxu0 0.0
        %3258 = vmatpush2.msra.mxu0 0.0
        %3259 = vmatprep.subr.mxu0 0.0
        %3260 = vmatpush2.msra.mxu0 0.0
        %3261 = vmatprep.subr.mxu0 0.0
        %3262 = vmatpush2.msra.mxu0 0.0
        %3263 = vmatprep.subr.mxu0 0.0
        %3264 = vmatpush2.msra.mxu0 0.0
        %3265 = vmatprep.subr.mxu0 0.0
        %3266 = vmatpush2.msra.mxu0 0.0
        %3267 = vmatprep.subr.mxu0 0.0
        %3268 = vmatpush2.msra.mxu0 0.0
        %3269 = vmatprep.subr.mxu0 0.0
        %3270 = vmatpush2.msra.mxu0 0.0
        %3271 = vmatprep.mubr.f32.mxu0 0.0
        %3272 = vmatmul.mubr.f32.gmra.mxu0 %v3199
        %v3273 = vpop.f32.mrf.mxu0
        %v3274 = vadd.f32 %v3196, %v3273
        %v3275 = vpop.f32.mrf.mxu0
        %v3276 = vadd.f32 %v3196, %v3275
        %3277 = vdwg.mxu0
        %v3280 = vrot.slane %v2336, 7
        %v3281 = vrot.slane %v2338, 7
        %v3286 = vrot.slane %v3274, 6
        %v3287 = vrot.slane %v3276, 6
        %v3290 = vsel %vm1840, %v2045, %v3280
        %v3291 = vsel %vm1840, %v2047, %v3281
        %v3292 = vsel %vm1943, %v3290, %v3286
        %v3293 = vsel %vm1943, %v3291, %v3287
        %v3294 = vld [vmem:[%s24] sm:$0x1]
        %v3295 = vld [vmem:[#allocation5] sm:$0x1]
        %3297 = vset.pattern.permute.xlu0 0
        %3298 = vperm.xlu0 %3297, %v3295
        %v3299 = vpop.permute.xlu0 %3298
        %v3301 = vlaneseq
        %v3302 = vshrl.u32 %v3301, 7
        %v3303 = vsub.s32 0, %v3302
        %v3304 = vrot.slane %v3299, %v3303
        %vm3305 = vcmask 23552
        %v3307 = vsel %vm3305, %v3294, 0
        %vm3309 = vcmask 1042432
        %v3311 = vsel %vm3309, %v3292, 0
        %v3314 = vsel %vm3309, %v3293, 0
        %3316 = vmatprep.subr.mxu0 0.0
        %3317 = vmatpush1.msra.mxu0 0.0
        %3318 = vmatprep.subr.mxu0 0.0
        %3319 = vmatpush1.msra.mxu0 0.0
        %3320 = vmatprep.subr.mxu0 0.0
        %3321 = vmatpush1.msra.mxu0 0.0
        %3322 = vmatprep.subr.mxu0 0.0
        %3323 = vmatpush1.msra.mxu0 0.0
        %3324 = vmatprep.subr.mxu0 0.0
        %3325 = vmatpush1.msra.mxu0 0.0
        %3326 = vmatprep.subr.mxu0 0.0
        %3327 = vmatpush1.msra.mxu0 0.0
        %3328 = vmatprep.subr.mxu0 0.0
        %3329 = vmatpush1.msra.mxu0 0.0
        %3330 = vmatprep.subr.mxu0 0.0
        %3331 = vmatpush1.msra.mxu0 0.0
        %3332 = vmatprep.subr.mxu0 0.0
        %3333 = vmatpush1.msra.mxu0 0.0
        %3334 = vmatprep.subr.mxu0 0.0
        %3335 = vmatpush1.msra.mxu0 0.0
        %3336 = vmatprep.subr.mxu0 0.0
        %3337 = vmatpush1.msra.mxu0 0.0
        %3338 = vmatprep.subr.mxu0 0.0
        %3339 = vmatpush1.msra.mxu0 0.0
        %3340 = vmatprep.subr.mxu0 0.0
        %3341 = vmatpush1.msra.mxu0 0.0
        %3342 = vmatprep.subr.mxu0 0.0
        %3343 = vmatpush1.msra.mxu0 0.0
        %3344 = vmatprep.subr.mxu0 0.0
        %3345 = vmatpush1.msra.mxu0 0.0
        %3346 = vmatprep.subr.mxu0 %v3314
        %3347 = vmatpush1.msra.mxu0 %v3311
        %3348 = vmatprep.subr.mxu0 0.0
        %3349 = vmatpush2.msra.mxu0 0.0
        %3350 = vmatprep.subr.mxu0 0.0
        %3351 = vmatpush2.msra.mxu0 0.0
        %3352 = vmatprep.subr.mxu0 0.0
        %3353 = vmatpush2.msra.mxu0 0.0
        %3354 = vmatprep.subr.mxu0 0.0
        %3355 = vmatpush2.msra.mxu0 0.0
        %3356 = vmatprep.subr.mxu0 0.0
        %3357 = vmatpush2.msra.mxu0 0.0
        %3358 = vmatprep.subr.mxu0 0.0
        %3359 = vmatpush2.msra.mxu0 0.0
        %3360 = vmatprep.subr.mxu0 0.0
        %3361 = vmatpush2.msra.mxu0 0.0
        %3362 = vmatprep.subr.mxu0 0.0
        %3363 = vmatpush2.msra.mxu0 0.0
        %3364 = vmatprep.subr.mxu0 0.0
        %3365 = vmatpush2.msra.mxu0 0.0
        %3366 = vmatprep.subr.mxu0 0.0
        %3367 = vmatpush2.msra.mxu0 0.0
        %3368 = vmatprep.subr.mxu0 0.0
        %3369 = vmatpush2.msra.mxu0 0.0
        %3370 = vmatprep.subr.mxu0 0.0
        %3371 = vmatpush2.msra.mxu0 0.0
        %3372 = vmatprep.subr.mxu0 0.0
        %3373 = vmatpush2.msra.mxu0 0.0
        %3374 = vmatprep.subr.mxu0 0.0
        %3375 = vmatpush2.msra.mxu0 0.0
        %3376 = vmatprep.subr.mxu0 0.0
        %3377 = vmatpush2.msra.mxu0 0.0
        %3378 = vmatprep.subr.mxu0 0.0
        %3379 = vmatpush2.msra.mxu0 0.0
        %3380 = vmatprep.mubr.f32.mxu0 0.0
        %3381 = vmatmul.mubr.f32.gmra.mxu0 %v3307
        %v3382 = vpop.f32.mrf.mxu0
        %v3383 = vadd.f32 %v3304, %v3382
        %v3384 = vpop.f32.mrf.mxu0
        %v3385 = vadd.f32 %v3304, %v3384
        %3386 = vdwg.mxu0
        %v3387 = vsub.f32 0.0, %v3383
        %v3388 = vsub.f32 0.0, %v3385
        %v3389 = vmul.f32 %v3387, 1.442695
        %v3390 = vpow.pop %v3389
        %v3391 = vmul.f32 %v3388, 1.442695
        %v3392 = vpow.pop %v3391
        %v3393 = vadd.f32 %v3390, 1.0
        %v3394 = vadd.f32 %v3392, 1.0
        %v3395 = vrcp.pop %v3393
        %v3396 = vrcp.pop %v3394
        %v3397 = vlaneseq
        %v3398 = vshrl.u32 %v3397, 7
        %v3399 = vsub.s32 0, %v3398
        %v3400 = vrot.slane %v3395, %v3399
        %v3401 = vlaneseq
        %v3402 = vshrl.u32 %v3401, 7
        %v3403 = vsub.s32 0, %v3402
        %v3404 = vrot.slane %v3396, %v3403
        %v3405 = vmul.f32 %v1805, %v3400
        %v3406 = vmul.f32 %v1807, %v3404
        %v3407 = vadd.f32 %v3405, %v817
        %v3408 = vadd.f32 %v3406, %v826
        %v3411 = vcombine.low %v3407, %v3408
        %3413 = vst [vmem:[%s813] sm:$0xff] %v3411
        %p3414 = scmp.lt.s32.totalorder %s46, 1
        %s3415 = scalar_select %p3414, %s46, 1
        %s3416 = smul.addr %s3415, 2
        %s3417 = smul.addr %s3416, 4
        %s3418 = scalar_lea.vmem %s26, %s3417
        // Predicated region
        $region129: #{msrab_forward.1} parent=123 // pred_check
          %p3419 = pneg %p615
        $region130: #{msrab_forward.1} parent=123 // pred_check_branch
          %3421 = sbr.rel (%p3419) target = $region132
        $region131: #{msrab_forward.1} parent=123 // pred_region
          _
        $region132: #{msrab_forward.1} parent=123 // pred_fallthru
          _
      $region124: #{msrab_forward.1} parent=5 // pred_fallthru
        _
      %p3422 = scmp.le.s32.totalorder 2, %s41
      // Predicated region
      $region133: #{msrab_forward.1} parent=5 // pred_check
        %p3423 = pneg %p3422
      $region134: #{msrab_forward.1} parent=5 // pred_check_branch
        %3425 = sbr.rel (%p3423) target = $region136
      $region135: #{msrab_forward.1} parent=5 // pred_region
        %s3426 = ssub.s32 %s41, 2
        // Predicated region
        $region137: #{msrab_forward.1} parent=135 // pred_check
          %p3427 = pneg %p621
        $region138: #{msrab_forward.1} parent=135 // pred_check_branch
          %3429 = sbr.rel (%p3427) target = $region140
        $region139: #{msrab_forward.1} parent=135 // pred_region
          %p3430 = scmp.lt.s32.totalorder %s47, 1
          %s3431 = scalar_select %p3430, %s47, 1
          %s3432 = smul.addr %s3431, 2
          %s3433 = smul.addr %s3432, 4
          %s3434 = scalar_lea.vmem %s26, %s3433
        $region140: #{msrab_forward.1} parent=135 // pred_fallthru
          _
      $region136: #{msrab_forward.1} parent=5 // pred_fallthru
        _
    $region6: #{msrab_forward.1} parent=1 // loop_footer
      %s45 = sadd.s32 1, %s41
    $region7: #{msrab_forward.1} parent=1 // loop_footer_branch
      %40 = sbr.rel target = $region3
    $region8: #{msrab_forward.1} parent=1 // loop_exit
      _
    %3435 = vsyncpa [#allocation7], 1
    %s3436 = scalar_lea.sflag [#allocation7], 1
    %3437 = vsyncpa %s3436, 1

</llo_original>
